<compile_context>
chip_gen: v6e
topology: v6e:2x2x1
jax: 0.10.0
libtpu: 0.0.40
codegen_flags: <defaults>
</compile_context>

<pallas_src>
import jax
import jax.numpy as jnp
from jax.experimental import pallas as pl
from jax.experimental.pallas import tpu as pltpu


def _round_up(x: int, m: int) -> int:
    return ((x + m - 1) // m) * m


def _make_so3mlp_kernel(num_hidden_layers: int, apply_softmax: bool,
                        compute_dtype):
    """Build the kernel for a fixed number of hidden (Linear+ReLU) layers."""
    cdt = compute_dtype

    def kernel(img_ref, rot_ref, *rest):
        # rest = (w_img, w_rot_b, b_fused,
        #         [w_h_b, b_h] * num_hidden_layers, w_final, b_final, out_ref)
        out_ref = rest[-1]
        params = rest[:-1]
        w_img, w_rot_b, b_fused = params[0], params[1], params[2]
        hidden = params[3:3 + 2 * num_hidden_layers]
        w_f, b_f = params[-2], params[-1]

        f32 = jnp.float32

        # fc_img over the whole block: (Bn, F) @ (F, H0) -> (Bn, H0).
        # b_img + b_rot are folded into one fused bias, added once here.
        x_img = jnp.dot(img_ref[...].astype(cdt), w_img[...],
                        preferred_element_type=f32) + b_fused[...]

        # fc_rot_query in feature-major layout: for every example b the MXU
        # computes W_rot^T (H0, R) @ rot_b (R, Q) -> (H0, Q) as one batched
        # matmul.  Q stays lane-dense end-to-end, so no transposes/relayouts
        # are needed anywhere in the kernel.
        x = jnp.einsum("bhr,brq->bhq", w_rot_b[...], rot_ref[...],
                       preferred_element_type=f32)
        x = jnp.maximum(x + x_img[:, :, None], 0.0)

        # Hidden Linear + ReLU stack (unrolled at trace time); each layer is a
        # batched (H_out, H_in) @ (H_in, Q) matmul with f32 accumulation.
        for li in range(num_hidden_layers):
            w_b = hidden[2 * li]
            b_h = hidden[2 * li + 1]
            x = jnp.einsum("bgh,bhq->bgq", w_b[...], x.astype(cdt),
                           preferred_element_type=f32)
            x = jnp.maximum(x + b_h[...], 0.0)

        # fc_final_layer as a weighted feature-axis (sublane) reduction:
        # directly yields a lane-dense (Bn, Q) tile -> unmasked output stores,
        # no (M, 1) one-lane matmul and no final relayout.
        logits = jnp.sum(x * w_f[...], axis=1) + b_f[...]

        if apply_softmax:
            m = jnp.max(logits, axis=-1, keepdims=True)
            e = jnp.exp(logits - m)
            s = jnp.sum(e, axis=-1, keepdims=True)
            # Exact normalization (one f32 divide per row): rows sum to 1.
            out_ref[...] = e * (1.0 / s)
        else:
            out_ref[...] = logits

    return kernel


def _replicated_spec(p):
    """Grid-invariant (replicated) BlockSpec; rank captured explicitly."""
    ndim = p.ndim

    def index_map(i):
        return (0,) * ndim

    return pl.BlockSpec(p.shape, index_map)


def so3mlp_forward(img_feature, rot_query, params, apply_softmax=False,
                   block_n=64, use_bf16_matmul=True,
                   vmem_limit_cap=48 * 1024 * 1024):
    """Pallas implementation of SO3MLP.forward.

    Args:
      img_feature: (N, len_img_feature) float32
      rot_query:   (N, n_queries, rot_dims) float32
      params: dict with keys
        'w_img' (F, H0), 'b_img' (H0,), 'w_rot' (R, H0), 'b_rot' (H0,),
        'hidden': list of (W (Hi, Hi+1), b (Hi+1,)),
        'w_final' (H_last, 1), 'b_final' (1,)
      apply_softmax: if True, return softmax(logits, axis=-1)
      block_n: examples per grid step (rounded to a multiple of 8).
      use_bf16_matmul: bf16 MXU dots with f32 accumulation (default; looser
        numerics, documented tolerance ~1e-1 on logits).  Set False for f32.
      vmem_limit_cap: upper bound for the requested scoped-VMEM limit.

    Returns:
      (N, n_queries) float32
    """
    n, f = img_feature.shape
    n2, q, r = rot_query.shape
    assert n2 == n
    num_hidden = len(params["hidden"])
    cdt = jnp.bfloat16 if use_bf16_matmul else jnp.float32

    # Block size: as large as practical (amortizes per-step overhead), but
    # keep >= 2 grid steps when possible so v7x's two TensorCores both get
    # work; always a multiple of 8 (sublane tile).
    block_n = max(8, _round_up(block_n, 8))
    bn = max(8, min(block_n, _round_up((n + 1) // 2, 8)))
    n_pad = _round_up(n, bn)

    # img stays f32 (tiny).  rot is pre-transposed to (N, R, Q) so the query
    # axis is lane-dense: the VMEM tile shrinks ~8-14x vs (N, Q, R) (R=9 pads
    # only to 16 sublanes instead of 9 -> 128 lanes) and the DMA moves dense
    # 512B rows.  In the bf16 path rot is also cast here, halving its HBM
    # traffic (it dominates input bytes).
    img_p = img_feature.astype(jnp.float32)
    rot_t = jnp.transpose(rot_query, (0, 2, 1)).astype(cdt)       # (N, R, Q)
    if n_pad != n:
        img_p = jnp.pad(img_p, ((0, n_pad - n), (0, 0)))
        rot_t = jnp.pad(rot_t, ((0, n_pad - n), (0, 0), (0, 0)))

    # Parameters: matmul weights in the compute dtype, biases in f32.  The
    # per-example-batched weights are broadcast once here (outside the kernel)
    # and are grid-invariant, so they are DMA'd into VMEM only once and the
    # kernel does no per-step broadcast work.
    h0 = params["w_img"].shape[1]
    w_img = params["w_img"].astype(cdt)                           # (F, H0)
    w_rot_b = jnp.broadcast_to(params["w_rot"].T.astype(cdt)[None],
                               (bn, h0, r))                       # (Bn, H0, R)
    b_fused = (params["b_img"] + params["b_rot"]).reshape(1, -1).astype(jnp.float32)
    flat_params = [w_img, w_rot_b, b_fused]
    for w_h, b_h in params["hidden"]:
        h_in, h_out = w_h.shape
        flat_params.append(jnp.broadcast_to(w_h.T.astype(cdt)[None],
                                            (bn, h_out, h_in)))   # (Bn, Ho, Hi)
        flat_params.append(b_h.reshape(1, -1, 1).astype(jnp.float32))
    w_f = params["w_final"].reshape(1, -1, 1).astype(jnp.float32)  # (1, H_last, 1)
    b_f = params["b_final"].reshape(1, 1).astype(jnp.float32)      # (1, 1)
    flat_params += [w_f, b_f]

    param_specs = [_replicated_spec(p) for p in flat_params]
    # TODO(synk): if profiling still shows exposed input DMA, try
    # pipeline_mode=pl.Buffered(3) on the two streamed inputs and
    # pl.Buffered(1) on the grid-invariant parameter specs.

    kernel = _make_so3mlp_kernel(num_hidden, apply_softmax, cdt)

    # VMEM budget (re-derived per call; v7x 64 MiB physical / 32 MiB default
    # scoped, v5e 16 MiB default scoped): estimate the live footprint and
    # request it explicitly, capped well below v7x physical VMEM.
    h_sizes = [h0] + [w.shape[1] for w, _ in params["hidden"]]
    h_max = max(h_sizes)
    lane_q = _round_up(q, 128)
    c_bytes = jnp.dtype(cdt).itemsize
    blk_bytes = 2 * (bn * _round_up(f, 128) * 4
                     + bn * _round_up(r, 16) * lane_q * c_bytes
                     + bn * lane_q * 4)                           # double-buffered I/O
    param_bytes = sum(int(p.size) * p.dtype.itemsize for p in flat_params)
    act_bytes = 6 * bn * _round_up(h_max, 8) * lane_q * 4         # live f32 slabs
    vmem_limit = int(min(vmem_limit_cap,
                         max(32 * 1024 * 1024,
                             2 * (blk_bytes + 2 * param_bytes + act_bytes))))

    # Advisory cost estimate so XLA schedules around this call sensibly.
    flops = 2 * n_pad * f * h0                                    # fc_img
    flops += 2 * n_pad * q * r * h0                               # fc_rot_query
    for h_in, h_out in zip(h_sizes[:-1], h_sizes[1:]):
        flops += 2 * n_pad * q * h_in * h_out                     # hidden layers
    flops += 2 * n_pad * q * h_sizes[-1]                          # final layer
    bytes_accessed = (img_p.size * img_p.dtype.itemsize
                      + rot_t.size * rot_t.dtype.itemsize
                      + n_pad * q * 4 + param_bytes)
    cost = pl.CostEstimate(
        flops=int(flops),
        transcendentals=int(n_pad * q if apply_softmax else 0),
        bytes_accessed=int(bytes_accessed))

    # TODO(synk): Q is not tiled (softmax spans the full query axis); a very
    # large n_queries would need an online-softmax two-pass variant.
    out = pl.pallas_call(
        kernel,
        out_shape=jax.ShapeDtypeStruct((n_pad, q), jnp.float32),
        grid=(n_pad // bn,),
        in_specs=[
            pl.BlockSpec((bn, f), lambda i: (i, 0)),        # img_feature rows
            pl.BlockSpec((bn, r, q), lambda i: (i, 0, 0)),  # rot queries (R, Q)
        ] + param_specs,
        out_specs=pl.BlockSpec((bn, q), lambda i: (i, 0)),  # lane-dense output
        compiler_params=pltpu.CompilerParams(
            dimension_semantics=("parallel",),
            vmem_limit_bytes=vmem_limit),
        cost_estimate=cost,
    )(img_p, rot_t, *flat_params)

    return out[:n]


def _init_params(key, len_img_feature, rot_dims, fc_sizes):
    """Deterministic synthetic parameter init (Linear weights stored as
    (in_features, out_features), i.e. already transposed vs. PyTorch)."""
    keys = jax.random.split(key, 3 + 2 * len(fc_sizes))
    k = iter(keys)

    def lin(kk, fan_in, fan_out):
        scale = 1.0 / jnp.sqrt(jnp.float32(fan_in))
        w = jax.random.uniform(kk, (fan_in, fan_out), jnp.float32,
                               -scale, scale)
        b = jnp.zeros((fan_out,), jnp.float32) + 0.01
        return w, b

    w_img, b_img = lin(next(k), len_img_feature, fc_sizes[0])
    w_rot, b_rot = lin(next(k), rot_dims, fc_sizes[0])
    hidden = []
    in_size = fc_sizes[0]
    for size in fc_sizes[1:]:
        hidden.append(lin(next(k), in_size, size))
        in_size = size
    w_final, b_final = lin(next(k), fc_sizes[-1], 1)
    return {
        "w_img": w_img, "b_img": b_img,
        "w_rot": w_rot, "b_rot": b_rot,
        "hidden": hidden,
        "w_final": w_final, "b_final": b_final,
    }


def _reference_forward(img_feature, rot_query, params, apply_softmax=False):
    """Pure-JAX reference matching the PyTorch module semantics."""
    x_img = img_feature @ params["w_img"] + params["b_img"]
    x_rot = rot_query @ params["w_rot"] + params["b_rot"]
    x = jax.nn.relu(x_img[:, None, :] + x_rot)
    for w_h, b_h in params["hidden"]:
        x = jax.nn.relu(x @ w_h + b_h)
    x = x @ params["w_final"] + params["b_final"]
    logits = x[..., 0]
    if apply_softmax:
        return jax.nn.softmax(logits, axis=-1)
    return logits


if __name__ == "__main__":
    # Config consistent with the module:
    #   len_img_feature=64, rot_dims=9 (flattened 3x3 rotation), fc_sizes=(64, 64)
    N, Q = 16, 128
    LEN_IMG_FEATURE, ROT_DIMS = 64, 9
    FC_SIZES = (64, 64)

    key = jax.random.PRNGKey(0)
    k_img, k_rot, k_params = jax.random.split(key, 3)

    img_feature = jax.random.normal(k_img, (N, LEN_IMG_FEATURE), jnp.float32)
    rot_query = jax.random.normal(k_rot, (N, Q, ROT_DIMS), jnp.float32)
    params = _init_params(k_params, LEN_IMG_FEATURE, ROT_DIMS, FC_SIZES)

    ref_logits = _reference_forward(img_feature, rot_query, params,
                                    apply_softmax=False)
    ref_probs = _reference_forward(img_feature, rot_query, params,
                                   apply_softmax=True)

    # Strict f32 MXU path: logits.
    logits = so3mlp_forward(img_feature, rot_query, params,
                            apply_softmax=False, use_bf16_matmul=False)
    jax.block_until_ready(logits)
    assert logits.shape == (N, Q)
    assert jnp.allclose(logits, ref_logits, atol=2e-4, rtol=1e-3)

    # Strict f32 MXU path: softmax (exact normalization).
    probs = so3mlp_forward(img_feature, rot_query, params,
                           apply_softmax=True, use_bf16_matmul=False)
    jax.block_until_ready(probs)
    assert probs.shape == (N, Q)
    assert jnp.allclose(probs, ref_probs, atol=1e-4, rtol=1e-2)
    assert jnp.allclose(jnp.sum(probs, axis=-1), 1.0, atol=1e-3)

    # Default fast path (bf16 MXU dots, f32 epilogue): looser numerics on the
    # logits, but softmax rows still normalize exactly.
    logits_fast = so3mlp_forward(img_feature, rot_query, params,
                                 apply_softmax=False)
    probs_fast = so3mlp_forward(img_feature, rot_query, params,
                                apply_softmax=True)
    jax.block_until_ready((logits_fast, probs_fast))
    assert jnp.allclose(logits_fast, ref_logits, atol=0.1, rtol=0.1)
    assert jnp.allclose(jnp.sum(probs_fast, axis=-1), 1.0, atol=1e-3)

    # Batch not a multiple of the block size exercises the padding path.
    logits_small = so3mlp_forward(img_feature[:3], rot_query[:3], params,
                                  apply_softmax=False, use_bf16_matmul=False)
    jax.block_until_ready(logits_small)
    assert logits_small.shape == (3, Q)
    assert jnp.allclose(logits_small, ref_logits[:3], atol=2e-4, rtol=1e-3)

    print("KERNEL_OK")
</pallas_src>

<mosaic_0001>
module attributes {stable_mosaic.version = 11 : i64} {
  func.func @kernel(%arg0: i32, %arg1: memref<8x64xf32, #tpu.memory_space<vmem>>, %arg2: memref<8x9x128xf32, #tpu.memory_space<vmem>>, %arg3: memref<64x64xf32, #tpu.memory_space<vmem>>, %arg4: memref<8x64x9xf32, #tpu.memory_space<vmem>>, %arg5: memref<1x64xf32, #tpu.memory_space<vmem>>, %arg6: memref<8x64x64xf32, #tpu.memory_space<vmem>>, %arg7: memref<1x64x1xf32, #tpu.memory_space<vmem>>, %arg8: memref<1x64x1xf32, #tpu.memory_space<vmem>>, %arg9: memref<1x1xf32, #tpu.memory_space<vmem>>, %arg10: memref<8x128xf32, #tpu.memory_space<vmem>>) attributes {dimension_semantics = [#tpu.dimension_semantics<parallel>], iteration_bounds = array<i64: 2>, scalar_prefetch = 0 : i64, scratch_operands = 0 : i64, tpu.core_type = #tpu.core_type<tc>, window_params = [{transform_indices = @transform_0, window_bounds = array<i64: 8, 64>}, {transform_indices = @transform_1, window_bounds = array<i64: 8, 9, 128>}, {pipeline_mode = #tpu.pipeline_mode<synchronous>, transform_indices = @transform_2, window_bounds = array<i64: 64, 64>}, {pipeline_mode = #tpu.pipeline_mode<synchronous>, transform_indices = @transform_3, window_bounds = array<i64: 8, 64, 9>}, {pipeline_mode = #tpu.pipeline_mode<synchronous>, transform_indices = @transform_4, window_bounds = array<i64: 1, 64>}, {pipeline_mode = #tpu.pipeline_mode<synchronous>, transform_indices = @transform_5, window_bounds = array<i64: 8, 64, 64>}, {pipeline_mode = #tpu.pipeline_mode<synchronous>, transform_indices = @transform_6, window_bounds = array<i64: 1, 64, 1>}, {pipeline_mode = #tpu.pipeline_mode<synchronous>, transform_indices = @transform_7, window_bounds = array<i64: 1, 64, 1>}, {pipeline_mode = #tpu.pipeline_mode<synchronous>, transform_indices = @transform_8, window_bounds = array<i64: 1, 1>}, {transform_indices = @transform_9, window_bounds = array<i64: 8, 128>}]} {
    %c0 = arith.constant 0 : index
    %c0_0 = arith.constant 0 : index
    %0 = vector.load %arg1[%c0, %c0_0] : memref<8x64xf32, #tpu.memory_space<vmem>>, vector<8x64xf32>
    %c0_1 = arith.constant 0 : index
    %c0_2 = arith.constant 0 : index
    %1 = vector.load %arg3[%c0_1, %c0_2] : memref<64x64xf32, #tpu.memory_space<vmem>>, vector<64x64xf32>
    %cst = arith.constant dense<0.000000e+00> : vector<8x64xf32>
    %2 = tpu.matmul %0, %1, %cst {dimension_numbers = #tpu.dot_dimension_numbers<[1], [0], [0], [1], [0, 0, 1, 1], [], []>} : vector<8x64xf32>, vector<64x64xf32>, vector<8x64xf32> -> vector<8x64xf32>
    %c0_3 = arith.constant 0 : index
    %c0_4 = arith.constant 0 : index
    %3 = vector.load %arg5[%c0_3, %c0_4] : memref<1x64xf32, #tpu.memory_space<vmem>>, vector<1x64xf32>
    %4 = vector.broadcast %3 : vector<1x64xf32> to vector<8x64xf32>
    %5 = arith.addf %2, %4 : vector<8x64xf32>
    %c0_5 = arith.constant 0 : index
    %c0_6 = arith.constant 0 : index
    %c0_7 = arith.constant 0 : index
    %6 = vector.load %arg4[%c0_5, %c0_6, %c0_7] : memref<8x64x9xf32, #tpu.memory_space<vmem>>, vector<8x64x9xf32>
    %c0_8 = arith.constant 0 : index
    %c0_9 = arith.constant 0 : index
    %c0_10 = arith.constant 0 : index
    %7 = vector.load %arg2[%c0_8, %c0_9, %c0_10] : memref<8x9x128xf32, #tpu.memory_space<vmem>>, vector<8x9x128xf32>
    "tpu.trace_start"() <{level = 10 : i32, message = "bhr,brq->bhq"}> : () -> ()
    %cst_11 = arith.constant dense<0.000000e+00> : vector<8x64x128xf32>
    %8 = tpu.matmul %6, %7, %cst_11 {dimension_numbers = #tpu.dot_dimension_numbers<[2], [1], [1], [2], [0, 0, 0, 1, 1, 2], [0], [0]>} : vector<8x64x9xf32>, vector<8x9x128xf32>, vector<8x64x128xf32> -> vector<8x64x128xf32>
    "tpu.trace_stop"() : () -> ()
    %9 = vector.shape_cast %5 : vector<8x64xf32> to vector<8x64x1xf32>
    %10 = vector.broadcast %9 : vector<8x64x1xf32> to vector<8x64x128xf32>
    %11 = arith.addf %8, %10 : vector<8x64x128xf32>
    %cst_12 = arith.constant 0.000000e+00 : f32
    %12 = vector.broadcast %cst_12 : f32 to vector<8x64x128xf32>
    %13 = arith.maximumf %11, %12 : vector<8x64x128xf32>
    %c0_13 = arith.constant 0 : index
    %c0_14 = arith.constant 0 : index
    %c0_15 = arith.constant 0 : index
    %14 = vector.load %arg6[%c0_13, %c0_14, %c0_15] : memref<8x64x64xf32, #tpu.memory_space<vmem>>, vector<8x64x64xf32>
    "tpu.trace_start"() <{level = 10 : i32, message = "bgh,bhq->bgq"}> : () -> ()
    %cst_16 = arith.constant dense<0.000000e+00> : vector<8x64x128xf32>
    %15 = tpu.matmul %14, %13, %cst_16 {dimension_numbers = #tpu.dot_dimension_numbers<[2], [1], [1], [2], [0, 0, 0, 1, 1, 2], [0], [0]>} : vector<8x64x64xf32>, vector<8x64x128xf32>, vector<8x64x128xf32> -> vector<8x64x128xf32>
    "tpu.trace_stop"() : () -> ()
    %c0_17 = arith.constant 0 : index
    %c0_18 = arith.constant 0 : index
    %c0_19 = arith.constant 0 : index
    %16 = vector.load %arg7[%c0_17, %c0_18, %c0_19] : memref<1x64x1xf32, #tpu.memory_space<vmem>>, vector<1x64x1xf32>
    %17 = vector.broadcast %16 : vector<1x64x1xf32> to vector<8x64x128xf32>
    %18 = arith.addf %15, %17 : vector<8x64x128xf32>
    %cst_20 = arith.constant 0.000000e+00 : f32
    %19 = vector.broadcast %cst_20 : f32 to vector<8x64x128xf32>
    %20 = arith.maximumf %18, %19 : vector<8x64x128xf32>
    %c0_21 = arith.constant 0 : index
    %c0_22 = arith.constant 0 : index
    %c0_23 = arith.constant 0 : index
    %21 = vector.load %arg8[%c0_21, %c0_22, %c0_23] : memref<1x64x1xf32, #tpu.memory_space<vmem>>, vector<1x64x1xf32>
    %22 = vector.broadcast %21 : vector<1x64x1xf32> to vector<8x64x128xf32>
    %23 = arith.mulf %20, %22 : vector<8x64x128xf32>
    %cst_24 = arith.constant dense<0.000000e+00> : vector<8x128xf32>
    %24 = vector.multi_reduction <add>, %23, %cst_24 [1] : vector<8x64x128xf32> to vector<8x128xf32>
    %c0_25 = arith.constant 0 : index
    %c0_26 = arith.constant 0 : index
    %25 = vector.load %arg9[%c0_25, %c0_26] : memref<1x1xf32, #tpu.memory_space<vmem>>, vector<1x1xf32>
    %26 = vector.broadcast %25 : vector<1x1xf32> to vector<8x128xf32>
    %27 = arith.addf %24, %26 : vector<8x128xf32>
    %c0_27 = arith.constant 0 : index
    %c0_28 = arith.constant 0 : index
    %28 = vector.load %arg10[%c0_27, %c0_28] : memref<8x128xf32, #tpu.memory_space<vmem>>, vector<8x128xf32>
    tpu.vector_store %arg10[%c0_27, %c0_28], %27 {strides = array<i32>} : memref<8x128xf32, #tpu.memory_space<vmem>>, vector<8x128xf32>,
    return
  }
  func.func @transform_0(%arg0: i32) -> (i32, i32) {
    %c0_i32 = arith.constant 0 : i32
    %c0_i32_0 = arith.constant 0 : i32
    return %arg0, %c0_i32 : i32, i32
  }
  func.func @transform_1(%arg0: i32) -> (i32, i32, i32) {
    %c0_i32 = arith.constant 0 : i32
    %c0_i32_0 = arith.constant 0 : i32
    %c0_i32_1 = arith.constant 0 : i32
    return %arg0, %c0_i32, %c0_i32_0 : i32, i32, i32
  }
  func.func @transform_2(%arg0: i32) -> (i32, i32) {
    %c0_i32 = arith.constant 0 : i32
    %c0_i32_0 = arith.constant 0 : i32
    %c0_i32_1 = arith.constant 0 : i32
    return %c0_i32, %c0_i32_0 : i32, i32
  }
  func.func @transform_3(%arg0: i32) -> (i32, i32, i32) {
    %c0_i32 = arith.constant 0 : i32
    %c0_i32_0 = arith.constant 0 : i32
    %c0_i32_1 = arith.constant 0 : i32
    %c0_i32_2 = arith.constant 0 : i32
    return %c0_i32, %c0_i32_0, %c0_i32_1 : i32, i32, i32
  }
  func.func @transform_4(%arg0: i32) -> (i32, i32) {
    %c0_i32 = arith.constant 0 : i32
    %c0_i32_0 = arith.constant 0 : i32
    %c0_i32_1 = arith.constant 0 : i32
    return %c0_i32, %c0_i32_0 : i32, i32
  }
  func.func @transform_5(%arg0: i32) -> (i32, i32, i32) {
    %c0_i32 = arith.constant 0 : i32
    %c0_i32_0 = arith.constant 0 : i32
    %c0_i32_1 = arith.constant 0 : i32
    %c0_i32_2 = arith.constant 0 : i32
    return %c0_i32, %c0_i32_0, %c0_i32_1 : i32, i32, i32
  }
  func.func @transform_6(%arg0: i32) -> (i32, i32, i32) {
    %c0_i32 = arith.constant 0 : i32
    %c0_i32_0 = arith.constant 0 : i32
    %c0_i32_1 = arith.constant 0 : i32
    %c0_i32_2 = arith.constant 0 : i32
    return %c0_i32, %c0_i32_0, %c0_i32_1 : i32, i32, i32
  }
  func.func @transform_7(%arg0: i32) -> (i32, i32, i32) {
    %c0_i32 = arith.constant 0 : i32
    %c0_i32_0 = arith.constant 0 : i32
    %c0_i32_1 = arith.constant 0 : i32
    %c0_i32_2 = arith.constant 0 : i32
    return %c0_i32, %c0_i32_0, %c0_i32_1 : i32, i32, i32
  }
  func.func @transform_8(%arg0: i32) -> (i32, i32) {
    %c0_i32 = arith.constant 0 : i32
    %c0_i32_0 = arith.constant 0 : i32
    %c0_i32_1 = arith.constant 0 : i32
    return %c0_i32, %c0_i32_0 : i32, i32
  }
  func.func @transform_9(%arg0: i32) -> (i32, i32) {
    %c0_i32 = arith.constant 0 : i32
    %c0_i32_0 = arith.constant 0 : i32
    return %arg0, %c0_i32 : i32, i32
  }
}

</mosaic_0001>

<llo_original>
// kernel: tpu_custom_call.1
$region0: #{tpu_custom_call.1}
  #allocation0 [shape = 'u32[]', space=smem, size = 0x4, offset = 0x4, fixed_abs, tag = 'smem constant byte address 0x4 - core index']
  #allocation1 [shape = 'u32[144,128]{1,0:T(1,128)}', space=vmem, size = 0x12000, scoped, tag = 'internal scratch']
  #allocation2 [shape = 'f32[1,1]{1,0:T(1,128)S(1)}', space=vmem, size = 0x200, scoped, tag = 'scoped memory for tpu_custom_call.1']
  %s0 = inlined_call_operand.vmem [shape: f32[16,64], index: 0, kind: input, shape index: {}]
  %s1 = inlined_call_operand.vmem [shape: f32[16,9,128], index: 1, kind: input, shape index: {}]
  %s2 = inlined_call_operand.vmem [shape: f32[64,64], index: 2, kind: input, shape index: {}]
  %s3 = inlined_call_operand.vmem [shape: f32[8,64,9], index: 3, kind: input, shape index: {}]
  %s4 = inlined_call_operand.vmem [shape: f32[1,64], index: 4, kind: input, shape index: {}]
  %s5 = inlined_call_operand.vmem [shape: f32[8,64,64], index: 5, kind: input, shape index: {}]
  %s6 = inlined_call_operand.vmem [shape: f32[1,64,1], index: 6, kind: input, shape index: {}]
  %s7 = inlined_call_operand.vmem [shape: f32[1,64,1], index: 7, kind: input, shape index: {}]
  %s8 = inlined_call_operand.<no memory space> [shape: f32[1,1], index: 8, kind: input, shape index: {}]
  %s9 = inlined_call_operand.hbm [shape: f32[16,128], index: 9, kind: output, shape index: {}]
  %s10 = sld [smem:[#allocation0]]
  $region69: #{tpu_custom_call.1} parent=0
    _
  %s12 = ssub.s32 1, %s10
  %s13 = scalar_select 0, %s12, %s10
  %v14 = vstv %s8
  %15 = vst [vmem:[#allocation2] sm:$0x1] %v14
  $region1: #{tpu_custom_call.1} parent=0
    #allocation3 [shape = 'u8[8192]{0}', space=vmem, size = 0x2000, scoped, tag = 'output window, operand 0']
    #allocation4 [shape = 's32[2]{0}', space=sflag, size = 0x8, scoped, tag = 'scoped memory for tpu_custom_call.1']
    %16 = vsyncpa [#allocation4], 0
    %s17 = scalar_lea.sflag [#allocation4], 1
    %18 = vsyncpa %s17, 0
    loop: start=0, step=1, limit=4
    $region2: #{tpu_custom_call.1} parent=1 // loop_pre_header
      _
    $region3: #{tpu_custom_call.1} parent=1 // loop_header
      %s20 = sphi 0, %s24
      %p21 = scmp.ge.s32.totalorder %s20, 4
      %s30 = sphi 0, %s32
      %s33 = sphi 0, %s30
      %s34 = sphi 0, %s33
      %s50 = sphi 0, %s34
      %s56 = sphi 0, %s58
      %s59 = sphi 0, %s56
      %s60 = sphi 0, %s59
      %s76 = sphi 0, %s60
      %s80 = sphi 0, %s80
      %s82 = sphi 0, %s80
      %s83 = sphi 0, %s82
      %s97 = sphi 0, %s83
      %s101 = sphi 0, %s101
      %s103 = sphi 0, %s101
      %s104 = sphi 0, %s103
      %s118 = sphi 0, %s104
      %s122 = sphi 0, %s122
      %s124 = sphi 0, %s122
      %s125 = sphi 0, %s124
      %s139 = sphi 0, %s125
      %s143 = sphi 0, %s143
      %s145 = sphi 0, %s143
      %s146 = sphi 0, %s145
      %s160 = sphi 0, %s146
      %s164 = sphi 0, %s164
      %s166 = sphi 0, %s164
      %s167 = sphi 0, %s166
      %s181 = sphi 0, %s167
      %s185 = sphi 0, %s185
      %s187 = sphi 0, %s185
      %s188 = sphi 0, %s187
      %s202 = sphi 0, %s188
      %s206 = sphi 0, %s206
      %s208 = sphi 0, %s206
      %s209 = sphi 0, %s208
      %s223 = sphi 0, %s209
      %s229 = sphi 0, %s231
      %s232 = sphi 0, %s229
      %s233 = sphi 0, %s232
      %s249 = sphi 0, %s233
    $region4: #{tpu_custom_call.1} parent=1 // loop_header_branch
      %23 = sbr.rel (%p21) target = $region8
    $region5: #{tpu_custom_call.1} parent=1 // loop_body
      %s25 = ssub.s32 %s20, 1
      %s26 = ssub.s32 %s20, 2
      %s27 = sadd.s32 %s20, 1
      %s28 = ssub.s32 %s20, %s27
      %p29 = scmp.eq.s32.totalorder %s28, 0
      %s31 = sadd.s32 %s30, 1
      %s32 = scalar_select %p29, %s30, %s31
      %p35 = pneg %p29
      %p36 = scmp.eq.s32.totalorder %s20, 1
      %p37 = por %p35, %p36
      %p38 = scmp.ne.s32.totalorder %s30, %s33
      %p39 = scmp.eq.s32.totalorder %s20, 0
      %p40 = por %p38, %p39
      %p41 = scmp.ne.s32.totalorder %s30, %s33
      %p42 = scmp.eq.s32.totalorder %s25, 1
      %p43 = por %p41, %p42
      %p44 = scmp.ne.s32.totalorder %s33, %s34
      %p45 = scmp.eq.s32.totalorder %s25, 0
      %p46 = por %p44, %p45
      %p47 = scmp.ne.s32.totalorder %s33, %s34
      %p48 = scmp.eq.s32.totalorder %s26, 1
      %p49 = por %p47, %p48
      %p51 = scmp.ne.s32.totalorder %s34, %s50
      %p52 = scmp.eq.s32.totalorder %s26, 0
      %p53 = por %p51, %p52
      %s54 = ssub.s32 %s20, %s27
      %p55 = scmp.eq.s32.totalorder %s54, 0
      %s57 = sadd.s32 %s56, 1
      %s58 = scalar_select %p55, %s56, %s57
      %p61 = pneg %p55
      %p62 = scmp.eq.s32.totalorder %s20, 1
      %p63 = por %p61, %p62
      %p64 = scmp.ne.s32.totalorder %s56, %s59
      %p65 = scmp.eq.s32.totalorder %s20, 0
      %p66 = por %p64, %p65
      %p67 = scmp.ne.s32.totalorder %s56, %s59
      %p68 = scmp.eq.s32.totalorder %s25, 1
      %p69 = por %p67, %p68
      %p70 = scmp.ne.s32.totalorder %s59, %s60
      %p71 = scmp.eq.s32.totalorder %s25, 0
      %p72 = por %p70, %p71
      %p73 = scmp.ne.s32.totalorder %s59, %s60
      %p74 = scmp.eq.s32.totalorder %s26, 1
      %p75 = por %p73, %p74
      %p77 = scmp.ne.s32.totalorder %s60, %s76
      %p78 = scmp.eq.s32.totalorder %s26, 0
      %p79 = por %p77, %p78
      %s81 = sadd.s32 %s80, 1
      %p84 = scmp.eq.s32.totalorder %s20, 1
      %p85 = scmp.ne.s32.totalorder %s80, %s82
      %p86 = scmp.eq.s32.totalorder %s20, 0
      %p87 = por %p85, %p86
      %p88 = scmp.ne.s32.totalorder %s80, %s82
      %p89 = scmp.eq.s32.totalorder %s25, 1
      %p90 = por %p88, %p89
      %p91 = scmp.ne.s32.totalorder %s82, %s83
      %p92 = scmp.eq.s32.totalorder %s25, 0
      %p93 = por %p91, %p92
      %p94 = scmp.ne.s32.totalorder %s82, %s83
      %p95 = scmp.eq.s32.totalorder %s26, 1
      %p96 = por %p94, %p95
      %p98 = scmp.ne.s32.totalorder %s83, %s97
      %p99 = scmp.eq.s32.totalorder %s26, 0
      %p100 = por %p98, %p99
      %s102 = sadd.s32 %s101, 1
      %p105 = scmp.eq.s32.totalorder %s20, 1
      %p106 = scmp.ne.s32.totalorder %s101, %s103
      %p107 = scmp.eq.s32.totalorder %s20, 0
      %p108 = por %p106, %p107
      %p109 = scmp.ne.s32.totalorder %s101, %s103
      %p110 = scmp.eq.s32.totalorder %s25, 1
      %p111 = por %p109, %p110
      %p112 = scmp.ne.s32.totalorder %s103, %s104
      %p113 = scmp.eq.s32.totalorder %s25, 0
      %p114 = por %p112, %p113
      %p115 = scmp.ne.s32.totalorder %s103, %s104
      %p116 = scmp.eq.s32.totalorder %s26, 1
      %p117 = por %p115, %p116
      %p119 = scmp.ne.s32.totalorder %s104, %s118
      %p120 = scmp.eq.s32.totalorder %s26, 0
      %p121 = por %p119, %p120
      %s123 = sadd.s32 %s122, 1
      %p126 = scmp.eq.s32.totalorder %s20, 1
      %p127 = scmp.ne.s32.totalorder %s122, %s124
      %p128 = scmp.eq.s32.totalorder %s20, 0
      %p129 = por %p127, %p128
      %p130 = scmp.ne.s32.totalorder %s122, %s124
      %p131 = scmp.eq.s32.totalorder %s25, 1
      %p132 = por %p130, %p131
      %p133 = scmp.ne.s32.totalorder %s124, %s125
      %p134 = scmp.eq.s32.totalorder %s25, 0
      %p135 = por %p133, %p134
      %p136 = scmp.ne.s32.totalorder %s124, %s125
      %p137 = scmp.eq.s32.totalorder %s26, 1
      %p138 = por %p136, %p137
      %p140 = scmp.ne.s32.totalorder %s125, %s139
      %p141 = scmp.eq.s32.totalorder %s26, 0
      %p142 = por %p140, %p141
      %s144 = sadd.s32 %s143, 1
      %p147 = scmp.eq.s32.totalorder %s20, 1
      %p148 = scmp.ne.s32.totalorder %s143, %s145
      %p149 = scmp.eq.s32.totalorder %s20, 0
      %p150 = por %p148, %p149
      %p151 = scmp.ne.s32.totalorder %s143, %s145
      %p152 = scmp.eq.s32.totalorder %s25, 1
      %p153 = por %p151, %p152
      %p154 = scmp.ne.s32.totalorder %s145, %s146
      %p155 = scmp.eq.s32.totalorder %s25, 0
      %p156 = por %p154, %p155
      %p157 = scmp.ne.s32.totalorder %s145, %s146
      %p158 = scmp.eq.s32.totalorder %s26, 1
      %p159 = por %p157, %p158
      %p161 = scmp.ne.s32.totalorder %s146, %s160
      %p162 = scmp.eq.s32.totalorder %s26, 0
      %p163 = por %p161, %p162
      %s165 = sadd.s32 %s164, 1
      %p168 = scmp.eq.s32.totalorder %s20, 1
      %p169 = scmp.ne.s32.totalorder %s164, %s166
      %p170 = scmp.eq.s32.totalorder %s20, 0
      %p171 = por %p169, %p170
      %p172 = scmp.ne.s32.totalorder %s164, %s166
      %p173 = scmp.eq.s32.totalorder %s25, 1
      %p174 = por %p172, %p173
      %p175 = scmp.ne.s32.totalorder %s166, %s167
      %p176 = scmp.eq.s32.totalorder %s25, 0
      %p177 = por %p175, %p176
      %p178 = scmp.ne.s32.totalorder %s166, %s167
      %p179 = scmp.eq.s32.totalorder %s26, 1
      %p180 = por %p178, %p179
      %p182 = scmp.ne.s32.totalorder %s167, %s181
      %p183 = scmp.eq.s32.totalorder %s26, 0
      %p184 = por %p182, %p183
      %s186 = sadd.s32 %s185, 1
      %p189 = scmp.eq.s32.totalorder %s20, 1
      %p190 = scmp.ne.s32.totalorder %s185, %s187
      %p191 = scmp.eq.s32.totalorder %s20, 0
      %p192 = por %p190, %p191
      %p193 = scmp.ne.s32.totalorder %s185, %s187
      %p194 = scmp.eq.s32.totalorder %s25, 1
      %p195 = por %p193, %p194
      %p196 = scmp.ne.s32.totalorder %s187, %s188
      %p197 = scmp.eq.s32.totalorder %s25, 0
      %p198 = por %p196, %p197
      %p199 = scmp.ne.s32.totalorder %s187, %s188
      %p200 = scmp.eq.s32.totalorder %s26, 1
      %p201 = por %p199, %p200
      %p203 = scmp.ne.s32.totalorder %s188, %s202
      %p204 = scmp.eq.s32.totalorder %s26, 0
      %p205 = por %p203, %p204
      %s207 = sadd.s32 %s206, 1
      %p210 = scmp.eq.s32.totalorder %s20, 1
      %p211 = scmp.ne.s32.totalorder %s206, %s208
      %p212 = scmp.eq.s32.totalorder %s20, 0
      %p213 = por %p211, %p212
      %p214 = scmp.ne.s32.totalorder %s206, %s208
      %p215 = scmp.eq.s32.totalorder %s25, 1
      %p216 = por %p214, %p215
      %p217 = scmp.ne.s32.totalorder %s208, %s209
      %p218 = scmp.eq.s32.totalorder %s25, 0
      %p219 = por %p217, %p218
      %p220 = scmp.ne.s32.totalorder %s208, %s209
      %p221 = scmp.eq.s32.totalorder %s26, 1
      %p222 = por %p220, %p221
      %p224 = scmp.ne.s32.totalorder %s209, %s223
      %p225 = scmp.eq.s32.totalorder %s26, 0
      %p226 = por %p224, %p225
      %s227 = ssub.s32 %s20, %s27
      %p228 = scmp.eq.s32.totalorder %s227, 0
      %s230 = sadd.s32 %s229, 1
      %s231 = scalar_select %p228, %s229, %s230
      %p234 = pneg %p228
      %p235 = scmp.eq.s32.totalorder %s20, 1
      %p236 = por %p234, %p235
      %p237 = scmp.ne.s32.totalorder %s229, %s232
      %p238 = scmp.eq.s32.totalorder %s20, 0
      %p239 = por %p237, %p238
      %p240 = scmp.ne.s32.totalorder %s229, %s232
      %p241 = scmp.eq.s32.totalorder %s25, 1
      %p242 = por %p240, %p241
      %p243 = scmp.ne.s32.totalorder %s232, %s233
      %p244 = scmp.eq.s32.totalorder %s25, 0
      %p245 = por %p243, %p244
      %p246 = scmp.ne.s32.totalorder %s232, %s233
      %p247 = scmp.eq.s32.totalorder %s26, 1
      %p248 = por %p246, %p247
      %p250 = scmp.ne.s32.totalorder %s233, %s249
      %p251 = scmp.eq.s32.totalorder %s26, 0
      %p252 = por %p250, %p251
      %p253 = scmp.le.s32.totalorder 1, %s20
      %p254 = scmp.lt.s32.totalorder %s20, 3
      %p255 = pnand %p253, %p254
      %p256 = pneg %p255
      // Predicated region
      $region9: #{tpu_custom_call.1} parent=5 // pred_check
        _
      $region10: #{tpu_custom_call.1} parent=5 // pred_check_branch
        %258 = sbr.rel (%p255) target = $region12
      $region11: #{tpu_custom_call.1} parent=5 // pred_region
        %s259 = ssub.s32 %s20, 1
        // Predicated region
        $region13: #{tpu_custom_call.1} parent=11 // pred_check
          %p260 = pneg %p93
        $region14: #{tpu_custom_call.1} parent=11 // pred_check_branch
          %262 = sbr.rel (%p260) target = $region16
        $region15: #{tpu_custom_call.1} parent=11 // pred_region
          _
        $region16: #{tpu_custom_call.1} parent=11 // pred_fallthru
          _
        // Predicated region
        $region17: #{tpu_custom_call.1} parent=11 // pred_check
          %p263 = pneg %p114
        $region18: #{tpu_custom_call.1} parent=11 // pred_check_branch
          %265 = sbr.rel (%p263) target = $region20
        $region19: #{tpu_custom_call.1} parent=11 // pred_region
          _
        $region20: #{tpu_custom_call.1} parent=11 // pred_fallthru
          _
        // Predicated region
        $region21: #{tpu_custom_call.1} parent=11 // pred_check
          %p266 = pneg %p135
        $region22: #{tpu_custom_call.1} parent=11 // pred_check_branch
          %268 = sbr.rel (%p266) target = $region24
        $region23: #{tpu_custom_call.1} parent=11 // pred_region
          _
        $region24: #{tpu_custom_call.1} parent=11 // pred_fallthru
          _
        // Predicated region
        $region25: #{tpu_custom_call.1} parent=11 // pred_check
          %p269 = pneg %p156
        $region26: #{tpu_custom_call.1} parent=11 // pred_check_branch
          %271 = sbr.rel (%p269) target = $region28
        $region27: #{tpu_custom_call.1} parent=11 // pred_region
          _
        $region28: #{tpu_custom_call.1} parent=11 // pred_fallthru
          _
        // Predicated region
        $region29: #{tpu_custom_call.1} parent=11 // pred_check
          %p272 = pneg %p177
        $region30: #{tpu_custom_call.1} parent=11 // pred_check_branch
          %274 = sbr.rel (%p272) target = $region32
        $region31: #{tpu_custom_call.1} parent=11 // pred_region
          _
        $region32: #{tpu_custom_call.1} parent=11 // pred_fallthru
          _
        // Predicated region
        $region33: #{tpu_custom_call.1} parent=11 // pred_check
          %p275 = pneg %p198
        $region34: #{tpu_custom_call.1} parent=11 // pred_check_branch
          %277 = sbr.rel (%p275) target = $region36
        $region35: #{tpu_custom_call.1} parent=11 // pred_region
          _
        $region36: #{tpu_custom_call.1} parent=11 // pred_fallthru
          _
        // Predicated region
        $region37: #{tpu_custom_call.1} parent=11 // pred_check
          %p278 = pneg %p219
        $region38: #{tpu_custom_call.1} parent=11 // pred_check_branch
          %280 = sbr.rel (%p278) target = $region40
        $region39: #{tpu_custom_call.1} parent=11 // pred_region
          _
        $region40: #{tpu_custom_call.1} parent=11 // pred_fallthru
          _
      $region12: #{tpu_custom_call.1} parent=5 // pred_fallthru
        _
      %p281 = scmp.lt.s32.totalorder %s20, 2
      // Predicated region
      $region41: #{tpu_custom_call.1} parent=5 // pred_check
        %p282 = pneg %p281
      $region42: #{tpu_custom_call.1} parent=5 // pred_check_branch
        %284 = sbr.rel (%p282) target = $region44
      $region43: #{tpu_custom_call.1} parent=5 // pred_region
        // Predicated region
        $region45: #{tpu_custom_call.1} parent=43 // pred_check
          %p285 = pneg %p40
        $region46: #{tpu_custom_call.1} parent=43 // pred_check_branch
          %287 = sbr.rel (%p285) target = $region48
        $region47: #{tpu_custom_call.1} parent=43 // pred_region
          %p288 = scmp.lt.s32.totalorder %s20, 1
          %s289 = scalar_select %p288, %s20, 1
          %s290 = smul.addr %s289, 8
          %s291 = scalar_lea.vmem %s0, %s290
        $region48: #{tpu_custom_call.1} parent=43 // pred_fallthru
          _
        // Predicated region
        $region49: #{tpu_custom_call.1} parent=43 // pred_check
          %p292 = pneg %p66
        $region50: #{tpu_custom_call.1} parent=43 // pred_check_branch
          %294 = sbr.rel (%p292) target = $region52
        $region51: #{tpu_custom_call.1} parent=43 // pred_region
          %s295 = smul.u32 8, %s20
          %p296 = scmp.lt.s32.totalorder %s295, 15
          %s297 = scalar_select %p296, %s295, 15
          %s298 = smul.addr %s297, 2
          %s299 = smul.addr %s298, 8
          %s300 = scalar_lea.vmem %s1, %s299
          %s301 = smul.u32 8, %s20
        $region52: #{tpu_custom_call.1} parent=43 // pred_fallthru
          _
      $region44: #{tpu_custom_call.1} parent=5 // pred_fallthru
        _
      %p302 = scmp.le.s32.totalorder 1, %s20
      %p303 = scmp.lt.s32.totalorder %s20, 3
      %p304 = pnand %p302, %p303
      %p305 = pneg %p304
      // Predicated region
      $region53: #{tpu_custom_call.1} parent=5 // pred_check
        _
      $region54: #{tpu_custom_call.1} parent=5 // pred_check_branch
        %307 = sbr.rel (%p304) target = $region56
      $region55: #{tpu_custom_call.1} parent=5 // pred_region
        %s308 = ssub.s32 %s20, 1
        %p309 = scmp.lt.s32.totalorder %s25, 1
        %s310 = scalar_select %p309, %s25, 1
        %s311 = smul.addr %s310, 8
        %s312 = scalar_lea.vmem %s0, %s311
        %p313 = pneg %p46
        %p314 = pneg %p43
        %s315 = smul.u32 8, %s25
        %p316 = scmp.lt.s32.totalorder %s315, 15
        %s317 = scalar_select %p316, %s315, 15
        %s318 = smul.addr %s317, 2
        %s319 = smul.addr %s318, 8
        %s320 = scalar_lea.vmem %s1, %s319
        %p321 = pneg %p72
        %p322 = pneg %p69
        %p323 = pneg %p93
        %p324 = pneg %p90
        %p325 = pneg %p114
        %p326 = pneg %p111
        %p327 = pneg %p135
        %p328 = pneg %p132
        %p329 = pneg %p156
        %p330 = pneg %p153
        %p331 = pneg %p177
        %p332 = pneg %p174
        %p333 = pneg %p198
        %p334 = pneg %p195
        %p335 = pneg %p219
        %p336 = pneg %p216
        %p337 = pneg %p245
        %p338 = pneg %p242
        %s339 = sand.u32 %s232, 1
        %s340 = scalar_lea.sflag [#allocation4], %s339
        %s341 = sand.u32 %s232, 1
        %s342 = smul.addr %s341, 8
        %s343 = scalar_lea.vmem [#allocation3], %s342
        %p344 = scmp.lt.s32.totalorder %s25, 1
        %s345 = scalar_select %p344, %s25, 1
        %s346 = smul.addr %s345, 8
        %s347 = scalar_lea.vmem %s0, %s346
        %s348 = smul.u32 8, %s25
        %p349 = scmp.lt.s32.totalorder %s348, 15
        %s350 = scalar_select %p349, %s348, 15
        %s351 = smul.addr %s350, 2
        %s352 = smul.addr %s351, 8
        %s353 = scalar_lea.vmem %s1, %s352
        %s354 = smul.u32 8, %s25
        %v355 = vld [vmem:[%s347] sm:$0xff]
        %v356 = vld [vmem:[%s2] sm:$0xff]
        %v357 = vld [vmem:[%s2 + $0x8] sm:$0xff]
        %v358 = vld [vmem:[%s2 + $0x10] sm:$0xff]
        %v359 = vld [vmem:[%s2 + $0x18] sm:$0xff]
        %v360 = vld [vmem:[%s2 + $0x20] sm:$0xff]
        %v361 = vld [vmem:[%s2 + $0x28] sm:$0xff]
        %v362 = vld [vmem:[%s2 + $0x30] sm:$0xff]
        %v363 = vld [vmem:[%s2 + $0x38] sm:$0xff]
        %v364 = vld [vmem:[%s4] sm:$0x1]
        %v366 = vlaneseq
        %v367 = vshrl.u32 %v366, 7
        %v368 = vsub.s32 0, %v367
        %v369 = vrot.slane %v364, %v368
        %vm371 = vcmask 523264
        %v373 = vsel %vm371, %v355, 0
        %375 = vmatprep.subr.mxu0 0.0
        %376 = vmatpush1.msra.mxu0 0.0
        %377 = vmatprep.subr.mxu0 0.0
        %378 = vmatpush1.msra.mxu0 0.0
        %379 = vmatprep.subr.mxu0 0.0
        %380 = vmatpush1.msra.mxu0 0.0
        %381 = vmatprep.subr.mxu0 0.0
        %382 = vmatpush1.msra.mxu0 0.0
        %383 = vmatprep.subr.mxu0 0.0
        %384 = vmatpush1.msra.mxu0 0.0
        %385 = vmatprep.subr.mxu0 0.0
        %386 = vmatpush1.msra.mxu0 0.0
        %387 = vmatprep.subr.mxu0 0.0
        %388 = vmatpush1.msra.mxu0 0.0
        %389 = vmatprep.subr.mxu0 0.0
        %390 = vmatpush1.msra.mxu0 0.0
        %391 = vmatprep.subr.mxu0 0.0
        %392 = vmatpush1.msra.mxu0 %v363
        %393 = vmatprep.subr.mxu0 0.0
        %394 = vmatpush1.msra.mxu0 %v362
        %395 = vmatprep.subr.mxu0 0.0
        %396 = vmatpush1.msra.mxu0 %v361
        %397 = vmatprep.subr.mxu0 0.0
        %398 = vmatpush1.msra.mxu0 %v360
        %399 = vmatprep.subr.mxu0 0.0
        %400 = vmatpush1.msra.mxu0 %v359
        %401 = vmatprep.subr.mxu0 0.0
        %402 = vmatpush1.msra.mxu0 %v358
        %403 = vmatprep.subr.mxu0 0.0
        %404 = vmatpush1.msra.mxu0 %v357
        %405 = vmatprep.subr.mxu0 0.0
        %406 = vmatpush1.msra.mxu0 %v356
        %407 = vmatprep.subr.mxu0 0.0
        %408 = vmatpush2.msra.mxu0 0.0
        %409 = vmatprep.subr.mxu0 0.0
        %410 = vmatpush2.msra.mxu0 0.0
        %411 = vmatprep.subr.mxu0 0.0
        %412 = vmatpush2.msra.mxu0 0.0
        %413 = vmatprep.subr.mxu0 0.0
        %414 = vmatpush2.msra.mxu0 0.0
        %415 = vmatprep.subr.mxu0 0.0
        %416 = vmatpush2.msra.mxu0 0.0
        %417 = vmatprep.subr.mxu0 0.0
        %418 = vmatpush2.msra.mxu0 0.0
        %419 = vmatprep.subr.mxu0 0.0
        %420 = vmatpush2.msra.mxu0 0.0
        %421 = vmatprep.subr.mxu0 0.0
        %422 = vmatpush2.msra.mxu0 0.0
        %423 = vmatprep.subr.mxu0 0.0
        %424 = vmatpush2.msra.mxu0 0.0
        %425 = vmatprep.subr.mxu0 0.0
        %426 = vmatpush2.msra.mxu0 0.0
        %427 = vmatprep.subr.mxu0 0.0
        %428 = vmatpush2.msra.mxu0 0.0
        %429 = vmatprep.subr.mxu0 0.0
        %430 = vmatpush2.msra.mxu0 0.0
        %431 = vmatprep.subr.mxu0 0.0
        %432 = vmatpush2.msra.mxu0 0.0
        %433 = vmatprep.subr.mxu0 0.0
        %434 = vmatpush2.msra.mxu0 0.0
        %435 = vmatprep.subr.mxu0 0.0
        %436 = vmatpush2.msra.mxu0 0.0
        %437 = vmatprep.subr.mxu0 0.0
        %438 = vmatpush2.msra.mxu0 0.0
        %439 = vmatprep.mubr.f32.mxu0 0.0
        %440 = vmatmul.mubr.f32.gmra.mxu0 %v373
        %v441 = vpop.f32.mrf.mxu0
        %v442 = vadd.f32 %v369, %v441
        %v443 = vpop.f32.mrf.mxu0
        %444 = vdwg.mxu0
        %v445 = vld [vmem:[%s3] sm:$0xff]
        %v446 = vld [vmem:[%s3 + $0x8] sm:$0xff]
        %v447 = vld [vmem:[%s3 + $0x10] sm:$0xff]
        %v448 = vld [vmem:[%s3 + $0x18] sm:$0xff]
        %v449 = vld [vmem:[%s3 + $0x20] sm:$0xff]
        %v450 = vld [vmem:[%s3 + $0x28] sm:$0xff]
        %v451 = vld [vmem:[%s3 + $0x30] sm:$0xff]
        %v452 = vld [vmem:[%s3 + $0x38] sm:$0xff]
        %v453 = vld [vmem:[%s3 + $0x40] sm:$0xff]
        %v454 = vld [vmem:[%s3 + $0x48] sm:$0xff]
        %v455 = vld [vmem:[%s3 + $0x50] sm:$0xff]
        %v456 = vld [vmem:[%s3 + $0x58] sm:$0xff]
        %v457 = vld [vmem:[%s3 + $0x60] sm:$0xff]
        %v458 = vld [vmem:[%s3 + $0x68] sm:$0xff]
        %v459 = vld [vmem:[%s3 + $0x70] sm:$0xff]
        %v460 = vld [vmem:[%s3 + $0x78] sm:$0xff]
        %v461 = vld [vmem:[%s3 + $0x80] sm:$0xff]
        %v462 = vld [vmem:[%s3 + $0x88] sm:$0xff]
        %v463 = vld [vmem:[%s3 + $0x90] sm:$0xff]
        %v464 = vld [vmem:[%s3 + $0x98] sm:$0xff]
        %v465 = vld [vmem:[%s3 + $0xa0] sm:$0xff]
        %v466 = vld [vmem:[%s3 + $0xa8] sm:$0xff]
        %v467 = vld [vmem:[%s3 + $0xb0] sm:$0xff]
        %v468 = vld [vmem:[%s3 + $0xb8] sm:$0xff]
        %v469 = vld [vmem:[%s3 + $0xc0] sm:$0xff]
        %v470 = vld [vmem:[%s3 + $0xc8] sm:$0xff]
        %v471 = vld [vmem:[%s3 + $0xd0] sm:$0xff]
        %v472 = vld [vmem:[%s3 + $0xd8] sm:$0xff]
        %v473 = vld [vmem:[%s3 + $0xe0] sm:$0xff]
        %v474 = vld [vmem:[%s3 + $0xe8] sm:$0xff]
        %v475 = vld [vmem:[%s3 + $0xf0] sm:$0xff]
        %v476 = vld [vmem:[%s3 + $0xf8] sm:$0xff]
        %v477 = vld [vmem:[%s3 + $0x100] sm:$0xff]
        %v478 = vld [vmem:[%s3 + $0x108] sm:$0xff]
        %v479 = vld [vmem:[%s3 + $0x110] sm:$0xff]
        %v480 = vld [vmem:[%s3 + $0x118] sm:$0xff]
        %v481 = vld [vmem:[%s3 + $0x120] sm:$0xff]
        %v482 = vld [vmem:[%s3 + $0x128] sm:$0xff]
        %v483 = vld [vmem:[%s3 + $0x130] sm:$0xff]
        %v484 = vld [vmem:[%s3 + $0x138] sm:$0xff]
        %v485 = vld [vmem:[%s3 + $0x140] sm:$0xff]
        %v486 = vld [vmem:[%s3 + $0x148] sm:$0xff]
        %v487 = vld [vmem:[%s3 + $0x150] sm:$0xff]
        %v488 = vld [vmem:[%s3 + $0x158] sm:$0xff]
        %v489 = vld [vmem:[%s3 + $0x160] sm:$0xff]
        %v490 = vld [vmem:[%s3 + $0x168] sm:$0xff]
        %v491 = vld [vmem:[%s3 + $0x170] sm:$0xff]
        %v492 = vld [vmem:[%s3 + $0x178] sm:$0xff]
        %v493 = vld [vmem:[%s3 + $0x180] sm:$0xff]
        %v494 = vld [vmem:[%s3 + $0x188] sm:$0xff]
        %v495 = vld [vmem:[%s3 + $0x190] sm:$0xff]
        %v496 = vld [vmem:[%s3 + $0x198] sm:$0xff]
        %v497 = vld [vmem:[%s3 + $0x1a0] sm:$0xff]
        %v498 = vld [vmem:[%s3 + $0x1a8] sm:$0xff]
        %v499 = vld [vmem:[%s3 + $0x1b0] sm:$0xff]
        %v500 = vld [vmem:[%s3 + $0x1b8] sm:$0xff]
        %v501 = vld [vmem:[%s3 + $0x1c0] sm:$0xff]
        %v502 = vld [vmem:[%s3 + $0x1c8] sm:$0xff]
        %v503 = vld [vmem:[%s3 + $0x1d0] sm:$0xff]
        %v504 = vld [vmem:[%s3 + $0x1d8] sm:$0xff]
        %v505 = vld [vmem:[%s3 + $0x1e0] sm:$0xff]
        %v506 = vld [vmem:[%s3 + $0x1e8] sm:$0xff]
        %v507 = vld [vmem:[%s3 + $0x1f0] sm:$0xff]
        %v508 = vld [vmem:[%s3 + $0x1f8] sm:$0xff]
        %v509 = vld [vmem:[%s353] sm:$0xff]
        %v510 = vld [vmem:[%s353 + $0x8] sm:$0x1]
        %v511 = vld [vmem:[%s353 + $0x10] sm:$0xff]
        %v512 = vld [vmem:[%s353 + $0x18] sm:$0x1]
        %v513 = vld [vmem:[%s353 + $0x20] sm:$0xff]
        %v514 = vld [vmem:[%s353 + $0x28] sm:$0x1]
        %v515 = vld [vmem:[%s353 + $0x30] sm:$0xff]
        %v516 = vld [vmem:[%s353 + $0x38] sm:$0x1]
        %v517 = vld [vmem:[%s353 + $0x40] sm:$0xff]
        %v518 = vld [vmem:[%s353 + $0x48] sm:$0x1]
        %v519 = vld [vmem:[%s353 + $0x50] sm:$0xff]
        %v520 = vld [vmem:[%s353 + $0x58] sm:$0x1]
        %v521 = vld [vmem:[%s353 + $0x60] sm:$0xff]
        %v522 = vld [vmem:[%s353 + $0x68] sm:$0x1]
        %v523 = vld [vmem:[%s353 + $0x70] sm:$0xff]
        %v524 = vld [vmem:[%s353 + $0x78] sm:$0x1]
        %v525 = vlaneseq
        %v526 = vshrl.u32 %v525, 7
        %v527 = vsub.s32 0, %v526
        %v528 = vrot.slane %v442, %v527
        %530 = vbcast.lane.b32.xlu0 %v528, 256
        %v531 = vpop.permute.xlu0 %530
        %s533 = sor.u32 256, 8
        %534 = vbcast.lane.b32.xlu0 %v528, %s533
        %v535 = vpop.permute.xlu0 %534
        %s537 = sor.u32 256, 16
        %538 = vbcast.lane.b32.xlu0 %v528, %s537
        %v539 = vpop.permute.xlu0 %538
        %s541 = sor.u32 256, 24
        %542 = vbcast.lane.b32.xlu0 %v528, %s541
        %v543 = vpop.permute.xlu0 %542
        %s545 = sor.u32 256, 32
        %546 = vbcast.lane.b32.xlu0 %v528, %s545
        %v547 = vpop.permute.xlu0 %546
        %s549 = sor.u32 256, 40
        %550 = vbcast.lane.b32.xlu0 %v528, %s549
        %v551 = vpop.permute.xlu0 %550
        %s553 = sor.u32 256, 48
        %554 = vbcast.lane.b32.xlu0 %v528, %s553
        %v555 = vpop.permute.xlu0 %554
        %s557 = sor.u32 256, 56
        %558 = vbcast.lane.b32.xlu0 %v528, %s557
        %v559 = vpop.permute.xlu0 %558
        %v560 = vlaneseq
        %v561 = vshrl.u32 %v560, 7
        %v562 = vsub.s32 1, %v561
        %v563 = vrot.slane %v442, %v562
        %565 = vbcast.lane.b32.xlu0 %v563, 256
        %v566 = vpop.permute.xlu0 %565
        %s568 = sor.u32 256, 8
        %569 = vbcast.lane.b32.xlu0 %v563, %s568
        %v570 = vpop.permute.xlu0 %569
        %s572 = sor.u32 256, 16
        %573 = vbcast.lane.b32.xlu0 %v563, %s572
        %v574 = vpop.permute.xlu0 %573
        %s576 = sor.u32 256, 24
        %577 = vbcast.lane.b32.xlu0 %v563, %s576
        %v578 = vpop.permute.xlu0 %577
        %s580 = sor.u32 256, 32
        %581 = vbcast.lane.b32.xlu0 %v563, %s580
        %v582 = vpop.permute.xlu0 %581
        %s584 = sor.u32 256, 40
        %585 = vbcast.lane.b32.xlu0 %v563, %s584
        %v586 = vpop.permute.xlu0 %585
        %s588 = sor.u32 256, 48
        %589 = vbcast.lane.b32.xlu0 %v563, %s588
        %v590 = vpop.permute.xlu0 %589
        %s592 = sor.u32 256, 56
        %593 = vbcast.lane.b32.xlu0 %v563, %s592
        %v594 = vpop.permute.xlu0 %593
        %v595 = vlaneseq
        %v596 = vshrl.u32 %v595, 7
        %v597 = vsub.s32 2, %v596
        %v598 = vrot.slane %v442, %v597
        %600 = vbcast.lane.b32.xlu0 %v598, 256
        %v601 = vpop.permute.xlu0 %600
        %s603 = sor.u32 256, 8
        %604 = vbcast.lane.b32.xlu0 %v598, %s603
        %v605 = vpop.permute.xlu0 %604
        %s607 = sor.u32 256, 16
        %608 = vbcast.lane.b32.xlu0 %v598, %s607
        %v609 = vpop.permute.xlu0 %608
        %s611 = sor.u32 256, 24
        %612 = vbcast.lane.b32.xlu0 %v598, %s611
        %v613 = vpop.permute.xlu0 %612
        %s615 = sor.u32 256, 32
        %616 = vbcast.lane.b32.xlu0 %v598, %s615
        %v617 = vpop.permute.xlu0 %616
        %s619 = sor.u32 256, 40
        %620 = vbcast.lane.b32.xlu0 %v598, %s619
        %v621 = vpop.permute.xlu0 %620
        %s623 = sor.u32 256, 48
        %624 = vbcast.lane.b32.xlu0 %v598, %s623
        %v625 = vpop.permute.xlu0 %624
        %s627 = sor.u32 256, 56
        %628 = vbcast.lane.b32.xlu0 %v598, %s627
        %v629 = vpop.permute.xlu0 %628
        %v630 = vlaneseq
        %v631 = vshrl.u32 %v630, 7
        %v632 = vsub.s32 3, %v631
        %v633 = vrot.slane %v442, %v632
        %635 = vbcast.lane.b32.xlu0 %v633, 256
        %v636 = vpop.permute.xlu0 %635
        %s638 = sor.u32 256, 8
        %639 = vbcast.lane.b32.xlu0 %v633, %s638
        %v640 = vpop.permute.xlu0 %639
        %s642 = sor.u32 256, 16
        %643 = vbcast.lane.b32.xlu0 %v633, %s642
        %v644 = vpop.permute.xlu0 %643
        %s646 = sor.u32 256, 24
        %647 = vbcast.lane.b32.xlu0 %v633, %s646
        %v648 = vpop.permute.xlu0 %647
        %s650 = sor.u32 256, 32
        %651 = vbcast.lane.b32.xlu0 %v633, %s650
        %v652 = vpop.permute.xlu0 %651
        %s654 = sor.u32 256, 40
        %655 = vbcast.lane.b32.xlu0 %v633, %s654
        %v656 = vpop.permute.xlu0 %655
        %s658 = sor.u32 256, 48
        %659 = vbcast.lane.b32.xlu0 %v633, %s658
        %v660 = vpop.permute.xlu0 %659
        %s662 = sor.u32 256, 56
        %663 = vbcast.lane.b32.xlu0 %v633, %s662
        %v664 = vpop.permute.xlu0 %663
        %v665 = vlaneseq
        %v666 = vshrl.u32 %v665, 7
        %v667 = vsub.s32 4, %v666
        %v668 = vrot.slane %v442, %v667
        %670 = vbcast.lane.b32.xlu0 %v668, 256
        %v671 = vpop.permute.xlu0 %670
        %s673 = sor.u32 256, 8
        %674 = vbcast.lane.b32.xlu0 %v668, %s673
        %v675 = vpop.permute.xlu0 %674
        %s677 = sor.u32 256, 16
        %678 = vbcast.lane.b32.xlu0 %v668, %s677
        %v679 = vpop.permute.xlu0 %678
        %s681 = sor.u32 256, 24
        %682 = vbcast.lane.b32.xlu0 %v668, %s681
        %v683 = vpop.permute.xlu0 %682
        %s685 = sor.u32 256, 32
        %686 = vbcast.lane.b32.xlu0 %v668, %s685
        %v687 = vpop.permute.xlu0 %686
        %s689 = sor.u32 256, 40
        %690 = vbcast.lane.b32.xlu0 %v668, %s689
        %v691 = vpop.permute.xlu0 %690
        %s693 = sor.u32 256, 48
        %694 = vbcast.lane.b32.xlu0 %v668, %s693
        %v695 = vpop.permute.xlu0 %694
        %s697 = sor.u32 256, 56
        %698 = vbcast.lane.b32.xlu0 %v668, %s697
        %v699 = vpop.permute.xlu0 %698
        %v700 = vlaneseq
        %v701 = vshrl.u32 %v700, 7
        %v702 = vsub.s32 5, %v701
        %v703 = vrot.slane %v442, %v702
        %705 = vbcast.lane.b32.xlu0 %v703, 256
        %v706 = vpop.permute.xlu0 %705
        %s708 = sor.u32 256, 8
        %709 = vbcast.lane.b32.xlu0 %v703, %s708
        %v710 = vpop.permute.xlu0 %709
        %s712 = sor.u32 256, 16
        %713 = vbcast.lane.b32.xlu0 %v703, %s712
        %v714 = vpop.permute.xlu0 %713
        %s716 = sor.u32 256, 24
        %717 = vbcast.lane.b32.xlu0 %v703, %s716
        %v718 = vpop.permute.xlu0 %717
        %s720 = sor.u32 256, 32
        %721 = vbcast.lane.b32.xlu0 %v703, %s720
        %v722 = vpop.permute.xlu0 %721
        %s724 = sor.u32 256, 40
        %725 = vbcast.lane.b32.xlu0 %v703, %s724
        %v726 = vpop.permute.xlu0 %725
        %s728 = sor.u32 256, 48
        %729 = vbcast.lane.b32.xlu0 %v703, %s728
        %v730 = vpop.permute.xlu0 %729
        %s732 = sor.u32 256, 56
        %733 = vbcast.lane.b32.xlu0 %v703, %s732
        %v734 = vpop.permute.xlu0 %733
        %v735 = vlaneseq
        %v736 = vshrl.u32 %v735, 7
        %v737 = vsub.s32 6, %v736
        %v738 = vrot.slane %v442, %v737
        %740 = vbcast.lane.b32.xlu0 %v738, 256
        %v741 = vpop.permute.xlu0 %740
        %s743 = sor.u32 256, 8
        %744 = vbcast.lane.b32.xlu0 %v738, %s743
        %v745 = vpop.permute.xlu0 %744
        %s747 = sor.u32 256, 16
        %748 = vbcast.lane.b32.xlu0 %v738, %s747
        %v749 = vpop.permute.xlu0 %748
        %s751 = sor.u32 256, 24
        %752 = vbcast.lane.b32.xlu0 %v738, %s751
        %v753 = vpop.permute.xlu0 %752
        %s755 = sor.u32 256, 32
        %756 = vbcast.lane.b32.xlu0 %v738, %s755
        %v757 = vpop.permute.xlu0 %756
        %s759 = sor.u32 256, 40
        %760 = vbcast.lane.b32.xlu0 %v738, %s759
        %v761 = vpop.permute.xlu0 %760
        %s763 = sor.u32 256, 48
        %764 = vbcast.lane.b32.xlu0 %v738, %s763
        %v765 = vpop.permute.xlu0 %764
        %s767 = sor.u32 256, 56
        %768 = vbcast.lane.b32.xlu0 %v738, %s767
        %v769 = vpop.permute.xlu0 %768
        %v770 = vlaneseq
        %v771 = vshrl.u32 %v770, 7
        %v772 = vsub.s32 7, %v771
        %v773 = vrot.slane %v442, %v772
        %775 = vbcast.lane.b32.xlu0 %v773, 256
        %v776 = vpop.permute.xlu0 %775
        %s778 = sor.u32 256, 8
        %779 = vbcast.lane.b32.xlu0 %v773, %s778
        %v780 = vpop.permute.xlu0 %779
        %s782 = sor.u32 256, 16
        %783 = vbcast.lane.b32.xlu0 %v773, %s782
        %v784 = vpop.permute.xlu0 %783
        %s786 = sor.u32 256, 24
        %787 = vbcast.lane.b32.xlu0 %v773, %s786
        %v788 = vpop.permute.xlu0 %787
        %s790 = sor.u32 256, 32
        %791 = vbcast.lane.b32.xlu0 %v773, %s790
        %v792 = vpop.permute.xlu0 %791
        %s794 = sor.u32 256, 40
        %795 = vbcast.lane.b32.xlu0 %v773, %s794
        %v796 = vpop.permute.xlu0 %795
        %s798 = sor.u32 256, 48
        %799 = vbcast.lane.b32.xlu0 %v773, %s798
        %v800 = vpop.permute.xlu0 %799
        %s802 = sor.u32 256, 56
        %803 = vbcast.lane.b32.xlu0 %v773, %s802
        %v804 = vpop.permute.xlu0 %803
        %vm805 = vcmask 72704
        %v807 = vsel %vm805, %v445, 0
        %v810 = vsel %vm805, %v446, 0
        %v813 = vsel %vm805, %v447, 0
        %v816 = vsel %vm805, %v448, 0
        %v819 = vsel %vm805, %v449, 0
        %v822 = vsel %vm805, %v450, 0
        %v825 = vsel %vm805, %v451, 0
        %v828 = vsel %vm805, %v452, 0
        %vm830 = vcmask 1040384
        %v832 = vsel %vm830, %v510, 0
        %834 = vmatprep.subr.mxu0 0.0
        %835 = vmatpush1.msra.mxu0 0.0
        %836 = vmatprep.subr.mxu0 0.0
        %837 = vmatpush1.msra.mxu0 0.0
        %838 = vmatprep.subr.mxu0 0.0
        %839 = vmatpush1.msra.mxu0 0.0
        %840 = vmatprep.subr.mxu0 0.0
        %841 = vmatpush1.msra.mxu0 0.0
        %842 = vmatprep.subr.mxu0 0.0
        %843 = vmatpush1.msra.mxu0 0.0
        %844 = vmatprep.subr.mxu0 0.0
        %845 = vmatpush1.msra.mxu0 0.0
        %846 = vmatprep.subr.mxu0 0.0
        %847 = vmatpush1.msra.mxu0 0.0
        %848 = vmatprep.subr.mxu0 0.0
        %849 = vmatpush1.msra.mxu0 0.0
        %850 = vmatprep.subr.mxu0 0.0
        %851 = vmatpush1.msra.mxu0 0.0
        %852 = vmatprep.subr.mxu0 0.0
        %853 = vmatpush1.msra.mxu0 0.0
        %854 = vmatprep.subr.mxu0 0.0
        %855 = vmatpush1.msra.mxu0 0.0
        %856 = vmatprep.subr.mxu0 0.0
        %857 = vmatpush1.msra.mxu0 0.0
        %858 = vmatprep.subr.mxu0 0.0
        %859 = vmatpush1.msra.mxu0 0.0
        %860 = vmatprep.subr.mxu0 0.0
        %861 = vmatpush1.msra.mxu0 0.0
        %862 = vmatprep.subr.mxu0 0.0
        %863 = vmatpush1.msra.mxu0 %v832
        %864 = vmatprep.subr.mxu0 0.0
        %865 = vmatpush1.msra.mxu0 %v509
        %866 = vmatprep.subr.mxu0 0.0
        %867 = vmatpush2.msra.mxu0 0.0
        %868 = vmatprep.subr.mxu0 0.0
        %869 = vmatpush2.msra.mxu0 0.0
        %870 = vmatprep.subr.mxu0 0.0
        %871 = vmatpush2.msra.mxu0 0.0
        %872 = vmatprep.subr.mxu0 0.0
        %873 = vmatpush2.msra.mxu0 0.0
        %874 = vmatprep.subr.mxu0 0.0
        %875 = vmatpush2.msra.mxu0 0.0
        %876 = vmatprep.subr.mxu0 0.0
        %877 = vmatpush2.msra.mxu0 0.0
        %878 = vmatprep.subr.mxu0 0.0
        %879 = vmatpush2.msra.mxu0 0.0
        %880 = vmatprep.subr.mxu0 0.0
        %881 = vmatpush2.msra.mxu0 0.0
        %882 = vmatprep.subr.mxu0 0.0
        %883 = vmatpush2.msra.mxu0 0.0
        %884 = vmatprep.subr.mxu0 0.0
        %885 = vmatpush2.msra.mxu0 0.0
        %886 = vmatprep.subr.mxu0 0.0
        %887 = vmatpush2.msra.mxu0 0.0
        %888 = vmatprep.subr.mxu0 0.0
        %889 = vmatpush2.msra.mxu0 0.0
        %890 = vmatprep.subr.mxu0 0.0
        %891 = vmatpush2.msra.mxu0 0.0
        %892 = vmatprep.subr.mxu0 0.0
        %893 = vmatpush2.msra.mxu0 0.0
        %894 = vmatprep.subr.mxu0 0.0
        %895 = vmatpush2.msra.mxu0 0.0
        %896 = vmatprep.subr.mxu0 0.0
        %897 = vmatpush2.msra.mxu0 0.0
        %898 = vmatprep.mubr.f32.mxu0 0.0
        %899 = vmatmul.mubr.f32.gmra.mxu0 %v807
        %v900 = vpop.f32.mrf.mxu0
        %v901 = vadd.f32 %v531, %v900
        %v902 = vpop.f32.mrf.mxu0
        %903 = vmatprep.mubr.f32.mxu0 0.0
        %904 = vmatmul.mubr.f32.gmra.mxu0 %v810
        %v905 = vpop.f32.mrf.mxu0
        %v906 = vadd.f32 %v535, %v905
        %v907 = vpop.f32.mrf.mxu0
        %908 = vmatprep.mubr.f32.mxu0 0.0
        %909 = vmatmul.mubr.f32.gmra.mxu0 %v813
        %v910 = vpop.f32.mrf.mxu0
        %v911 = vadd.f32 %v539, %v910
        %v912 = vpop.f32.mrf.mxu0
        %913 = vmatprep.mubr.f32.mxu0 0.0
        %914 = vmatmul.mubr.f32.gmra.mxu0 %v816
        %v915 = vpop.f32.mrf.mxu0
        %v916 = vadd.f32 %v543, %v915
        %v917 = vpop.f32.mrf.mxu0
        %918 = vmatprep.mubr.f32.mxu0 0.0
        %919 = vmatmul.mubr.f32.gmra.mxu0 %v819
        %v920 = vpop.f32.mrf.mxu0
        %v921 = vadd.f32 %v547, %v920
        %v922 = vpop.f32.mrf.mxu0
        %923 = vmatprep.mubr.f32.mxu0 0.0
        %924 = vmatmul.mubr.f32.gmra.mxu0 %v822
        %v925 = vpop.f32.mrf.mxu0
        %v926 = vadd.f32 %v551, %v925
        %v927 = vpop.f32.mrf.mxu0
        %928 = vmatprep.mubr.f32.mxu0 0.0
        %929 = vmatmul.mubr.f32.gmra.mxu0 %v825
        %v930 = vpop.f32.mrf.mxu0
        %v931 = vadd.f32 %v555, %v930
        %v932 = vpop.f32.mrf.mxu0
        %933 = vmatprep.mubr.f32.mxu0 0.0
        %934 = vmatmul.mubr.f32.gmra.mxu0 %v828
        %v935 = vpop.f32.mrf.mxu0
        %v936 = vadd.f32 %v559, %v935
        %v937 = vpop.f32.mrf.mxu0
        %938 = vdwg.mxu0
        %v940 = vsel %vm805, %v453, 0
        %v943 = vsel %vm805, %v454, 0
        %v946 = vsel %vm805, %v455, 0
        %v949 = vsel %vm805, %v456, 0
        %v952 = vsel %vm805, %v457, 0
        %v955 = vsel %vm805, %v458, 0
        %v958 = vsel %vm805, %v459, 0
        %v961 = vsel %vm805, %v460, 0
        %v964 = vsel %vm830, %v512, 0
        %966 = vmatprep.subr.mxu0 0.0
        %967 = vmatpush1.msra.mxu0 0.0
        %968 = vmatprep.subr.mxu0 0.0
        %969 = vmatpush1.msra.mxu0 0.0
        %970 = vmatprep.subr.mxu0 0.0
        %971 = vmatpush1.msra.mxu0 0.0
        %972 = vmatprep.subr.mxu0 0.0
        %973 = vmatpush1.msra.mxu0 0.0
        %974 = vmatprep.subr.mxu0 0.0
        %975 = vmatpush1.msra.mxu0 0.0
        %976 = vmatprep.subr.mxu0 0.0
        %977 = vmatpush1.msra.mxu0 0.0
        %978 = vmatprep.subr.mxu0 0.0
        %979 = vmatpush1.msra.mxu0 0.0
        %980 = vmatprep.subr.mxu0 0.0
        %981 = vmatpush1.msra.mxu0 0.0
        %982 = vmatprep.subr.mxu0 0.0
        %983 = vmatpush1.msra.mxu0 0.0
        %984 = vmatprep.subr.mxu0 0.0
        %985 = vmatpush1.msra.mxu0 0.0
        %986 = vmatprep.subr.mxu0 0.0
        %987 = vmatpush1.msra.mxu0 0.0
        %988 = vmatprep.subr.mxu0 0.0
        %989 = vmatpush1.msra.mxu0 0.0
        %990 = vmatprep.subr.mxu0 0.0
        %991 = vmatpush1.msra.mxu0 0.0
        %992 = vmatprep.subr.mxu0 0.0
        %993 = vmatpush1.msra.mxu0 0.0
        %994 = vmatprep.subr.mxu0 0.0
        %995 = vmatpush1.msra.mxu0 %v964
        %996 = vmatprep.subr.mxu0 0.0
        %997 = vmatpush1.msra.mxu0 %v511
        %998 = vmatprep.subr.mxu0 0.0
        %999 = vmatpush2.msra.mxu0 0.0
        %1000 = vmatprep.subr.mxu0 0.0
        %1001 = vmatpush2.msra.mxu0 0.0
        %1002 = vmatprep.subr.mxu0 0.0
        %1003 = vmatpush2.msra.mxu0 0.0
        %1004 = vmatprep.subr.mxu0 0.0
        %1005 = vmatpush2.msra.mxu0 0.0
        %1006 = vmatprep.subr.mxu0 0.0
        %1007 = vmatpush2.msra.mxu0 0.0
        %1008 = vmatprep.subr.mxu0 0.0
        %1009 = vmatpush2.msra.mxu0 0.0
        %1010 = vmatprep.subr.mxu0 0.0
        %1011 = vmatpush2.msra.mxu0 0.0
        %1012 = vmatprep.subr.mxu0 0.0
        %1013 = vmatpush2.msra.mxu0 0.0
        %1014 = vmatprep.subr.mxu0 0.0
        %1015 = vmatpush2.msra.mxu0 0.0
        %1016 = vmatprep.subr.mxu0 0.0
        %1017 = vmatpush2.msra.mxu0 0.0
        %1018 = vmatprep.subr.mxu0 0.0
        %1019 = vmatpush2.msra.mxu0 0.0
        %1020 = vmatprep.subr.mxu0 0.0
        %1021 = vmatpush2.msra.mxu0 0.0
        %1022 = vmatprep.subr.mxu0 0.0
        %1023 = vmatpush2.msra.mxu0 0.0
        %1024 = vmatprep.subr.mxu0 0.0
        %1025 = vmatpush2.msra.mxu0 0.0
        %1026 = vmatprep.subr.mxu0 0.0
        %1027 = vmatpush2.msra.mxu0 0.0
        %1028 = vmatprep.subr.mxu0 0.0
        %1029 = vmatpush2.msra.mxu0 0.0
        %1030 = vmatprep.mubr.f32.mxu0 0.0
        %1031 = vmatmul.mubr.f32.gmra.mxu0 %v940
        %v1032 = vpop.f32.mrf.mxu0
        %v1033 = vadd.f32 %v566, %v1032
        %v1034 = vpop.f32.mrf.mxu0
        %1035 = vmatprep.mubr.f32.mxu0 0.0
        %1036 = vmatmul.mubr.f32.gmra.mxu0 %v943
        %v1037 = vpop.f32.mrf.mxu0
        %v1038 = vadd.f32 %v570, %v1037
        %v1039 = vpop.f32.mrf.mxu0
        %1040 = vmatprep.mubr.f32.mxu0 0.0
        %1041 = vmatmul.mubr.f32.gmra.mxu0 %v946
        %v1042 = vpop.f32.mrf.mxu0
        %v1043 = vadd.f32 %v574, %v1042
        %v1044 = vpop.f32.mrf.mxu0
        %1045 = vmatprep.mubr.f32.mxu0 0.0
        %1046 = vmatmul.mubr.f32.gmra.mxu0 %v949
        %v1047 = vpop.f32.mrf.mxu0
        %v1048 = vadd.f32 %v578, %v1047
        %v1049 = vpop.f32.mrf.mxu0
        %1050 = vmatprep.mubr.f32.mxu0 0.0
        %1051 = vmatmul.mubr.f32.gmra.mxu0 %v952
        %v1052 = vpop.f32.mrf.mxu0
        %v1053 = vadd.f32 %v582, %v1052
        %v1054 = vpop.f32.mrf.mxu0
        %1055 = vmatprep.mubr.f32.mxu0 0.0
        %1056 = vmatmul.mubr.f32.gmra.mxu0 %v955
        %v1057 = vpop.f32.mrf.mxu0
        %v1058 = vadd.f32 %v586, %v1057
        %v1059 = vpop.f32.mrf.mxu0
        %1060 = vmatprep.mubr.f32.mxu0 0.0
        %1061 = vmatmul.mubr.f32.gmra.mxu0 %v958
        %v1062 = vpop.f32.mrf.mxu0
        %v1063 = vadd.f32 %v590, %v1062
        %v1064 = vpop.f32.mrf.mxu0
        %1065 = vmatprep.mubr.f32.mxu0 0.0
        %1066 = vmatmul.mubr.f32.gmra.mxu0 %v961
        %v1067 = vpop.f32.mrf.mxu0
        %v1068 = vadd.f32 %v594, %v1067
        %v1069 = vpop.f32.mrf.mxu0
        %1070 = vdwg.mxu0
        %v1072 = vsel %vm805, %v461, 0
        %v1075 = vsel %vm805, %v462, 0
        %v1078 = vsel %vm805, %v463, 0
        %v1081 = vsel %vm805, %v464, 0
        %v1084 = vsel %vm805, %v465, 0
        %v1087 = vsel %vm805, %v466, 0
        %v1090 = vsel %vm805, %v467, 0
        %v1093 = vsel %vm805, %v468, 0
        %v1096 = vsel %vm830, %v514, 0
        %1098 = vmatprep.subr.mxu0 0.0
        %1099 = vmatpush1.msra.mxu0 0.0
        %1100 = vmatprep.subr.mxu0 0.0
        %1101 = vmatpush1.msra.mxu0 0.0
        %1102 = vmatprep.subr.mxu0 0.0
        %1103 = vmatpush1.msra.mxu0 0.0
        %1104 = vmatprep.subr.mxu0 0.0
        %1105 = vmatpush1.msra.mxu0 0.0
        %1106 = vmatprep.subr.mxu0 0.0
        %1107 = vmatpush1.msra.mxu0 0.0
        %1108 = vmatprep.subr.mxu0 0.0
        %1109 = vmatpush1.msra.mxu0 0.0
        %1110 = vmatprep.subr.mxu0 0.0
        %1111 = vmatpush1.msra.mxu0 0.0
        %1112 = vmatprep.subr.mxu0 0.0
        %1113 = vmatpush1.msra.mxu0 0.0
        %1114 = vmatprep.subr.mxu0 0.0
        %1115 = vmatpush1.msra.mxu0 0.0
        %1116 = vmatprep.subr.mxu0 0.0
        %1117 = vmatpush1.msra.mxu0 0.0
        %1118 = vmatprep.subr.mxu0 0.0
        %1119 = vmatpush1.msra.mxu0 0.0
        %1120 = vmatprep.subr.mxu0 0.0
        %1121 = vmatpush1.msra.mxu0 0.0
        %1122 = vmatprep.subr.mxu0 0.0
        %1123 = vmatpush1.msra.mxu0 0.0
        %1124 = vmatprep.subr.mxu0 0.0
        %1125 = vmatpush1.msra.mxu0 0.0
        %1126 = vmatprep.subr.mxu0 0.0
        %1127 = vmatpush1.msra.mxu0 %v1096
        %1128 = vmatprep.subr.mxu0 0.0
        %1129 = vmatpush1.msra.mxu0 %v513
        %1130 = vmatprep.subr.mxu0 0.0
        %1131 = vmatpush2.msra.mxu0 0.0
        %1132 = vmatprep.subr.mxu0 0.0
        %1133 = vmatpush2.msra.mxu0 0.0
        %1134 = vmatprep.subr.mxu0 0.0
        %1135 = vmatpush2.msra.mxu0 0.0
        %1136 = vmatprep.subr.mxu0 0.0
        %1137 = vmatpush2.msra.mxu0 0.0
        %1138 = vmatprep.subr.mxu0 0.0
        %1139 = vmatpush2.msra.mxu0 0.0
        %1140 = vmatprep.subr.mxu0 0.0
        %1141 = vmatpush2.msra.mxu0 0.0
        %1142 = vmatprep.subr.mxu0 0.0
        %1143 = vmatpush2.msra.mxu0 0.0
        %1144 = vmatprep.subr.mxu0 0.0
        %1145 = vmatpush2.msra.mxu0 0.0
        %1146 = vmatprep.subr.mxu0 0.0
        %1147 = vmatpush2.msra.mxu0 0.0
        %1148 = vmatprep.subr.mxu0 0.0
        %1149 = vmatpush2.msra.mxu0 0.0
        %1150 = vmatprep.subr.mxu0 0.0
        %1151 = vmatpush2.msra.mxu0 0.0
        %1152 = vmatprep.subr.mxu0 0.0
        %1153 = vmatpush2.msra.mxu0 0.0
        %1154 = vmatprep.subr.mxu0 0.0
        %1155 = vmatpush2.msra.mxu0 0.0
        %1156 = vmatprep.subr.mxu0 0.0
        %1157 = vmatpush2.msra.mxu0 0.0
        %1158 = vmatprep.subr.mxu0 0.0
        %1159 = vmatpush2.msra.mxu0 0.0
        %1160 = vmatprep.subr.mxu0 0.0
        %1161 = vmatpush2.msra.mxu0 0.0
        %1162 = vmatprep.mubr.f32.mxu0 0.0
        %1163 = vmatmul.mubr.f32.gmra.mxu0 %v1072
        %v1164 = vpop.f32.mrf.mxu0
        %v1165 = vadd.f32 %v601, %v1164
        %v1166 = vpop.f32.mrf.mxu0
        %1167 = vmatprep.mubr.f32.mxu0 0.0
        %1168 = vmatmul.mubr.f32.gmra.mxu0 %v1075
        %v1169 = vpop.f32.mrf.mxu0
        %v1170 = vadd.f32 %v605, %v1169
        %v1171 = vpop.f32.mrf.mxu0
        %1172 = vmatprep.mubr.f32.mxu0 0.0
        %1173 = vmatmul.mubr.f32.gmra.mxu0 %v1078
        %v1174 = vpop.f32.mrf.mxu0
        %v1175 = vadd.f32 %v609, %v1174
        %v1176 = vpop.f32.mrf.mxu0
        %1177 = vmatprep.mubr.f32.mxu0 0.0
        %1178 = vmatmul.mubr.f32.gmra.mxu0 %v1081
        %v1179 = vpop.f32.mrf.mxu0
        %v1180 = vadd.f32 %v613, %v1179
        %v1181 = vpop.f32.mrf.mxu0
        %1182 = vmatprep.mubr.f32.mxu0 0.0
        %1183 = vmatmul.mubr.f32.gmra.mxu0 %v1084
        %v1184 = vpop.f32.mrf.mxu0
        %v1185 = vadd.f32 %v617, %v1184
        %v1186 = vpop.f32.mrf.mxu0
        %1187 = vmatprep.mubr.f32.mxu0 0.0
        %1188 = vmatmul.mubr.f32.gmra.mxu0 %v1087
        %v1189 = vpop.f32.mrf.mxu0
        %v1190 = vadd.f32 %v621, %v1189
        %v1191 = vpop.f32.mrf.mxu0
        %1192 = vmatprep.mubr.f32.mxu0 0.0
        %1193 = vmatmul.mubr.f32.gmra.mxu0 %v1090
        %v1194 = vpop.f32.mrf.mxu0
        %v1195 = vadd.f32 %v625, %v1194
        %v1196 = vpop.f32.mrf.mxu0
        %1197 = vmatprep.mubr.f32.mxu0 0.0
        %1198 = vmatmul.mubr.f32.gmra.mxu0 %v1093
        %v1199 = vpop.f32.mrf.mxu0
        %v1200 = vadd.f32 %v629, %v1199
        %v1201 = vpop.f32.mrf.mxu0
        %1202 = vdwg.mxu0
        %v1204 = vsel %vm805, %v469, 0
        %v1207 = vsel %vm805, %v470, 0
        %v1210 = vsel %vm805, %v471, 0
        %v1213 = vsel %vm805, %v472, 0
        %v1216 = vsel %vm805, %v473, 0
        %v1219 = vsel %vm805, %v474, 0
        %v1222 = vsel %vm805, %v475, 0
        %v1225 = vsel %vm805, %v476, 0
        %v1228 = vsel %vm830, %v516, 0
        %1230 = vmatprep.subr.mxu0 0.0
        %1231 = vmatpush1.msra.mxu0 0.0
        %1232 = vmatprep.subr.mxu0 0.0
        %1233 = vmatpush1.msra.mxu0 0.0
        %1234 = vmatprep.subr.mxu0 0.0
        %1235 = vmatpush1.msra.mxu0 0.0
        %1236 = vmatprep.subr.mxu0 0.0
        %1237 = vmatpush1.msra.mxu0 0.0
        %1238 = vmatprep.subr.mxu0 0.0
        %1239 = vmatpush1.msra.mxu0 0.0
        %1240 = vmatprep.subr.mxu0 0.0
        %1241 = vmatpush1.msra.mxu0 0.0
        %1242 = vmatprep.subr.mxu0 0.0
        %1243 = vmatpush1.msra.mxu0 0.0
        %1244 = vmatprep.subr.mxu0 0.0
        %1245 = vmatpush1.msra.mxu0 0.0
        %1246 = vmatprep.subr.mxu0 0.0
        %1247 = vmatpush1.msra.mxu0 0.0
        %1248 = vmatprep.subr.mxu0 0.0
        %1249 = vmatpush1.msra.mxu0 0.0
        %1250 = vmatprep.subr.mxu0 0.0
        %1251 = vmatpush1.msra.mxu0 0.0
        %1252 = vmatprep.subr.mxu0 0.0
        %1253 = vmatpush1.msra.mxu0 0.0
        %1254 = vmatprep.subr.mxu0 0.0
        %1255 = vmatpush1.msra.mxu0 0.0
        %1256 = vmatprep.subr.mxu0 0.0
        %1257 = vmatpush1.msra.mxu0 0.0
        %1258 = vmatprep.subr.mxu0 0.0
        %1259 = vmatpush1.msra.mxu0 %v1228
        %1260 = vmatprep.subr.mxu0 0.0
        %1261 = vmatpush1.msra.mxu0 %v515
        %1262 = vmatprep.subr.mxu0 0.0
        %1263 = vmatpush2.msra.mxu0 0.0
        %1264 = vmatprep.subr.mxu0 0.0
        %1265 = vmatpush2.msra.mxu0 0.0
        %1266 = vmatprep.subr.mxu0 0.0
        %1267 = vmatpush2.msra.mxu0 0.0
        %1268 = vmatprep.subr.mxu0 0.0
        %1269 = vmatpush2.msra.mxu0 0.0
        %1270 = vmatprep.subr.mxu0 0.0
        %1271 = vmatpush2.msra.mxu0 0.0
        %1272 = vmatprep.subr.mxu0 0.0
        %1273 = vmatpush2.msra.mxu0 0.0
        %1274 = vmatprep.subr.mxu0 0.0
        %1275 = vmatpush2.msra.mxu0 0.0
        %1276 = vmatprep.subr.mxu0 0.0
        %1277 = vmatpush2.msra.mxu0 0.0
        %1278 = vmatprep.subr.mxu0 0.0
        %1279 = vmatpush2.msra.mxu0 0.0
        %1280 = vmatprep.subr.mxu0 0.0
        %1281 = vmatpush2.msra.mxu0 0.0
        %1282 = vmatprep.subr.mxu0 0.0
        %1283 = vmatpush2.msra.mxu0 0.0
        %1284 = vmatprep.subr.mxu0 0.0
        %1285 = vmatpush2.msra.mxu0 0.0
        %1286 = vmatprep.subr.mxu0 0.0
        %1287 = vmatpush2.msra.mxu0 0.0
        %1288 = vmatprep.subr.mxu0 0.0
        %1289 = vmatpush2.msra.mxu0 0.0
        %1290 = vmatprep.subr.mxu0 0.0
        %1291 = vmatpush2.msra.mxu0 0.0
        %1292 = vmatprep.subr.mxu0 0.0
        %1293 = vmatpush2.msra.mxu0 0.0
        %1294 = vmatprep.mubr.f32.mxu0 0.0
        %1295 = vmatmul.mubr.f32.gmra.mxu0 %v1204
        %v1296 = vpop.f32.mrf.mxu0
        %v1297 = vadd.f32 %v636, %v1296
        %v1298 = vpop.f32.mrf.mxu0
        %1299 = vmatprep.mubr.f32.mxu0 0.0
        %1300 = vmatmul.mubr.f32.gmra.mxu0 %v1207
        %v1301 = vpop.f32.mrf.mxu0
        %v1302 = vadd.f32 %v640, %v1301
        %v1303 = vpop.f32.mrf.mxu0
        %1304 = vmatprep.mubr.f32.mxu0 0.0
        %1305 = vmatmul.mubr.f32.gmra.mxu0 %v1210
        %v1306 = vpop.f32.mrf.mxu0
        %v1307 = vadd.f32 %v644, %v1306
        %v1308 = vpop.f32.mrf.mxu0
        %1309 = vmatprep.mubr.f32.mxu0 0.0
        %1310 = vmatmul.mubr.f32.gmra.mxu0 %v1213
        %v1311 = vpop.f32.mrf.mxu0
        %v1312 = vadd.f32 %v648, %v1311
        %v1313 = vpop.f32.mrf.mxu0
        %1314 = vmatprep.mubr.f32.mxu0 0.0
        %1315 = vmatmul.mubr.f32.gmra.mxu0 %v1216
        %v1316 = vpop.f32.mrf.mxu0
        %v1317 = vadd.f32 %v652, %v1316
        %v1318 = vpop.f32.mrf.mxu0
        %1319 = vmatprep.mubr.f32.mxu0 0.0
        %1320 = vmatmul.mubr.f32.gmra.mxu0 %v1219
        %v1321 = vpop.f32.mrf.mxu0
        %v1322 = vadd.f32 %v656, %v1321
        %v1323 = vpop.f32.mrf.mxu0
        %1324 = vmatprep.mubr.f32.mxu0 0.0
        %1325 = vmatmul.mubr.f32.gmra.mxu0 %v1222
        %v1326 = vpop.f32.mrf.mxu0
        %v1327 = vadd.f32 %v660, %v1326
        %v1328 = vpop.f32.mrf.mxu0
        %1329 = vmatprep.mubr.f32.mxu0 0.0
        %1330 = vmatmul.mubr.f32.gmra.mxu0 %v1225
        %v1331 = vpop.f32.mrf.mxu0
        %v1332 = vadd.f32 %v664, %v1331
        %v1333 = vpop.f32.mrf.mxu0
        %1334 = vdwg.mxu0
        %v1336 = vsel %vm805, %v477, 0
        %v1339 = vsel %vm805, %v478, 0
        %v1342 = vsel %vm805, %v479, 0
        %v1345 = vsel %vm805, %v480, 0
        %v1348 = vsel %vm805, %v481, 0
        %v1351 = vsel %vm805, %v482, 0
        %v1354 = vsel %vm805, %v483, 0
        %v1357 = vsel %vm805, %v484, 0
        %v1360 = vsel %vm830, %v518, 0
        %1362 = vmatprep.subr.mxu0 0.0
        %1363 = vmatpush1.msra.mxu0 0.0
        %1364 = vmatprep.subr.mxu0 0.0
        %1365 = vmatpush1.msra.mxu0 0.0
        %1366 = vmatprep.subr.mxu0 0.0
        %1367 = vmatpush1.msra.mxu0 0.0
        %1368 = vmatprep.subr.mxu0 0.0
        %1369 = vmatpush1.msra.mxu0 0.0
        %1370 = vmatprep.subr.mxu0 0.0
        %1371 = vmatpush1.msra.mxu0 0.0
        %1372 = vmatprep.subr.mxu0 0.0
        %1373 = vmatpush1.msra.mxu0 0.0
        %1374 = vmatprep.subr.mxu0 0.0
        %1375 = vmatpush1.msra.mxu0 0.0
        %1376 = vmatprep.subr.mxu0 0.0
        %1377 = vmatpush1.msra.mxu0 0.0
        %1378 = vmatprep.subr.mxu0 0.0
        %1379 = vmatpush1.msra.mxu0 0.0
        %1380 = vmatprep.subr.mxu0 0.0
        %1381 = vmatpush1.msra.mxu0 0.0
        %1382 = vmatprep.subr.mxu0 0.0
        %1383 = vmatpush1.msra.mxu0 0.0
        %1384 = vmatprep.subr.mxu0 0.0
        %1385 = vmatpush1.msra.mxu0 0.0
        %1386 = vmatprep.subr.mxu0 0.0
        %1387 = vmatpush1.msra.mxu0 0.0
        %1388 = vmatprep.subr.mxu0 0.0
        %1389 = vmatpush1.msra.mxu0 0.0
        %1390 = vmatprep.subr.mxu0 0.0
        %1391 = vmatpush1.msra.mxu0 %v1360
        %1392 = vmatprep.subr.mxu0 0.0
        %1393 = vmatpush1.msra.mxu0 %v517
        %1394 = vmatprep.subr.mxu0 0.0
        %1395 = vmatpush2.msra.mxu0 0.0
        %1396 = vmatprep.subr.mxu0 0.0
        %1397 = vmatpush2.msra.mxu0 0.0
        %1398 = vmatprep.subr.mxu0 0.0
        %1399 = vmatpush2.msra.mxu0 0.0
        %1400 = vmatprep.subr.mxu0 0.0
        %1401 = vmatpush2.msra.mxu0 0.0
        %1402 = vmatprep.subr.mxu0 0.0
        %1403 = vmatpush2.msra.mxu0 0.0
        %1404 = vmatprep.subr.mxu0 0.0
        %1405 = vmatpush2.msra.mxu0 0.0
        %1406 = vmatprep.subr.mxu0 0.0
        %1407 = vmatpush2.msra.mxu0 0.0
        %1408 = vmatprep.subr.mxu0 0.0
        %1409 = vmatpush2.msra.mxu0 0.0
        %1410 = vmatprep.subr.mxu0 0.0
        %1411 = vmatpush2.msra.mxu0 0.0
        %1412 = vmatprep.subr.mxu0 0.0
        %1413 = vmatpush2.msra.mxu0 0.0
        %1414 = vmatprep.subr.mxu0 0.0
        %1415 = vmatpush2.msra.mxu0 0.0
        %1416 = vmatprep.subr.mxu0 0.0
        %1417 = vmatpush2.msra.mxu0 0.0
        %1418 = vmatprep.subr.mxu0 0.0
        %1419 = vmatpush2.msra.mxu0 0.0
        %1420 = vmatprep.subr.mxu0 0.0
        %1421 = vmatpush2.msra.mxu0 0.0
        %1422 = vmatprep.subr.mxu0 0.0
        %1423 = vmatpush2.msra.mxu0 0.0
        %1424 = vmatprep.subr.mxu0 0.0
        %1425 = vmatpush2.msra.mxu0 0.0
        %1426 = vmatprep.mubr.f32.mxu0 0.0
        %1427 = vmatmul.mubr.f32.gmra.mxu0 %v1336
        %v1428 = vpop.f32.mrf.mxu0
        %v1429 = vadd.f32 %v671, %v1428
        %v1430 = vpop.f32.mrf.mxu0
        %1431 = vmatprep.mubr.f32.mxu0 0.0
        %1432 = vmatmul.mubr.f32.gmra.mxu0 %v1339
        %v1433 = vpop.f32.mrf.mxu0
        %v1434 = vadd.f32 %v675, %v1433
        %v1435 = vpop.f32.mrf.mxu0
        %1436 = vmatprep.mubr.f32.mxu0 0.0
        %1437 = vmatmul.mubr.f32.gmra.mxu0 %v1342
        %v1438 = vpop.f32.mrf.mxu0
        %v1439 = vadd.f32 %v679, %v1438
        %v1440 = vpop.f32.mrf.mxu0
        %1441 = vmatprep.mubr.f32.mxu0 0.0
        %1442 = vmatmul.mubr.f32.gmra.mxu0 %v1345
        %v1443 = vpop.f32.mrf.mxu0
        %v1444 = vadd.f32 %v683, %v1443
        %v1445 = vpop.f32.mrf.mxu0
        %1446 = vmatprep.mubr.f32.mxu0 0.0
        %1447 = vmatmul.mubr.f32.gmra.mxu0 %v1348
        %v1448 = vpop.f32.mrf.mxu0
        %v1449 = vadd.f32 %v687, %v1448
        %v1450 = vpop.f32.mrf.mxu0
        %1451 = vmatprep.mubr.f32.mxu0 0.0
        %1452 = vmatmul.mubr.f32.gmra.mxu0 %v1351
        %v1453 = vpop.f32.mrf.mxu0
        %v1454 = vadd.f32 %v691, %v1453
        %v1455 = vpop.f32.mrf.mxu0
        %1456 = vmatprep.mubr.f32.mxu0 0.0
        %1457 = vmatmul.mubr.f32.gmra.mxu0 %v1354
        %v1458 = vpop.f32.mrf.mxu0
        %v1459 = vadd.f32 %v695, %v1458
        %v1460 = vpop.f32.mrf.mxu0
        %1461 = vmatprep.mubr.f32.mxu0 0.0
        %1462 = vmatmul.mubr.f32.gmra.mxu0 %v1357
        %v1463 = vpop.f32.mrf.mxu0
        %v1464 = vadd.f32 %v699, %v1463
        %v1465 = vpop.f32.mrf.mxu0
        %1466 = vdwg.mxu0
        %v1468 = vsel %vm805, %v485, 0
        %v1471 = vsel %vm805, %v486, 0
        %v1474 = vsel %vm805, %v487, 0
        %v1477 = vsel %vm805, %v488, 0
        %v1480 = vsel %vm805, %v489, 0
        %v1483 = vsel %vm805, %v490, 0
        %v1486 = vsel %vm805, %v491, 0
        %v1489 = vsel %vm805, %v492, 0
        %v1492 = vsel %vm830, %v520, 0
        %1494 = vmatprep.subr.mxu0 0.0
        %1495 = vmatpush1.msra.mxu0 0.0
        %1496 = vmatprep.subr.mxu0 0.0
        %1497 = vmatpush1.msra.mxu0 0.0
        %1498 = vmatprep.subr.mxu0 0.0
        %1499 = vmatpush1.msra.mxu0 0.0
        %1500 = vmatprep.subr.mxu0 0.0
        %1501 = vmatpush1.msra.mxu0 0.0
        %1502 = vmatprep.subr.mxu0 0.0
        %1503 = vmatpush1.msra.mxu0 0.0
        %1504 = vmatprep.subr.mxu0 0.0
        %1505 = vmatpush1.msra.mxu0 0.0
        %1506 = vmatprep.subr.mxu0 0.0
        %1507 = vmatpush1.msra.mxu0 0.0
        %1508 = vmatprep.subr.mxu0 0.0
        %1509 = vmatpush1.msra.mxu0 0.0
        %1510 = vmatprep.subr.mxu0 0.0
        %1511 = vmatpush1.msra.mxu0 0.0
        %1512 = vmatprep.subr.mxu0 0.0
        %1513 = vmatpush1.msra.mxu0 0.0
        %1514 = vmatprep.subr.mxu0 0.0
        %1515 = vmatpush1.msra.mxu0 0.0
        %1516 = vmatprep.subr.mxu0 0.0
        %1517 = vmatpush1.msra.mxu0 0.0
        %1518 = vmatprep.subr.mxu0 0.0
        %1519 = vmatpush1.msra.mxu0 0.0
        %1520 = vmatprep.subr.mxu0 0.0
        %1521 = vmatpush1.msra.mxu0 0.0
        %1522 = vmatprep.subr.mxu0 0.0
        %1523 = vmatpush1.msra.mxu0 %v1492
        %1524 = vmatprep.subr.mxu0 0.0
        %1525 = vmatpush1.msra.mxu0 %v519
        %1526 = vmatprep.subr.mxu0 0.0
        %1527 = vmatpush2.msra.mxu0 0.0
        %1528 = vmatprep.subr.mxu0 0.0
        %1529 = vmatpush2.msra.mxu0 0.0
        %1530 = vmatprep.subr.mxu0 0.0
        %1531 = vmatpush2.msra.mxu0 0.0
        %1532 = vmatprep.subr.mxu0 0.0
        %1533 = vmatpush2.msra.mxu0 0.0
        %1534 = vmatprep.subr.mxu0 0.0
        %1535 = vmatpush2.msra.mxu0 0.0
        %1536 = vmatprep.subr.mxu0 0.0
        %1537 = vmatpush2.msra.mxu0 0.0
        %1538 = vmatprep.subr.mxu0 0.0
        %1539 = vmatpush2.msra.mxu0 0.0
        %1540 = vmatprep.subr.mxu0 0.0
        %1541 = vmatpush2.msra.mxu0 0.0
        %1542 = vmatprep.subr.mxu0 0.0
        %1543 = vmatpush2.msra.mxu0 0.0
        %1544 = vmatprep.subr.mxu0 0.0
        %1545 = vmatpush2.msra.mxu0 0.0
        %1546 = vmatprep.subr.mxu0 0.0
        %1547 = vmatpush2.msra.mxu0 0.0
        %1548 = vmatprep.subr.mxu0 0.0
        %1549 = vmatpush2.msra.mxu0 0.0
        %1550 = vmatprep.subr.mxu0 0.0
        %1551 = vmatpush2.msra.mxu0 0.0
        %1552 = vmatprep.subr.mxu0 0.0
        %1553 = vmatpush2.msra.mxu0 0.0
        %1554 = vmatprep.subr.mxu0 0.0
        %1555 = vmatpush2.msra.mxu0 0.0
        %1556 = vmatprep.subr.mxu0 0.0
        %1557 = vmatpush2.msra.mxu0 0.0
        %1558 = vmatprep.mubr.f32.mxu0 0.0
        %1559 = vmatmul.mubr.f32.gmra.mxu0 %v1468
        %v1560 = vpop.f32.mrf.mxu0
        %v1561 = vadd.f32 %v706, %v1560
        %v1562 = vpop.f32.mrf.mxu0
        %1563 = vmatprep.mubr.f32.mxu0 0.0
        %1564 = vmatmul.mubr.f32.gmra.mxu0 %v1471
        %v1565 = vpop.f32.mrf.mxu0
        %v1566 = vadd.f32 %v710, %v1565
        %v1567 = vpop.f32.mrf.mxu0
        %1568 = vmatprep.mubr.f32.mxu0 0.0
        %1569 = vmatmul.mubr.f32.gmra.mxu0 %v1474
        %v1570 = vpop.f32.mrf.mxu0
        %v1571 = vadd.f32 %v714, %v1570
        %v1572 = vpop.f32.mrf.mxu0
        %1573 = vmatprep.mubr.f32.mxu0 0.0
        %1574 = vmatmul.mubr.f32.gmra.mxu0 %v1477
        %v1575 = vpop.f32.mrf.mxu0
        %v1576 = vadd.f32 %v718, %v1575
        %v1577 = vpop.f32.mrf.mxu0
        %1578 = vmatprep.mubr.f32.mxu0 0.0
        %1579 = vmatmul.mubr.f32.gmra.mxu0 %v1480
        %v1580 = vpop.f32.mrf.mxu0
        %v1581 = vadd.f32 %v722, %v1580
        %v1582 = vpop.f32.mrf.mxu0
        %1583 = vmatprep.mubr.f32.mxu0 0.0
        %1584 = vmatmul.mubr.f32.gmra.mxu0 %v1483
        %v1585 = vpop.f32.mrf.mxu0
        %v1586 = vadd.f32 %v726, %v1585
        %v1587 = vpop.f32.mrf.mxu0
        %1588 = vmatprep.mubr.f32.mxu0 0.0
        %1589 = vmatmul.mubr.f32.gmra.mxu0 %v1486
        %v1590 = vpop.f32.mrf.mxu0
        %v1591 = vadd.f32 %v730, %v1590
        %v1592 = vpop.f32.mrf.mxu0
        %1593 = vmatprep.mubr.f32.mxu0 0.0
        %1594 = vmatmul.mubr.f32.gmra.mxu0 %v1489
        %v1595 = vpop.f32.mrf.mxu0
        %v1596 = vadd.f32 %v734, %v1595
        %v1597 = vpop.f32.mrf.mxu0
        %1598 = vdwg.mxu0
        %v1600 = vsel %vm805, %v493, 0
        %v1603 = vsel %vm805, %v494, 0
        %v1606 = vsel %vm805, %v495, 0
        %v1609 = vsel %vm805, %v496, 0
        %v1612 = vsel %vm805, %v497, 0
        %v1615 = vsel %vm805, %v498, 0
        %v1618 = vsel %vm805, %v499, 0
        %v1621 = vsel %vm805, %v500, 0
        %v1624 = vsel %vm830, %v522, 0
        %1626 = vmatprep.subr.mxu0 0.0
        %1627 = vmatpush1.msra.mxu0 0.0
        %1628 = vmatprep.subr.mxu0 0.0
        %1629 = vmatpush1.msra.mxu0 0.0
        %1630 = vmatprep.subr.mxu0 0.0
        %1631 = vmatpush1.msra.mxu0 0.0
        %1632 = vmatprep.subr.mxu0 0.0
        %1633 = vmatpush1.msra.mxu0 0.0
        %1634 = vmatprep.subr.mxu0 0.0
        %1635 = vmatpush1.msra.mxu0 0.0
        %1636 = vmatprep.subr.mxu0 0.0
        %1637 = vmatpush1.msra.mxu0 0.0
        %1638 = vmatprep.subr.mxu0 0.0
        %1639 = vmatpush1.msra.mxu0 0.0
        %1640 = vmatprep.subr.mxu0 0.0
        %1641 = vmatpush1.msra.mxu0 0.0
        %1642 = vmatprep.subr.mxu0 0.0
        %1643 = vmatpush1.msra.mxu0 0.0
        %1644 = vmatprep.subr.mxu0 0.0
        %1645 = vmatpush1.msra.mxu0 0.0
        %1646 = vmatprep.subr.mxu0 0.0
        %1647 = vmatpush1.msra.mxu0 0.0
        %1648 = vmatprep.subr.mxu0 0.0
        %1649 = vmatpush1.msra.mxu0 0.0
        %1650 = vmatprep.subr.mxu0 0.0
        %1651 = vmatpush1.msra.mxu0 0.0
        %1652 = vmatprep.subr.mxu0 0.0
        %1653 = vmatpush1.msra.mxu0 0.0
        %1654 = vmatprep.subr.mxu0 0.0
        %1655 = vmatpush1.msra.mxu0 %v1624
        %1656 = vmatprep.subr.mxu0 0.0
        %1657 = vmatpush1.msra.mxu0 %v521
        %1658 = vmatprep.subr.mxu0 0.0
        %1659 = vmatpush2.msra.mxu0 0.0
        %1660 = vmatprep.subr.mxu0 0.0
        %1661 = vmatpush2.msra.mxu0 0.0
        %1662 = vmatprep.subr.mxu0 0.0
        %1663 = vmatpush2.msra.mxu0 0.0
        %1664 = vmatprep.subr.mxu0 0.0
        %1665 = vmatpush2.msra.mxu0 0.0
        %1666 = vmatprep.subr.mxu0 0.0
        %1667 = vmatpush2.msra.mxu0 0.0
        %1668 = vmatprep.subr.mxu0 0.0
        %1669 = vmatpush2.msra.mxu0 0.0
        %1670 = vmatprep.subr.mxu0 0.0
        %1671 = vmatpush2.msra.mxu0 0.0
        %1672 = vmatprep.subr.mxu0 0.0
        %1673 = vmatpush2.msra.mxu0 0.0
        %1674 = vmatprep.subr.mxu0 0.0
        %1675 = vmatpush2.msra.mxu0 0.0
        %1676 = vmatprep.subr.mxu0 0.0
        %1677 = vmatpush2.msra.mxu0 0.0
        %1678 = vmatprep.subr.mxu0 0.0
        %1679 = vmatpush2.msra.mxu0 0.0
        %1680 = vmatprep.subr.mxu0 0.0
        %1681 = vmatpush2.msra.mxu0 0.0
        %1682 = vmatprep.subr.mxu0 0.0
        %1683 = vmatpush2.msra.mxu0 0.0
        %1684 = vmatprep.subr.mxu0 0.0
        %1685 = vmatpush2.msra.mxu0 0.0
        %1686 = vmatprep.subr.mxu0 0.0
        %1687 = vmatpush2.msra.mxu0 0.0
        %1688 = vmatprep.subr.mxu0 0.0
        %1689 = vmatpush2.msra.mxu0 0.0
        %1690 = vmatprep.mubr.f32.mxu0 0.0
        %1691 = vmatmul.mubr.f32.gmra.mxu0 %v1600
        %v1692 = vpop.f32.mrf.mxu0
        %v1693 = vadd.f32 %v741, %v1692
        %v1694 = vpop.f32.mrf.mxu0
        %1695 = vmatprep.mubr.f32.mxu0 0.0
        %1696 = vmatmul.mubr.f32.gmra.mxu0 %v1603
        %v1697 = vpop.f32.mrf.mxu0
        %v1698 = vadd.f32 %v745, %v1697
        %v1699 = vpop.f32.mrf.mxu0
        %1700 = vmatprep.mubr.f32.mxu0 0.0
        %1701 = vmatmul.mubr.f32.gmra.mxu0 %v1606
        %v1702 = vpop.f32.mrf.mxu0
        %v1703 = vadd.f32 %v749, %v1702
        %v1704 = vpop.f32.mrf.mxu0
        %1705 = vmatprep.mubr.f32.mxu0 0.0
        %1706 = vmatmul.mubr.f32.gmra.mxu0 %v1609
        %v1707 = vpop.f32.mrf.mxu0
        %v1708 = vadd.f32 %v753, %v1707
        %v1709 = vpop.f32.mrf.mxu0
        %1710 = vmatprep.mubr.f32.mxu0 0.0
        %1711 = vmatmul.mubr.f32.gmra.mxu0 %v1612
        %v1712 = vpop.f32.mrf.mxu0
        %v1713 = vadd.f32 %v757, %v1712
        %v1714 = vpop.f32.mrf.mxu0
        %1715 = vmatprep.mubr.f32.mxu0 0.0
        %1716 = vmatmul.mubr.f32.gmra.mxu0 %v1615
        %v1717 = vpop.f32.mrf.mxu0
        %v1718 = vadd.f32 %v761, %v1717
        %v1719 = vpop.f32.mrf.mxu0
        %1720 = vmatprep.mubr.f32.mxu0 0.0
        %1721 = vmatmul.mubr.f32.gmra.mxu0 %v1618
        %v1722 = vpop.f32.mrf.mxu0
        %v1723 = vadd.f32 %v765, %v1722
        %v1724 = vpop.f32.mrf.mxu0
        %1725 = vmatprep.mubr.f32.mxu0 0.0
        %1726 = vmatmul.mubr.f32.gmra.mxu0 %v1621
        %v1727 = vpop.f32.mrf.mxu0
        %v1728 = vadd.f32 %v769, %v1727
        %v1729 = vpop.f32.mrf.mxu0
        %1730 = vdwg.mxu0
        %v1732 = vsel %vm805, %v501, 0
        %v1735 = vsel %vm805, %v502, 0
        %v1738 = vsel %vm805, %v503, 0
        %v1741 = vsel %vm805, %v504, 0
        %v1744 = vsel %vm805, %v505, 0
        %v1747 = vsel %vm805, %v506, 0
        %v1750 = vsel %vm805, %v507, 0
        %v1753 = vsel %vm805, %v508, 0
        %v1756 = vsel %vm830, %v524, 0
        %1758 = vmatprep.subr.mxu0 0.0
        %1759 = vmatpush1.msra.mxu0 0.0
        %1760 = vmatprep.subr.mxu0 0.0
        %1761 = vmatpush1.msra.mxu0 0.0
        %1762 = vmatprep.subr.mxu0 0.0
        %1763 = vmatpush1.msra.mxu0 0.0
        %1764 = vmatprep.subr.mxu0 0.0
        %1765 = vmatpush1.msra.mxu0 0.0
        %1766 = vmatprep.subr.mxu0 0.0
        %1767 = vmatpush1.msra.mxu0 0.0
        %1768 = vmatprep.subr.mxu0 0.0
        %1769 = vmatpush1.msra.mxu0 0.0
        %1770 = vmatprep.subr.mxu0 0.0
        %1771 = vmatpush1.msra.mxu0 0.0
        %1772 = vmatprep.subr.mxu0 0.0
        %1773 = vmatpush1.msra.mxu0 0.0
        %1774 = vmatprep.subr.mxu0 0.0
        %1775 = vmatpush1.msra.mxu0 0.0
        %1776 = vmatprep.subr.mxu0 0.0
        %1777 = vmatpush1.msra.mxu0 0.0
        %1778 = vmatprep.subr.mxu0 0.0
        %1779 = vmatpush1.msra.mxu0 0.0
        %1780 = vmatprep.subr.mxu0 0.0
        %1781 = vmatpush1.msra.mxu0 0.0
        %1782 = vmatprep.subr.mxu0 0.0
        %1783 = vmatpush1.msra.mxu0 0.0
        %1784 = vmatprep.subr.mxu0 0.0
        %1785 = vmatpush1.msra.mxu0 0.0
        %1786 = vmatprep.subr.mxu0 0.0
        %1787 = vmatpush1.msra.mxu0 %v1756
        %1788 = vmatprep.subr.mxu0 0.0
        %1789 = vmatpush1.msra.mxu0 %v523
        %1790 = vmatprep.subr.mxu0 0.0
        %1791 = vmatpush2.msra.mxu0 0.0
        %1792 = vmatprep.subr.mxu0 0.0
        %1793 = vmatpush2.msra.mxu0 0.0
        %1794 = vmatprep.subr.mxu0 0.0
        %1795 = vmatpush2.msra.mxu0 0.0
        %1796 = vmatprep.subr.mxu0 0.0
        %1797 = vmatpush2.msra.mxu0 0.0
        %1798 = vmatprep.subr.mxu0 0.0
        %1799 = vmatpush2.msra.mxu0 0.0
        %1800 = vmatprep.subr.mxu0 0.0
        %1801 = vmatpush2.msra.mxu0 0.0
        %1802 = vmatprep.subr.mxu0 0.0
        %1803 = vmatpush2.msra.mxu0 0.0
        %1804 = vmatprep.subr.mxu0 0.0
        %1805 = vmatpush2.msra.mxu0 0.0
        %1806 = vmatprep.subr.mxu0 0.0
        %1807 = vmatpush2.msra.mxu0 0.0
        %1808 = vmatprep.subr.mxu0 0.0
        %1809 = vmatpush2.msra.mxu0 0.0
        %1810 = vmatprep.subr.mxu0 0.0
        %1811 = vmatpush2.msra.mxu0 0.0
        %1812 = vmatprep.subr.mxu0 0.0
        %1813 = vmatpush2.msra.mxu0 0.0
        %1814 = vmatprep.subr.mxu0 0.0
        %1815 = vmatpush2.msra.mxu0 0.0
        %1816 = vmatprep.subr.mxu0 0.0
        %1817 = vmatpush2.msra.mxu0 0.0
        %1818 = vmatprep.subr.mxu0 0.0
        %1819 = vmatpush2.msra.mxu0 0.0
        %1820 = vmatprep.subr.mxu0 0.0
        %1821 = vmatpush2.msra.mxu0 0.0
        %1822 = vmatprep.mubr.f32.mxu0 0.0
        %1823 = vmatmul.mubr.f32.gmra.mxu0 %v1732
        %v1824 = vpop.f32.mrf.mxu0
        %v1825 = vadd.f32 %v776, %v1824
        %v1826 = vpop.f32.mrf.mxu0
        %1827 = vmatprep.mubr.f32.mxu0 0.0
        %1828 = vmatmul.mubr.f32.gmra.mxu0 %v1735
        %v1829 = vpop.f32.mrf.mxu0
        %v1830 = vadd.f32 %v780, %v1829
        %v1831 = vpop.f32.mrf.mxu0
        %1832 = vmatprep.mubr.f32.mxu0 0.0
        %1833 = vmatmul.mubr.f32.gmra.mxu0 %v1738
        %v1834 = vpop.f32.mrf.mxu0
        %v1835 = vadd.f32 %v784, %v1834
        %v1836 = vpop.f32.mrf.mxu0
        %1837 = vmatprep.mubr.f32.mxu0 0.0
        %1838 = vmatmul.mubr.f32.gmra.mxu0 %v1741
        %v1839 = vpop.f32.mrf.mxu0
        %v1840 = vadd.f32 %v788, %v1839
        %v1841 = vpop.f32.mrf.mxu0
        %1842 = vmatprep.mubr.f32.mxu0 0.0
        %1843 = vmatmul.mubr.f32.gmra.mxu0 %v1744
        %v1844 = vpop.f32.mrf.mxu0
        %v1845 = vadd.f32 %v792, %v1844
        %v1846 = vpop.f32.mrf.mxu0
        %1847 = vmatprep.mubr.f32.mxu0 0.0
        %1848 = vmatmul.mubr.f32.gmra.mxu0 %v1747
        %v1849 = vpop.f32.mrf.mxu0
        %v1850 = vadd.f32 %v796, %v1849
        %v1851 = vpop.f32.mrf.mxu0
        %1852 = vmatprep.mubr.f32.mxu0 0.0
        %1853 = vmatmul.mubr.f32.gmra.mxu0 %v1750
        %v1854 = vpop.f32.mrf.mxu0
        %v1855 = vadd.f32 %v800, %v1854
        %v1856 = vpop.f32.mrf.mxu0
        %1857 = vmatprep.mubr.f32.mxu0 0.0
        %1858 = vmatmul.mubr.f32.gmra.mxu0 %v1753
        %v1859 = vpop.f32.mrf.mxu0
        %v1860 = vadd.f32 %v804, %v1859
        %v1861 = vpop.f32.mrf.mxu0
        %1862 = vdwg.mxu0
        %v1863 = vmax.f32 %v901, 0.0
        %v1864 = vmax.f32 %v906, 0.0
        %v1865 = vmax.f32 %v911, 0.0
        %v1866 = vmax.f32 %v916, 0.0
        %v1867 = vmax.f32 %v921, 0.0
        %v1868 = vmax.f32 %v926, 0.0
        %v1869 = vmax.f32 %v931, 0.0
        %v1870 = vmax.f32 %v936, 0.0
        %v1871 = vmax.f32 %v1033, 0.0
        %v1872 = vmax.f32 %v1038, 0.0
        %v1873 = vmax.f32 %v1043, 0.0
        %v1874 = vmax.f32 %v1048, 0.0
        %v1875 = vmax.f32 %v1053, 0.0
        %v1876 = vmax.f32 %v1058, 0.0
        %v1877 = vmax.f32 %v1063, 0.0
        %v1878 = vmax.f32 %v1068, 0.0
        %v1879 = vmax.f32 %v1165, 0.0
        %v1880 = vmax.f32 %v1170, 0.0
        %v1881 = vmax.f32 %v1175, 0.0
        %v1882 = vmax.f32 %v1180, 0.0
        %v1883 = vmax.f32 %v1185, 0.0
        %v1884 = vmax.f32 %v1190, 0.0
        %v1885 = vmax.f32 %v1195, 0.0
        %v1886 = vmax.f32 %v1200, 0.0
        %v1887 = vmax.f32 %v1297, 0.0
        %v1888 = vmax.f32 %v1302, 0.0
        %v1889 = vmax.f32 %v1307, 0.0
        %v1890 = vmax.f32 %v1312, 0.0
        %v1891 = vmax.f32 %v1317, 0.0
        %v1892 = vmax.f32 %v1322, 0.0
        %v1893 = vmax.f32 %v1327, 0.0
        %v1894 = vmax.f32 %v1332, 0.0
        %v1895 = vmax.f32 %v1429, 0.0
        %v1896 = vmax.f32 %v1434, 0.0
        %v1897 = vmax.f32 %v1439, 0.0
        %v1898 = vmax.f32 %v1444, 0.0
        %v1899 = vmax.f32 %v1449, 0.0
        %v1900 = vmax.f32 %v1454, 0.0
        %v1901 = vmax.f32 %v1459, 0.0
        %v1902 = vmax.f32 %v1464, 0.0
        %v1903 = vmax.f32 %v1561, 0.0
        %v1904 = vmax.f32 %v1566, 0.0
        %v1905 = vmax.f32 %v1571, 0.0
        %v1906 = vmax.f32 %v1576, 0.0
        %v1907 = vmax.f32 %v1581, 0.0
        %v1908 = vmax.f32 %v1586, 0.0
        %v1909 = vmax.f32 %v1591, 0.0
        %v1910 = vmax.f32 %v1596, 0.0
        %v1911 = vmax.f32 %v1693, 0.0
        %v1912 = vmax.f32 %v1698, 0.0
        %v1913 = vmax.f32 %v1703, 0.0
        %v1914 = vmax.f32 %v1708, 0.0
        %v1915 = vmax.f32 %v1713, 0.0
        %v1916 = vmax.f32 %v1718, 0.0
        %v1917 = vmax.f32 %v1723, 0.0
        %v1918 = vmax.f32 %v1728, 0.0
        %v1919 = vmax.f32 %v1825, 0.0
        %v1920 = vmax.f32 %v1830, 0.0
        %v1921 = vmax.f32 %v1835, 0.0
        %v1922 = vmax.f32 %v1840, 0.0
        %v1923 = vmax.f32 %v1845, 0.0
        %v1924 = vmax.f32 %v1850, 0.0
        %v1925 = vmax.f32 %v1855, 0.0
        %v1926 = vmax.f32 %v1860, 0.0
        %v1927 = vld [vmem:[%s5] sm:$0xff]
        %v1928 = vld [vmem:[%s5 + $0x8] sm:$0xff]
        %v1929 = vld [vmem:[%s5 + $0x10] sm:$0xff]
        %v1930 = vld [vmem:[%s5 + $0x18] sm:$0xff]
        %v1931 = vld [vmem:[%s5 + $0x20] sm:$0xff]
        %v1932 = vld [vmem:[%s5 + $0x28] sm:$0xff]
        %v1933 = vld [vmem:[%s5 + $0x30] sm:$0xff]
        %v1934 = vld [vmem:[%s5 + $0x38] sm:$0xff]
        %v1935 = vld [vmem:[%s5 + $0x40] sm:$0xff]
        %v1936 = vld [vmem:[%s5 + $0x48] sm:$0xff]
        %v1937 = vld [vmem:[%s5 + $0x50] sm:$0xff]
        %v1938 = vld [vmem:[%s5 + $0x58] sm:$0xff]
        %v1939 = vld [vmem:[%s5 + $0x60] sm:$0xff]
        %v1940 = vld [vmem:[%s5 + $0x68] sm:$0xff]
        %v1941 = vld [vmem:[%s5 + $0x70] sm:$0xff]
        %v1942 = vld [vmem:[%s5 + $0x78] sm:$0xff]
        %v1943 = vld [vmem:[%s5 + $0x80] sm:$0xff]
        %v1944 = vld [vmem:[%s5 + $0x88] sm:$0xff]
        %v1945 = vld [vmem:[%s5 + $0x90] sm:$0xff]
        %v1946 = vld [vmem:[%s5 + $0x98] sm:$0xff]
        %v1947 = vld [vmem:[%s5 + $0xa0] sm:$0xff]
        %v1948 = vld [vmem:[%s5 + $0xa8] sm:$0xff]
        %v1949 = vld [vmem:[%s5 + $0xb0] sm:$0xff]
        %v1950 = vld [vmem:[%s5 + $0xb8] sm:$0xff]
        %v1951 = vld [vmem:[%s5 + $0xc0] sm:$0xff]
        %v1952 = vld [vmem:[%s5 + $0xc8] sm:$0xff]
        %v1953 = vld [vmem:[%s5 + $0xd0] sm:$0xff]
        %v1954 = vld [vmem:[%s5 + $0xd8] sm:$0xff]
        %v1955 = vld [vmem:[%s5 + $0xe0] sm:$0xff]
        %v1956 = vld [vmem:[%s5 + $0xe8] sm:$0xff]
        %v1957 = vld [vmem:[%s5 + $0xf0] sm:$0xff]
        %v1958 = vld [vmem:[%s5 + $0xf8] sm:$0xff]
        %v1959 = vld [vmem:[%s5 + $0x100] sm:$0xff]
        %v1960 = vld [vmem:[%s5 + $0x108] sm:$0xff]
        %v1961 = vld [vmem:[%s5 + $0x110] sm:$0xff]
        %v1962 = vld [vmem:[%s5 + $0x118] sm:$0xff]
        %v1963 = vld [vmem:[%s5 + $0x120] sm:$0xff]
        %v1964 = vld [vmem:[%s5 + $0x128] sm:$0xff]
        %v1965 = vld [vmem:[%s5 + $0x130] sm:$0xff]
        %v1966 = vld [vmem:[%s5 + $0x138] sm:$0xff]
        %v1967 = vld [vmem:[%s5 + $0x140] sm:$0xff]
        %v1968 = vld [vmem:[%s5 + $0x148] sm:$0xff]
        %v1969 = vld [vmem:[%s5 + $0x150] sm:$0xff]
        %v1970 = vld [vmem:[%s5 + $0x158] sm:$0xff]
        %v1971 = vld [vmem:[%s5 + $0x160] sm:$0xff]
        %v1972 = vld [vmem:[%s5 + $0x168] sm:$0xff]
        %v1973 = vld [vmem:[%s5 + $0x170] sm:$0xff]
        %v1974 = vld [vmem:[%s5 + $0x178] sm:$0xff]
        %v1975 = vld [vmem:[%s5 + $0x180] sm:$0xff]
        %v1976 = vld [vmem:[%s5 + $0x188] sm:$0xff]
        %v1977 = vld [vmem:[%s5 + $0x190] sm:$0xff]
        %v1978 = vld [vmem:[%s5 + $0x198] sm:$0xff]
        %v1979 = vld [vmem:[%s5 + $0x1a0] sm:$0xff]
        %v1980 = vld [vmem:[%s5 + $0x1a8] sm:$0xff]
        %v1981 = vld [vmem:[%s5 + $0x1b0] sm:$0xff]
        %v1982 = vld [vmem:[%s5 + $0x1b8] sm:$0xff]
        %v1983 = vld [vmem:[%s5 + $0x1c0] sm:$0xff]
        %v1984 = vld [vmem:[%s5 + $0x1c8] sm:$0xff]
        %v1985 = vld [vmem:[%s5 + $0x1d0] sm:$0xff]
        %v1986 = vld [vmem:[%s5 + $0x1d8] sm:$0xff]
        %v1987 = vld [vmem:[%s5 + $0x1e0] sm:$0xff]
        %v1988 = vld [vmem:[%s5 + $0x1e8] sm:$0xff]
        %v1989 = vld [vmem:[%s5 + $0x1f0] sm:$0xff]
        %v1990 = vld [vmem:[%s5 + $0x1f8] sm:$0xff]
        %v1991 = vld [vmem:[%s6] sm:$0xff]
        %v1992 = vld [vmem:[%s6 + $0x8] sm:$0xff]
        %v1993 = vld [vmem:[%s6 + $0x10] sm:$0xff]
        %v1994 = vld [vmem:[%s6 + $0x18] sm:$0xff]
        %v1995 = vld [vmem:[%s6 + $0x20] sm:$0xff]
        %v1996 = vld [vmem:[%s6 + $0x28] sm:$0xff]
        %v1997 = vld [vmem:[%s6 + $0x30] sm:$0xff]
        %v1998 = vld [vmem:[%s6 + $0x38] sm:$0xff]
        %2000 = vset.pattern.permute.xlu0 0
        %2001 = vperm.xlu0 %2000, %v1991
        %v2002 = vpop.permute.xlu0 %2001
        %2005 = vset.pattern.permute.xlu0 0
        %2006 = vperm.xlu0 %2005, %v1992
        %v2007 = vpop.permute.xlu0 %2006
        %2010 = vset.pattern.permute.xlu0 0
        %2011 = vperm.xlu0 %2010, %v1993
        %v2012 = vpop.permute.xlu0 %2011
        %2015 = vset.pattern.permute.xlu0 0
        %2016 = vperm.xlu0 %2015, %v1994
        %v2017 = vpop.permute.xlu0 %2016
        %2020 = vset.pattern.permute.xlu0 0
        %2021 = vperm.xlu0 %2020, %v1995
        %v2022 = vpop.permute.xlu0 %2021
        %2025 = vset.pattern.permute.xlu0 0
        %2026 = vperm.xlu0 %2025, %v1996
        %v2027 = vpop.permute.xlu0 %2026
        %2030 = vset.pattern.permute.xlu0 0
        %2031 = vperm.xlu0 %2030, %v1997
        %v2032 = vpop.permute.xlu0 %2031
        %2035 = vset.pattern.permute.xlu0 0
        %2036 = vperm.xlu0 %2035, %v1998
        %v2037 = vpop.permute.xlu0 %2036
        %v2040 = vsel %vm371, %v1927, 0
        %v2043 = vsel %vm371, %v1928, 0
        %v2046 = vsel %vm371, %v1929, 0
        %v2049 = vsel %vm371, %v1930, 0
        %v2052 = vsel %vm371, %v1931, 0
        %v2055 = vsel %vm371, %v1932, 0
        %v2058 = vsel %vm371, %v1933, 0
        %v2061 = vsel %vm371, %v1934, 0
        %2063 = vmatprep.subr.mxu0 0.0
        %2064 = vmatpush1.msra.mxu0 0.0
        %2065 = vmatprep.subr.mxu0 0.0
        %2066 = vmatpush1.msra.mxu0 0.0
        %2067 = vmatprep.subr.mxu0 0.0
        %2068 = vmatpush1.msra.mxu0 0.0
        %2069 = vmatprep.subr.mxu0 0.0
        %2070 = vmatpush1.msra.mxu0 0.0
        %2071 = vmatprep.subr.mxu0 0.0
        %2072 = vmatpush1.msra.mxu0 0.0
        %2073 = vmatprep.subr.mxu0 0.0
        %2074 = vmatpush1.msra.mxu0 0.0
        %2075 = vmatprep.subr.mxu0 0.0
        %2076 = vmatpush1.msra.mxu0 0.0
        %2077 = vmatprep.subr.mxu0 0.0
        %2078 = vmatpush1.msra.mxu0 0.0
        %2079 = vmatprep.subr.mxu0 0.0
        %2080 = vmatpush1.msra.mxu0 %v1870
        %2081 = vmatprep.subr.mxu0 0.0
        %2082 = vmatpush1.msra.mxu0 %v1869
        %2083 = vmatprep.subr.mxu0 0.0
        %2084 = vmatpush1.msra.mxu0 %v1868
        %2085 = vmatprep.subr.mxu0 0.0
        %2086 = vmatpush1.msra.mxu0 %v1867
        %2087 = vmatprep.subr.mxu0 0.0
        %2088 = vmatpush1.msra.mxu0 %v1866
        %2089 = vmatprep.subr.mxu0 0.0
        %2090 = vmatpush1.msra.mxu0 %v1865
        %2091 = vmatprep.subr.mxu0 0.0
        %2092 = vmatpush1.msra.mxu0 %v1864
        %2093 = vmatprep.subr.mxu0 0.0
        %2094 = vmatpush1.msra.mxu0 %v1863
        %2095 = vmatprep.subr.mxu0 0.0
        %2096 = vmatpush2.msra.mxu0 0.0
        %2097 = vmatprep.subr.mxu0 0.0
        %2098 = vmatpush2.msra.mxu0 0.0
        %2099 = vmatprep.subr.mxu0 0.0
        %2100 = vmatpush2.msra.mxu0 0.0
        %2101 = vmatprep.subr.mxu0 0.0
        %2102 = vmatpush2.msra.mxu0 0.0
        %2103 = vmatprep.subr.mxu0 0.0
        %2104 = vmatpush2.msra.mxu0 0.0
        %2105 = vmatprep.subr.mxu0 0.0
        %2106 = vmatpush2.msra.mxu0 0.0
        %2107 = vmatprep.subr.mxu0 0.0
        %2108 = vmatpush2.msra.mxu0 0.0
        %2109 = vmatprep.subr.mxu0 0.0
        %2110 = vmatpush2.msra.mxu0 0.0
        %2111 = vmatprep.subr.mxu0 0.0
        %2112 = vmatpush2.msra.mxu0 0.0
        %2113 = vmatprep.subr.mxu0 0.0
        %2114 = vmatpush2.msra.mxu0 0.0
        %2115 = vmatprep.subr.mxu0 0.0
        %2116 = vmatpush2.msra.mxu0 0.0
        %2117 = vmatprep.subr.mxu0 0.0
        %2118 = vmatpush2.msra.mxu0 0.0
        %2119 = vmatprep.subr.mxu0 0.0
        %2120 = vmatpush2.msra.mxu0 0.0
        %2121 = vmatprep.subr.mxu0 0.0
        %2122 = vmatpush2.msra.mxu0 0.0
        %2123 = vmatprep.subr.mxu0 0.0
        %2124 = vmatpush2.msra.mxu0 0.0
        %2125 = vmatprep.subr.mxu0 0.0
        %2126 = vmatpush2.msra.mxu0 0.0
        %2127 = vmatprep.mubr.f32.mxu0 0.0
        %2128 = vmatmul.mubr.f32.gmra.mxu0 %v2040
        %v2129 = vpop.f32.mrf.mxu0
        %v2130 = vadd.f32 %v2002, %v2129
        %v2131 = vpop.f32.mrf.mxu0
        %2132 = vmatprep.mubr.f32.mxu0 0.0
        %2133 = vmatmul.mubr.f32.gmra.mxu0 %v2043
        %v2134 = vpop.f32.mrf.mxu0
        %v2135 = vadd.f32 %v2007, %v2134
        %v2136 = vpop.f32.mrf.mxu0
        %2137 = vmatprep.mubr.f32.mxu0 0.0
        %2138 = vmatmul.mubr.f32.gmra.mxu0 %v2046
        %v2139 = vpop.f32.mrf.mxu0
        %v2140 = vadd.f32 %v2012, %v2139
        %v2141 = vpop.f32.mrf.mxu0
        %2142 = vmatprep.mubr.f32.mxu0 0.0
        %2143 = vmatmul.mubr.f32.gmra.mxu0 %v2049
        %v2144 = vpop.f32.mrf.mxu0
        %v2145 = vadd.f32 %v2017, %v2144
        %v2146 = vpop.f32.mrf.mxu0
        %2147 = vmatprep.mubr.f32.mxu0 0.0
        %2148 = vmatmul.mubr.f32.gmra.mxu0 %v2052
        %v2149 = vpop.f32.mrf.mxu0
        %v2150 = vadd.f32 %v2022, %v2149
        %v2151 = vpop.f32.mrf.mxu0
        %2152 = vmatprep.mubr.f32.mxu0 0.0
        %2153 = vmatmul.mubr.f32.gmra.mxu0 %v2055
        %v2154 = vpop.f32.mrf.mxu0
        %v2155 = vadd.f32 %v2027, %v2154
        %v2156 = vpop.f32.mrf.mxu0
        %2157 = vmatprep.mubr.f32.mxu0 0.0
        %2158 = vmatmul.mubr.f32.gmra.mxu0 %v2058
        %v2159 = vpop.f32.mrf.mxu0
        %v2160 = vadd.f32 %v2032, %v2159
        %v2161 = vpop.f32.mrf.mxu0
        %2162 = vmatprep.mubr.f32.mxu0 0.0
        %2163 = vmatmul.mubr.f32.gmra.mxu0 %v2061
        %v2164 = vpop.f32.mrf.mxu0
        %v2165 = vadd.f32 %v2037, %v2164
        %v2166 = vpop.f32.mrf.mxu0
        %2167 = vdwg.mxu0
        %v2169 = vsel %vm371, %v1935, 0
        %v2172 = vsel %vm371, %v1936, 0
        %v2175 = vsel %vm371, %v1937, 0
        %v2178 = vsel %vm371, %v1938, 0
        %v2181 = vsel %vm371, %v1939, 0
        %v2184 = vsel %vm371, %v1940, 0
        %v2187 = vsel %vm371, %v1941, 0
        %v2190 = vsel %vm371, %v1942, 0
        %2192 = vmatprep.subr.mxu0 0.0
        %2193 = vmatpush1.msra.mxu0 0.0
        %2194 = vmatprep.subr.mxu0 0.0
        %2195 = vmatpush1.msra.mxu0 0.0
        %2196 = vmatprep.subr.mxu0 0.0
        %2197 = vmatpush1.msra.mxu0 0.0
        %2198 = vmatprep.subr.mxu0 0.0
        %2199 = vmatpush1.msra.mxu0 0.0
        %2200 = vmatprep.subr.mxu0 0.0
        %2201 = vmatpush1.msra.mxu0 0.0
        %2202 = vmatprep.subr.mxu0 0.0
        %2203 = vmatpush1.msra.mxu0 0.0
        %2204 = vmatprep.subr.mxu0 0.0
        %2205 = vmatpush1.msra.mxu0 0.0
        %2206 = vmatprep.subr.mxu0 0.0
        %2207 = vmatpush1.msra.mxu0 0.0
        %2208 = vmatprep.subr.mxu0 0.0
        %2209 = vmatpush1.msra.mxu0 %v1878
        %2210 = vmatprep.subr.mxu0 0.0
        %2211 = vmatpush1.msra.mxu0 %v1877
        %2212 = vmatprep.subr.mxu0 0.0
        %2213 = vmatpush1.msra.mxu0 %v1876
        %2214 = vmatprep.subr.mxu0 0.0
        %2215 = vmatpush1.msra.mxu0 %v1875
        %2216 = vmatprep.subr.mxu0 0.0
        %2217 = vmatpush1.msra.mxu0 %v1874
        %2218 = vmatprep.subr.mxu0 0.0
        %2219 = vmatpush1.msra.mxu0 %v1873
        %2220 = vmatprep.subr.mxu0 0.0
        %2221 = vmatpush1.msra.mxu0 %v1872
        %2222 = vmatprep.subr.mxu0 0.0
        %2223 = vmatpush1.msra.mxu0 %v1871
        %2224 = vmatprep.subr.mxu0 0.0
        %2225 = vmatpush2.msra.mxu0 0.0
        %2226 = vmatprep.subr.mxu0 0.0
        %2227 = vmatpush2.msra.mxu0 0.0
        %2228 = vmatprep.subr.mxu0 0.0
        %2229 = vmatpush2.msra.mxu0 0.0
        %2230 = vmatprep.subr.mxu0 0.0
        %2231 = vmatpush2.msra.mxu0 0.0
        %2232 = vmatprep.subr.mxu0 0.0
        %2233 = vmatpush2.msra.mxu0 0.0
        %2234 = vmatprep.subr.mxu0 0.0
        %2235 = vmatpush2.msra.mxu0 0.0
        %2236 = vmatprep.subr.mxu0 0.0
        %2237 = vmatpush2.msra.mxu0 0.0
        %2238 = vmatprep.subr.mxu0 0.0
        %2239 = vmatpush2.msra.mxu0 0.0
        %2240 = vmatprep.subr.mxu0 0.0
        %2241 = vmatpush2.msra.mxu0 0.0
        %2242 = vmatprep.subr.mxu0 0.0
        %2243 = vmatpush2.msra.mxu0 0.0
        %2244 = vmatprep.subr.mxu0 0.0
        %2245 = vmatpush2.msra.mxu0 0.0
        %2246 = vmatprep.subr.mxu0 0.0
        %2247 = vmatpush2.msra.mxu0 0.0
        %2248 = vmatprep.subr.mxu0 0.0
        %2249 = vmatpush2.msra.mxu0 0.0
        %2250 = vmatprep.subr.mxu0 0.0
        %2251 = vmatpush2.msra.mxu0 0.0
        %2252 = vmatprep.subr.mxu0 0.0
        %2253 = vmatpush2.msra.mxu0 0.0
        %2254 = vmatprep.subr.mxu0 0.0
        %2255 = vmatpush2.msra.mxu0 0.0
        %2256 = vmatprep.mubr.f32.mxu0 0.0
        %2257 = vmatmul.mubr.f32.gmra.mxu0 %v2169
        %v2258 = vpop.f32.mrf.mxu0
        %v2259 = vadd.f32 %v2002, %v2258
        %v2260 = vpop.f32.mrf.mxu0
        %2261 = vmatprep.mubr.f32.mxu0 0.0
        %2262 = vmatmul.mubr.f32.gmra.mxu0 %v2172
        %v2263 = vpop.f32.mrf.mxu0
        %v2264 = vadd.f32 %v2007, %v2263
        %v2265 = vpop.f32.mrf.mxu0
        %2266 = vmatprep.mubr.f32.mxu0 0.0
        %2267 = vmatmul.mubr.f32.gmra.mxu0 %v2175
        %v2268 = vpop.f32.mrf.mxu0
        %v2269 = vadd.f32 %v2012, %v2268
        %v2270 = vpop.f32.mrf.mxu0
        %2271 = vmatprep.mubr.f32.mxu0 0.0
        %2272 = vmatmul.mubr.f32.gmra.mxu0 %v2178
        %v2273 = vpop.f32.mrf.mxu0
        %v2274 = vadd.f32 %v2017, %v2273
        %v2275 = vpop.f32.mrf.mxu0
        %2276 = vmatprep.mubr.f32.mxu0 0.0
        %2277 = vmatmul.mubr.f32.gmra.mxu0 %v2181
        %v2278 = vpop.f32.mrf.mxu0
        %v2279 = vadd.f32 %v2022, %v2278
        %v2280 = vpop.f32.mrf.mxu0
        %2281 = vmatprep.mubr.f32.mxu0 0.0
        %2282 = vmatmul.mubr.f32.gmra.mxu0 %v2184
        %v2283 = vpop.f32.mrf.mxu0
        %v2284 = vadd.f32 %v2027, %v2283
        %v2285 = vpop.f32.mrf.mxu0
        %2286 = vmatprep.mubr.f32.mxu0 0.0
        %2287 = vmatmul.mubr.f32.gmra.mxu0 %v2187
        %v2288 = vpop.f32.mrf.mxu0
        %v2289 = vadd.f32 %v2032, %v2288
        %v2290 = vpop.f32.mrf.mxu0
        %2291 = vmatprep.mubr.f32.mxu0 0.0
        %2292 = vmatmul.mubr.f32.gmra.mxu0 %v2190
        %v2293 = vpop.f32.mrf.mxu0
        %v2294 = vadd.f32 %v2037, %v2293
        %v2295 = vpop.f32.mrf.mxu0
        %2296 = vdwg.mxu0
        %v2298 = vsel %vm371, %v1943, 0
        %v2301 = vsel %vm371, %v1944, 0
        %v2304 = vsel %vm371, %v1945, 0
        %v2307 = vsel %vm371, %v1946, 0
        %v2310 = vsel %vm371, %v1947, 0
        %v2313 = vsel %vm371, %v1948, 0
        %v2316 = vsel %vm371, %v1949, 0
        %v2319 = vsel %vm371, %v1950, 0
        %2321 = vmatprep.subr.mxu0 0.0
        %2322 = vmatpush1.msra.mxu0 0.0
        %2323 = vmatprep.subr.mxu0 0.0
        %2324 = vmatpush1.msra.mxu0 0.0
        %2325 = vmatprep.subr.mxu0 0.0
        %2326 = vmatpush1.msra.mxu0 0.0
        %2327 = vmatprep.subr.mxu0 0.0
        %2328 = vmatpush1.msra.mxu0 0.0
        %2329 = vmatprep.subr.mxu0 0.0
        %2330 = vmatpush1.msra.mxu0 0.0
        %2331 = vmatprep.subr.mxu0 0.0
        %2332 = vmatpush1.msra.mxu0 0.0
        %2333 = vmatprep.subr.mxu0 0.0
        %2334 = vmatpush1.msra.mxu0 0.0
        %2335 = vmatprep.subr.mxu0 0.0
        %2336 = vmatpush1.msra.mxu0 0.0
        %2337 = vmatprep.subr.mxu0 0.0
        %2338 = vmatpush1.msra.mxu0 %v1886
        %2339 = vmatprep.subr.mxu0 0.0
        %2340 = vmatpush1.msra.mxu0 %v1885
        %2341 = vmatprep.subr.mxu0 0.0
        %2342 = vmatpush1.msra.mxu0 %v1884
        %2343 = vmatprep.subr.mxu0 0.0
        %2344 = vmatpush1.msra.mxu0 %v1883
        %2345 = vmatprep.subr.mxu0 0.0
        %2346 = vmatpush1.msra.mxu0 %v1882
        %2347 = vmatprep.subr.mxu0 0.0
        %2348 = vmatpush1.msra.mxu0 %v1881
        %2349 = vmatprep.subr.mxu0 0.0
        %2350 = vmatpush1.msra.mxu0 %v1880
        %2351 = vmatprep.subr.mxu0 0.0
        %2352 = vmatpush1.msra.mxu0 %v1879
        %2353 = vmatprep.subr.mxu0 0.0
        %2354 = vmatpush2.msra.mxu0 0.0
        %2355 = vmatprep.subr.mxu0 0.0
        %2356 = vmatpush2.msra.mxu0 0.0
        %2357 = vmatprep.subr.mxu0 0.0
        %2358 = vmatpush2.msra.mxu0 0.0
        %2359 = vmatprep.subr.mxu0 0.0
        %2360 = vmatpush2.msra.mxu0 0.0
        %2361 = vmatprep.subr.mxu0 0.0
        %2362 = vmatpush2.msra.mxu0 0.0
        %2363 = vmatprep.subr.mxu0 0.0
        %2364 = vmatpush2.msra.mxu0 0.0
        %2365 = vmatprep.subr.mxu0 0.0
        %2366 = vmatpush2.msra.mxu0 0.0
        %2367 = vmatprep.subr.mxu0 0.0
        %2368 = vmatpush2.msra.mxu0 0.0
        %2369 = vmatprep.subr.mxu0 0.0
        %2370 = vmatpush2.msra.mxu0 0.0
        %2371 = vmatprep.subr.mxu0 0.0
        %2372 = vmatpush2.msra.mxu0 0.0
        %2373 = vmatprep.subr.mxu0 0.0
        %2374 = vmatpush2.msra.mxu0 0.0
        %2375 = vmatprep.subr.mxu0 0.0
        %2376 = vmatpush2.msra.mxu0 0.0
        %2377 = vmatprep.subr.mxu0 0.0
        %2378 = vmatpush2.msra.mxu0 0.0
        %2379 = vmatprep.subr.mxu0 0.0
        %2380 = vmatpush2.msra.mxu0 0.0
        %2381 = vmatprep.subr.mxu0 0.0
        %2382 = vmatpush2.msra.mxu0 0.0
        %2383 = vmatprep.subr.mxu0 0.0
        %2384 = vmatpush2.msra.mxu0 0.0
        %2385 = vmatprep.mubr.f32.mxu0 0.0
        %2386 = vmatmul.mubr.f32.gmra.mxu0 %v2298
        %v2387 = vpop.f32.mrf.mxu0
        %v2388 = vadd.f32 %v2002, %v2387
        %v2389 = vpop.f32.mrf.mxu0
        %2390 = vmatprep.mubr.f32.mxu0 0.0
        %2391 = vmatmul.mubr.f32.gmra.mxu0 %v2301
        %v2392 = vpop.f32.mrf.mxu0
        %v2393 = vadd.f32 %v2007, %v2392
        %v2394 = vpop.f32.mrf.mxu0
        %2395 = vmatprep.mubr.f32.mxu0 0.0
        %2396 = vmatmul.mubr.f32.gmra.mxu0 %v2304
        %v2397 = vpop.f32.mrf.mxu0
        %v2398 = vadd.f32 %v2012, %v2397
        %v2399 = vpop.f32.mrf.mxu0
        %2400 = vmatprep.mubr.f32.mxu0 0.0
        %2401 = vmatmul.mubr.f32.gmra.mxu0 %v2307
        %v2402 = vpop.f32.mrf.mxu0
        %v2403 = vadd.f32 %v2017, %v2402
        %v2404 = vpop.f32.mrf.mxu0
        %2405 = vmatprep.mubr.f32.mxu0 0.0
        %2406 = vmatmul.mubr.f32.gmra.mxu0 %v2310
        %v2407 = vpop.f32.mrf.mxu0
        %v2408 = vadd.f32 %v2022, %v2407
        %v2409 = vpop.f32.mrf.mxu0
        %2410 = vmatprep.mubr.f32.mxu0 0.0
        %2411 = vmatmul.mubr.f32.gmra.mxu0 %v2313
        %v2412 = vpop.f32.mrf.mxu0
        %v2413 = vadd.f32 %v2027, %v2412
        %v2414 = vpop.f32.mrf.mxu0
        %2415 = vmatprep.mubr.f32.mxu0 0.0
        %2416 = vmatmul.mubr.f32.gmra.mxu0 %v2316
        %v2417 = vpop.f32.mrf.mxu0
        %v2418 = vadd.f32 %v2032, %v2417
        %v2419 = vpop.f32.mrf.mxu0
        %2420 = vmatprep.mubr.f32.mxu0 0.0
        %2421 = vmatmul.mubr.f32.gmra.mxu0 %v2319
        %v2422 = vpop.f32.mrf.mxu0
        %v2423 = vadd.f32 %v2037, %v2422
        %v2424 = vpop.f32.mrf.mxu0
        %2425 = vdwg.mxu0
        %v2427 = vsel %vm371, %v1951, 0
        %v2430 = vsel %vm371, %v1952, 0
        %v2433 = vsel %vm371, %v1953, 0
        %v2436 = vsel %vm371, %v1954, 0
        %v2439 = vsel %vm371, %v1955, 0
        %v2442 = vsel %vm371, %v1956, 0
        %v2445 = vsel %vm371, %v1957, 0
        %v2448 = vsel %vm371, %v1958, 0
        %2450 = vmatprep.subr.mxu0 0.0
        %2451 = vmatpush1.msra.mxu0 0.0
        %2452 = vmatprep.subr.mxu0 0.0
        %2453 = vmatpush1.msra.mxu0 0.0
        %2454 = vmatprep.subr.mxu0 0.0
        %2455 = vmatpush1.msra.mxu0 0.0
        %2456 = vmatprep.subr.mxu0 0.0
        %2457 = vmatpush1.msra.mxu0 0.0
        %2458 = vmatprep.subr.mxu0 0.0
        %2459 = vmatpush1.msra.mxu0 0.0
        %2460 = vmatprep.subr.mxu0 0.0
        %2461 = vmatpush1.msra.mxu0 0.0
        %2462 = vmatprep.subr.mxu0 0.0
        %2463 = vmatpush1.msra.mxu0 0.0
        %2464 = vmatprep.subr.mxu0 0.0
        %2465 = vmatpush1.msra.mxu0 0.0
        %2466 = vmatprep.subr.mxu0 0.0
        %2467 = vmatpush1.msra.mxu0 %v1894
        %2468 = vmatprep.subr.mxu0 0.0
        %2469 = vmatpush1.msra.mxu0 %v1893
        %2470 = vmatprep.subr.mxu0 0.0
        %2471 = vmatpush1.msra.mxu0 %v1892
        %2472 = vmatprep.subr.mxu0 0.0
        %2473 = vmatpush1.msra.mxu0 %v1891
        %2474 = vmatprep.subr.mxu0 0.0
        %2475 = vmatpush1.msra.mxu0 %v1890
        %2476 = vmatprep.subr.mxu0 0.0
        %2477 = vmatpush1.msra.mxu0 %v1889
        %2478 = vmatprep.subr.mxu0 0.0
        %2479 = vmatpush1.msra.mxu0 %v1888
        %2480 = vmatprep.subr.mxu0 0.0
        %2481 = vmatpush1.msra.mxu0 %v1887
        %2482 = vmatprep.subr.mxu0 0.0
        %2483 = vmatpush2.msra.mxu0 0.0
        %2484 = vmatprep.subr.mxu0 0.0
        %2485 = vmatpush2.msra.mxu0 0.0
        %2486 = vmatprep.subr.mxu0 0.0
        %2487 = vmatpush2.msra.mxu0 0.0
        %2488 = vmatprep.subr.mxu0 0.0
        %2489 = vmatpush2.msra.mxu0 0.0
        %2490 = vmatprep.subr.mxu0 0.0
        %2491 = vmatpush2.msra.mxu0 0.0
        %2492 = vmatprep.subr.mxu0 0.0
        %2493 = vmatpush2.msra.mxu0 0.0
        %2494 = vmatprep.subr.mxu0 0.0
        %2495 = vmatpush2.msra.mxu0 0.0
        %2496 = vmatprep.subr.mxu0 0.0
        %2497 = vmatpush2.msra.mxu0 0.0
        %2498 = vmatprep.subr.mxu0 0.0
        %2499 = vmatpush2.msra.mxu0 0.0
        %2500 = vmatprep.subr.mxu0 0.0
        %2501 = vmatpush2.msra.mxu0 0.0
        %2502 = vmatprep.subr.mxu0 0.0
        %2503 = vmatpush2.msra.mxu0 0.0
        %2504 = vmatprep.subr.mxu0 0.0
        %2505 = vmatpush2.msra.mxu0 0.0
        %2506 = vmatprep.subr.mxu0 0.0
        %2507 = vmatpush2.msra.mxu0 0.0
        %2508 = vmatprep.subr.mxu0 0.0
        %2509 = vmatpush2.msra.mxu0 0.0
        %2510 = vmatprep.subr.mxu0 0.0
        %2511 = vmatpush2.msra.mxu0 0.0
        %2512 = vmatprep.subr.mxu0 0.0
        %2513 = vmatpush2.msra.mxu0 0.0
        %2514 = vmatprep.mubr.f32.mxu0 0.0
        %2515 = vmatmul.mubr.f32.gmra.mxu0 %v2427
        %v2516 = vpop.f32.mrf.mxu0
        %v2517 = vadd.f32 %v2002, %v2516
        %v2518 = vpop.f32.mrf.mxu0
        %2519 = vmatprep.mubr.f32.mxu0 0.0
        %2520 = vmatmul.mubr.f32.gmra.mxu0 %v2430
        %v2521 = vpop.f32.mrf.mxu0
        %v2522 = vadd.f32 %v2007, %v2521
        %v2523 = vpop.f32.mrf.mxu0
        %2524 = vmatprep.mubr.f32.mxu0 0.0
        %2525 = vmatmul.mubr.f32.gmra.mxu0 %v2433
        %v2526 = vpop.f32.mrf.mxu0
        %v2527 = vadd.f32 %v2012, %v2526
        %v2528 = vpop.f32.mrf.mxu0
        %2529 = vmatprep.mubr.f32.mxu0 0.0
        %2530 = vmatmul.mubr.f32.gmra.mxu0 %v2436
        %v2531 = vpop.f32.mrf.mxu0
        %v2532 = vadd.f32 %v2017, %v2531
        %v2533 = vpop.f32.mrf.mxu0
        %2534 = vmatprep.mubr.f32.mxu0 0.0
        %2535 = vmatmul.mubr.f32.gmra.mxu0 %v2439
        %v2536 = vpop.f32.mrf.mxu0
        %v2537 = vadd.f32 %v2022, %v2536
        %v2538 = vpop.f32.mrf.mxu0
        %2539 = vmatprep.mubr.f32.mxu0 0.0
        %2540 = vmatmul.mubr.f32.gmra.mxu0 %v2442
        %v2541 = vpop.f32.mrf.mxu0
        %v2542 = vadd.f32 %v2027, %v2541
        %v2543 = vpop.f32.mrf.mxu0
        %2544 = vmatprep.mubr.f32.mxu0 0.0
        %2545 = vmatmul.mubr.f32.gmra.mxu0 %v2445
        %v2546 = vpop.f32.mrf.mxu0
        %v2547 = vadd.f32 %v2032, %v2546
        %v2548 = vpop.f32.mrf.mxu0
        %2549 = vmatprep.mubr.f32.mxu0 0.0
        %2550 = vmatmul.mubr.f32.gmra.mxu0 %v2448
        %v2551 = vpop.f32.mrf.mxu0
        %v2552 = vadd.f32 %v2037, %v2551
        %v2553 = vpop.f32.mrf.mxu0
        %2554 = vdwg.mxu0
        %v2556 = vsel %vm371, %v1959, 0
        %v2559 = vsel %vm371, %v1960, 0
        %v2562 = vsel %vm371, %v1961, 0
        %v2565 = vsel %vm371, %v1962, 0
        %v2568 = vsel %vm371, %v1963, 0
        %v2571 = vsel %vm371, %v1964, 0
        %v2574 = vsel %vm371, %v1965, 0
        %v2577 = vsel %vm371, %v1966, 0
        %2579 = vmatprep.subr.mxu0 0.0
        %2580 = vmatpush1.msra.mxu0 0.0
        %2581 = vmatprep.subr.mxu0 0.0
        %2582 = vmatpush1.msra.mxu0 0.0
        %2583 = vmatprep.subr.mxu0 0.0
        %2584 = vmatpush1.msra.mxu0 0.0
        %2585 = vmatprep.subr.mxu0 0.0
        %2586 = vmatpush1.msra.mxu0 0.0
        %2587 = vmatprep.subr.mxu0 0.0
        %2588 = vmatpush1.msra.mxu0 0.0
        %2589 = vmatprep.subr.mxu0 0.0
        %2590 = vmatpush1.msra.mxu0 0.0
        %2591 = vmatprep.subr.mxu0 0.0
        %2592 = vmatpush1.msra.mxu0 0.0
        %2593 = vmatprep.subr.mxu0 0.0
        %2594 = vmatpush1.msra.mxu0 0.0
        %2595 = vmatprep.subr.mxu0 0.0
        %2596 = vmatpush1.msra.mxu0 %v1902
        %2597 = vmatprep.subr.mxu0 0.0
        %2598 = vmatpush1.msra.mxu0 %v1901
        %2599 = vmatprep.subr.mxu0 0.0
        %2600 = vmatpush1.msra.mxu0 %v1900
        %2601 = vmatprep.subr.mxu0 0.0
        %2602 = vmatpush1.msra.mxu0 %v1899
        %2603 = vmatprep.subr.mxu0 0.0
        %2604 = vmatpush1.msra.mxu0 %v1898
        %2605 = vmatprep.subr.mxu0 0.0
        %2606 = vmatpush1.msra.mxu0 %v1897
        %2607 = vmatprep.subr.mxu0 0.0
        %2608 = vmatpush1.msra.mxu0 %v1896
        %2609 = vmatprep.subr.mxu0 0.0
        %2610 = vmatpush1.msra.mxu0 %v1895
        %2611 = vmatprep.subr.mxu0 0.0
        %2612 = vmatpush2.msra.mxu0 0.0
        %2613 = vmatprep.subr.mxu0 0.0
        %2614 = vmatpush2.msra.mxu0 0.0
        %2615 = vmatprep.subr.mxu0 0.0
        %2616 = vmatpush2.msra.mxu0 0.0
        %2617 = vmatprep.subr.mxu0 0.0
        %2618 = vmatpush2.msra.mxu0 0.0
        %2619 = vmatprep.subr.mxu0 0.0
        %2620 = vmatpush2.msra.mxu0 0.0
        %2621 = vmatprep.subr.mxu0 0.0
        %2622 = vmatpush2.msra.mxu0 0.0
        %2623 = vmatprep.subr.mxu0 0.0
        %2624 = vmatpush2.msra.mxu0 0.0
        %2625 = vmatprep.subr.mxu0 0.0
        %2626 = vmatpush2.msra.mxu0 0.0
        %2627 = vmatprep.subr.mxu0 0.0
        %2628 = vmatpush2.msra.mxu0 0.0
        %2629 = vmatprep.subr.mxu0 0.0
        %2630 = vmatpush2.msra.mxu0 0.0
        %2631 = vmatprep.subr.mxu0 0.0
        %2632 = vmatpush2.msra.mxu0 0.0
        %2633 = vmatprep.subr.mxu0 0.0
        %2634 = vmatpush2.msra.mxu0 0.0
        %2635 = vmatprep.subr.mxu0 0.0
        %2636 = vmatpush2.msra.mxu0 0.0
        %2637 = vmatprep.subr.mxu0 0.0
        %2638 = vmatpush2.msra.mxu0 0.0
        %2639 = vmatprep.subr.mxu0 0.0
        %2640 = vmatpush2.msra.mxu0 0.0
        %2641 = vmatprep.subr.mxu0 0.0
        %2642 = vmatpush2.msra.mxu0 0.0
        %2643 = vmatprep.mubr.f32.mxu0 0.0
        %2644 = vmatmul.mubr.f32.gmra.mxu0 %v2556
        %v2645 = vpop.f32.mrf.mxu0
        %v2646 = vadd.f32 %v2002, %v2645
        %v2647 = vpop.f32.mrf.mxu0
        %2648 = vmatprep.mubr.f32.mxu0 0.0
        %2649 = vmatmul.mubr.f32.gmra.mxu0 %v2559
        %v2650 = vpop.f32.mrf.mxu0
        %v2651 = vadd.f32 %v2007, %v2650
        %v2652 = vpop.f32.mrf.mxu0
        %2653 = vmatprep.mubr.f32.mxu0 0.0
        %2654 = vmatmul.mubr.f32.gmra.mxu0 %v2562
        %v2655 = vpop.f32.mrf.mxu0
        %v2656 = vadd.f32 %v2012, %v2655
        %v2657 = vpop.f32.mrf.mxu0
        %2658 = vmatprep.mubr.f32.mxu0 0.0
        %2659 = vmatmul.mubr.f32.gmra.mxu0 %v2565
        %v2660 = vpop.f32.mrf.mxu0
        %v2661 = vadd.f32 %v2017, %v2660
        %v2662 = vpop.f32.mrf.mxu0
        %2663 = vmatprep.mubr.f32.mxu0 0.0
        %2664 = vmatmul.mubr.f32.gmra.mxu0 %v2568
        %v2665 = vpop.f32.mrf.mxu0
        %v2666 = vadd.f32 %v2022, %v2665
        %v2667 = vpop.f32.mrf.mxu0
        %2668 = vmatprep.mubr.f32.mxu0 0.0
        %2669 = vmatmul.mubr.f32.gmra.mxu0 %v2571
        %v2670 = vpop.f32.mrf.mxu0
        %v2671 = vadd.f32 %v2027, %v2670
        %v2672 = vpop.f32.mrf.mxu0
        %2673 = vmatprep.mubr.f32.mxu0 0.0
        %2674 = vmatmul.mubr.f32.gmra.mxu0 %v2574
        %v2675 = vpop.f32.mrf.mxu0
        %v2676 = vadd.f32 %v2032, %v2675
        %v2677 = vpop.f32.mrf.mxu0
        %2678 = vmatprep.mubr.f32.mxu0 0.0
        %2679 = vmatmul.mubr.f32.gmra.mxu0 %v2577
        %v2680 = vpop.f32.mrf.mxu0
        %v2681 = vadd.f32 %v2037, %v2680
        %v2682 = vpop.f32.mrf.mxu0
        %2683 = vdwg.mxu0
        %v2685 = vsel %vm371, %v1967, 0
        %v2688 = vsel %vm371, %v1968, 0
        %v2691 = vsel %vm371, %v1969, 0
        %v2694 = vsel %vm371, %v1970, 0
        %v2697 = vsel %vm371, %v1971, 0
        %v2700 = vsel %vm371, %v1972, 0
        %v2703 = vsel %vm371, %v1973, 0
        %v2706 = vsel %vm371, %v1974, 0
        %2708 = vmatprep.subr.mxu0 0.0
        %2709 = vmatpush1.msra.mxu0 0.0
        %2710 = vmatprep.subr.mxu0 0.0
        %2711 = vmatpush1.msra.mxu0 0.0
        %2712 = vmatprep.subr.mxu0 0.0
        %2713 = vmatpush1.msra.mxu0 0.0
        %2714 = vmatprep.subr.mxu0 0.0
        %2715 = vmatpush1.msra.mxu0 0.0
        %2716 = vmatprep.subr.mxu0 0.0
        %2717 = vmatpush1.msra.mxu0 0.0
        %2718 = vmatprep.subr.mxu0 0.0
        %2719 = vmatpush1.msra.mxu0 0.0
        %2720 = vmatprep.subr.mxu0 0.0
        %2721 = vmatpush1.msra.mxu0 0.0
        %2722 = vmatprep.subr.mxu0 0.0
        %2723 = vmatpush1.msra.mxu0 0.0
        %2724 = vmatprep.subr.mxu0 0.0
        %2725 = vmatpush1.msra.mxu0 %v1910
        %2726 = vmatprep.subr.mxu0 0.0
        %2727 = vmatpush1.msra.mxu0 %v1909
        %2728 = vmatprep.subr.mxu0 0.0
        %2729 = vmatpush1.msra.mxu0 %v1908
        %2730 = vmatprep.subr.mxu0 0.0
        %2731 = vmatpush1.msra.mxu0 %v1907
        %2732 = vmatprep.subr.mxu0 0.0
        %2733 = vmatpush1.msra.mxu0 %v1906
        %2734 = vmatprep.subr.mxu0 0.0
        %2735 = vmatpush1.msra.mxu0 %v1905
        %2736 = vmatprep.subr.mxu0 0.0
        %2737 = vmatpush1.msra.mxu0 %v1904
        %2738 = vmatprep.subr.mxu0 0.0
        %2739 = vmatpush1.msra.mxu0 %v1903
        %2740 = vmatprep.subr.mxu0 0.0
        %2741 = vmatpush2.msra.mxu0 0.0
        %2742 = vmatprep.subr.mxu0 0.0
        %2743 = vmatpush2.msra.mxu0 0.0
        %2744 = vmatprep.subr.mxu0 0.0
        %2745 = vmatpush2.msra.mxu0 0.0
        %2746 = vmatprep.subr.mxu0 0.0
        %2747 = vmatpush2.msra.mxu0 0.0
        %2748 = vmatprep.subr.mxu0 0.0
        %2749 = vmatpush2.msra.mxu0 0.0
        %2750 = vmatprep.subr.mxu0 0.0
        %2751 = vmatpush2.msra.mxu0 0.0
        %2752 = vmatprep.subr.mxu0 0.0
        %2753 = vmatpush2.msra.mxu0 0.0
        %2754 = vmatprep.subr.mxu0 0.0
        %2755 = vmatpush2.msra.mxu0 0.0
        %2756 = vmatprep.subr.mxu0 0.0
        %2757 = vmatpush2.msra.mxu0 0.0
        %2758 = vmatprep.subr.mxu0 0.0
        %2759 = vmatpush2.msra.mxu0 0.0
        %2760 = vmatprep.subr.mxu0 0.0
        %2761 = vmatpush2.msra.mxu0 0.0
        %2762 = vmatprep.subr.mxu0 0.0
        %2763 = vmatpush2.msra.mxu0 0.0
        %2764 = vmatprep.subr.mxu0 0.0
        %2765 = vmatpush2.msra.mxu0 0.0
        %2766 = vmatprep.subr.mxu0 0.0
        %2767 = vmatpush2.msra.mxu0 0.0
        %2768 = vmatprep.subr.mxu0 0.0
        %2769 = vmatpush2.msra.mxu0 0.0
        %2770 = vmatprep.subr.mxu0 0.0
        %2771 = vmatpush2.msra.mxu0 0.0
        %2772 = vmatprep.mubr.f32.mxu0 0.0
        %2773 = vmatmul.mubr.f32.gmra.mxu0 %v2685
        %v2774 = vpop.f32.mrf.mxu0
        %v2775 = vadd.f32 %v2002, %v2774
        %v2776 = vpop.f32.mrf.mxu0
        %2777 = vmatprep.mubr.f32.mxu0 0.0
        %2778 = vmatmul.mubr.f32.gmra.mxu0 %v2688
        %v2779 = vpop.f32.mrf.mxu0
        %v2780 = vadd.f32 %v2007, %v2779
        %v2781 = vpop.f32.mrf.mxu0
        %2782 = vmatprep.mubr.f32.mxu0 0.0
        %2783 = vmatmul.mubr.f32.gmra.mxu0 %v2691
        %v2784 = vpop.f32.mrf.mxu0
        %v2785 = vadd.f32 %v2012, %v2784
        %v2786 = vpop.f32.mrf.mxu0
        %2787 = vmatprep.mubr.f32.mxu0 0.0
        %2788 = vmatmul.mubr.f32.gmra.mxu0 %v2694
        %v2789 = vpop.f32.mrf.mxu0
        %v2790 = vadd.f32 %v2017, %v2789
        %v2791 = vpop.f32.mrf.mxu0
        %2792 = vmatprep.mubr.f32.mxu0 0.0
        %2793 = vmatmul.mubr.f32.gmra.mxu0 %v2697
        %v2794 = vpop.f32.mrf.mxu0
        %v2795 = vadd.f32 %v2022, %v2794
        %v2796 = vpop.f32.mrf.mxu0
        %2797 = vmatprep.mubr.f32.mxu0 0.0
        %2798 = vmatmul.mubr.f32.gmra.mxu0 %v2700
        %v2799 = vpop.f32.mrf.mxu0
        %v2800 = vadd.f32 %v2027, %v2799
        %v2801 = vpop.f32.mrf.mxu0
        %2802 = vmatprep.mubr.f32.mxu0 0.0
        %2803 = vmatmul.mubr.f32.gmra.mxu0 %v2703
        %v2804 = vpop.f32.mrf.mxu0
        %v2805 = vadd.f32 %v2032, %v2804
        %v2806 = vpop.f32.mrf.mxu0
        %2807 = vmatprep.mubr.f32.mxu0 0.0
        %2808 = vmatmul.mubr.f32.gmra.mxu0 %v2706
        %v2809 = vpop.f32.mrf.mxu0
        %v2810 = vadd.f32 %v2037, %v2809
        %v2811 = vpop.f32.mrf.mxu0
        %2812 = vdwg.mxu0
        %v2814 = vsel %vm371, %v1975, 0
        %v2817 = vsel %vm371, %v1976, 0
        %v2820 = vsel %vm371, %v1977, 0
        %v2823 = vsel %vm371, %v1978, 0
        %v2826 = vsel %vm371, %v1979, 0
        %v2829 = vsel %vm371, %v1980, 0
        %v2832 = vsel %vm371, %v1981, 0
        %v2835 = vsel %vm371, %v1982, 0
        %2837 = vmatprep.subr.mxu0 0.0
        %2838 = vmatpush1.msra.mxu0 0.0
        %2839 = vmatprep.subr.mxu0 0.0
        %2840 = vmatpush1.msra.mxu0 0.0
        %2841 = vmatprep.subr.mxu0 0.0
        %2842 = vmatpush1.msra.mxu0 0.0
        %2843 = vmatprep.subr.mxu0 0.0
        %2844 = vmatpush1.msra.mxu0 0.0
        %2845 = vmatprep.subr.mxu0 0.0
        %2846 = vmatpush1.msra.mxu0 0.0
        %2847 = vmatprep.subr.mxu0 0.0
        %2848 = vmatpush1.msra.mxu0 0.0
        %2849 = vmatprep.subr.mxu0 0.0
        %2850 = vmatpush1.msra.mxu0 0.0
        %2851 = vmatprep.subr.mxu0 0.0
        %2852 = vmatpush1.msra.mxu0 0.0
        %2853 = vmatprep.subr.mxu0 0.0
        %2854 = vmatpush1.msra.mxu0 %v1918
        %2855 = vmatprep.subr.mxu0 0.0
        %2856 = vmatpush1.msra.mxu0 %v1917
        %2857 = vmatprep.subr.mxu0 0.0
        %2858 = vmatpush1.msra.mxu0 %v1916
        %2859 = vmatprep.subr.mxu0 0.0
        %2860 = vmatpush1.msra.mxu0 %v1915
        %2861 = vmatprep.subr.mxu0 0.0
        %2862 = vmatpush1.msra.mxu0 %v1914
        %2863 = vmatprep.subr.mxu0 0.0
        %2864 = vmatpush1.msra.mxu0 %v1913
        %2865 = vmatprep.subr.mxu0 0.0
        %2866 = vmatpush1.msra.mxu0 %v1912
        %2867 = vmatprep.subr.mxu0 0.0
        %2868 = vmatpush1.msra.mxu0 %v1911
        %2869 = vmatprep.subr.mxu0 0.0
        %2870 = vmatpush2.msra.mxu0 0.0
        %2871 = vmatprep.subr.mxu0 0.0
        %2872 = vmatpush2.msra.mxu0 0.0
        %2873 = vmatprep.subr.mxu0 0.0
        %2874 = vmatpush2.msra.mxu0 0.0
        %2875 = vmatprep.subr.mxu0 0.0
        %2876 = vmatpush2.msra.mxu0 0.0
        %2877 = vmatprep.subr.mxu0 0.0
        %2878 = vmatpush2.msra.mxu0 0.0
        %2879 = vmatprep.subr.mxu0 0.0
        %2880 = vmatpush2.msra.mxu0 0.0
        %2881 = vmatprep.subr.mxu0 0.0
        %2882 = vmatpush2.msra.mxu0 0.0
        %2883 = vmatprep.subr.mxu0 0.0
        %2884 = vmatpush2.msra.mxu0 0.0
        %2885 = vmatprep.subr.mxu0 0.0
        %2886 = vmatpush2.msra.mxu0 0.0
        %2887 = vmatprep.subr.mxu0 0.0
        %2888 = vmatpush2.msra.mxu0 0.0
        %2889 = vmatprep.subr.mxu0 0.0
        %2890 = vmatpush2.msra.mxu0 0.0
        %2891 = vmatprep.subr.mxu0 0.0
        %2892 = vmatpush2.msra.mxu0 0.0
        %2893 = vmatprep.subr.mxu0 0.0
        %2894 = vmatpush2.msra.mxu0 0.0
        %2895 = vmatprep.subr.mxu0 0.0
        %2896 = vmatpush2.msra.mxu0 0.0
        %2897 = vmatprep.subr.mxu0 0.0
        %2898 = vmatpush2.msra.mxu0 0.0
        %2899 = vmatprep.subr.mxu0 0.0
        %2900 = vmatpush2.msra.mxu0 0.0
        %2901 = vmatprep.mubr.f32.mxu0 0.0
        %2902 = vmatmul.mubr.f32.gmra.mxu0 %v2814
        %v2903 = vpop.f32.mrf.mxu0
        %v2904 = vadd.f32 %v2002, %v2903
        %v2905 = vpop.f32.mrf.mxu0
        %2906 = vmatprep.mubr.f32.mxu0 0.0
        %2907 = vmatmul.mubr.f32.gmra.mxu0 %v2817
        %v2908 = vpop.f32.mrf.mxu0
        %v2909 = vadd.f32 %v2007, %v2908
        %v2910 = vpop.f32.mrf.mxu0
        %2911 = vmatprep.mubr.f32.mxu0 0.0
        %2912 = vmatmul.mubr.f32.gmra.mxu0 %v2820
        %v2913 = vpop.f32.mrf.mxu0
        %v2914 = vadd.f32 %v2012, %v2913
        %v2915 = vpop.f32.mrf.mxu0
        %2916 = vmatprep.mubr.f32.mxu0 0.0
        %2917 = vmatmul.mubr.f32.gmra.mxu0 %v2823
        %v2918 = vpop.f32.mrf.mxu0
        %v2919 = vadd.f32 %v2017, %v2918
        %v2920 = vpop.f32.mrf.mxu0
        %2921 = vmatprep.mubr.f32.mxu0 0.0
        %2922 = vmatmul.mubr.f32.gmra.mxu0 %v2826
        %v2923 = vpop.f32.mrf.mxu0
        %v2924 = vadd.f32 %v2022, %v2923
        %v2925 = vpop.f32.mrf.mxu0
        %2926 = vmatprep.mubr.f32.mxu0 0.0
        %2927 = vmatmul.mubr.f32.gmra.mxu0 %v2829
        %v2928 = vpop.f32.mrf.mxu0
        %v2929 = vadd.f32 %v2027, %v2928
        %v2930 = vpop.f32.mrf.mxu0
        %2931 = vmatprep.mubr.f32.mxu0 0.0
        %2932 = vmatmul.mubr.f32.gmra.mxu0 %v2832
        %v2933 = vpop.f32.mrf.mxu0
        %v2934 = vadd.f32 %v2032, %v2933
        %v2935 = vpop.f32.mrf.mxu0
        %2936 = vmatprep.mubr.f32.mxu0 0.0
        %2937 = vmatmul.mubr.f32.gmra.mxu0 %v2835
        %v2938 = vpop.f32.mrf.mxu0
        %v2939 = vadd.f32 %v2037, %v2938
        %v2940 = vpop.f32.mrf.mxu0
        %2941 = vdwg.mxu0
        %v2943 = vsel %vm371, %v1983, 0
        %v2946 = vsel %vm371, %v1984, 0
        %v2949 = vsel %vm371, %v1985, 0
        %v2952 = vsel %vm371, %v1986, 0
        %v2955 = vsel %vm371, %v1987, 0
        %v2958 = vsel %vm371, %v1988, 0
        %v2961 = vsel %vm371, %v1989, 0
        %v2964 = vsel %vm371, %v1990, 0
        %2966 = vmatprep.subr.mxu0 0.0
        %2967 = vmatpush1.msra.mxu0 0.0
        %2968 = vmatprep.subr.mxu0 0.0
        %2969 = vmatpush1.msra.mxu0 0.0
        %2970 = vmatprep.subr.mxu0 0.0
        %2971 = vmatpush1.msra.mxu0 0.0
        %2972 = vmatprep.subr.mxu0 0.0
        %2973 = vmatpush1.msra.mxu0 0.0
        %2974 = vmatprep.subr.mxu0 0.0
        %2975 = vmatpush1.msra.mxu0 0.0
        %2976 = vmatprep.subr.mxu0 0.0
        %2977 = vmatpush1.msra.mxu0 0.0
        %2978 = vmatprep.subr.mxu0 0.0
        %2979 = vmatpush1.msra.mxu0 0.0
        %2980 = vmatprep.subr.mxu0 0.0
        %2981 = vmatpush1.msra.mxu0 0.0
        %2982 = vmatprep.subr.mxu0 0.0
        %2983 = vmatpush1.msra.mxu0 %v1926
        %2984 = vmatprep.subr.mxu0 0.0
        %2985 = vmatpush1.msra.mxu0 %v1925
        %2986 = vmatprep.subr.mxu0 0.0
        %2987 = vmatpush1.msra.mxu0 %v1924
        %2988 = vmatprep.subr.mxu0 0.0
        %2989 = vmatpush1.msra.mxu0 %v1923
        %2990 = vmatprep.subr.mxu0 0.0
        %2991 = vmatpush1.msra.mxu0 %v1922
        %2992 = vmatprep.subr.mxu0 0.0
        %2993 = vmatpush1.msra.mxu0 %v1921
        %2994 = vmatprep.subr.mxu0 0.0
        %2995 = vmatpush1.msra.mxu0 %v1920
        %2996 = vmatprep.subr.mxu0 0.0
        %2997 = vmatpush1.msra.mxu0 %v1919
        %2998 = vmatprep.subr.mxu0 0.0
        %2999 = vmatpush2.msra.mxu0 0.0
        %3000 = vmatprep.subr.mxu0 0.0
        %3001 = vmatpush2.msra.mxu0 0.0
        %3002 = vmatprep.subr.mxu0 0.0
        %3003 = vmatpush2.msra.mxu0 0.0
        %3004 = vmatprep.subr.mxu0 0.0
        %3005 = vmatpush2.msra.mxu0 0.0
        %3006 = vmatprep.subr.mxu0 0.0
        %3007 = vmatpush2.msra.mxu0 0.0
        %3008 = vmatprep.subr.mxu0 0.0
        %3009 = vmatpush2.msra.mxu0 0.0
        %3010 = vmatprep.subr.mxu0 0.0
        %3011 = vmatpush2.msra.mxu0 0.0
        %3012 = vmatprep.subr.mxu0 0.0
        %3013 = vmatpush2.msra.mxu0 0.0
        %3014 = vmatprep.subr.mxu0 0.0
        %3015 = vmatpush2.msra.mxu0 0.0
        %3016 = vmatprep.subr.mxu0 0.0
        %3017 = vmatpush2.msra.mxu0 0.0
        %3018 = vmatprep.subr.mxu0 0.0
        %3019 = vmatpush2.msra.mxu0 0.0
        %3020 = vmatprep.subr.mxu0 0.0
        %3021 = vmatpush2.msra.mxu0 0.0
        %3022 = vmatprep.subr.mxu0 0.0
        %3023 = vmatpush2.msra.mxu0 0.0
        %3024 = vmatprep.subr.mxu0 0.0
        %3025 = vmatpush2.msra.mxu0 0.0
        %3026 = vmatprep.subr.mxu0 0.0
        %3027 = vmatpush2.msra.mxu0 0.0
        %3028 = vmatprep.subr.mxu0 0.0
        %3029 = vmatpush2.msra.mxu0 0.0
        %3030 = vmatprep.mubr.f32.mxu0 0.0
        %3031 = vmatmul.mubr.f32.gmra.mxu0 %v2943
        %v3032 = vpop.f32.mrf.mxu0
        %v3033 = vadd.f32 %v2002, %v3032
        %v3034 = vpop.f32.mrf.mxu0
        %3035 = vmatprep.mubr.f32.mxu0 0.0
        %3036 = vmatmul.mubr.f32.gmra.mxu0 %v2946
        %v3037 = vpop.f32.mrf.mxu0
        %v3038 = vadd.f32 %v2007, %v3037
        %v3039 = vpop.f32.mrf.mxu0
        %3040 = vmatprep.mubr.f32.mxu0 0.0
        %3041 = vmatmul.mubr.f32.gmra.mxu0 %v2949
        %v3042 = vpop.f32.mrf.mxu0
        %v3043 = vadd.f32 %v2012, %v3042
        %v3044 = vpop.f32.mrf.mxu0
        %3045 = vmatprep.mubr.f32.mxu0 0.0
        %3046 = vmatmul.mubr.f32.gmra.mxu0 %v2952
        %v3047 = vpop.f32.mrf.mxu0
        %v3048 = vadd.f32 %v2017, %v3047
        %v3049 = vpop.f32.mrf.mxu0
        %3050 = vmatprep.mubr.f32.mxu0 0.0
        %3051 = vmatmul.mubr.f32.gmra.mxu0 %v2955
        %v3052 = vpop.f32.mrf.mxu0
        %v3053 = vadd.f32 %v2022, %v3052
        %v3054 = vpop.f32.mrf.mxu0
        %3055 = vmatprep.mubr.f32.mxu0 0.0
        %3056 = vmatmul.mubr.f32.gmra.mxu0 %v2958
        %v3057 = vpop.f32.mrf.mxu0
        %v3058 = vadd.f32 %v2027, %v3057
        %v3059 = vpop.f32.mrf.mxu0
        %3060 = vmatprep.mubr.f32.mxu0 0.0
        %3061 = vmatmul.mubr.f32.gmra.mxu0 %v2961
        %v3062 = vpop.f32.mrf.mxu0
        %v3063 = vadd.f32 %v2032, %v3062
        %v3064 = vpop.f32.mrf.mxu0
        %3065 = vmatprep.mubr.f32.mxu0 0.0
        %3066 = vmatmul.mubr.f32.gmra.mxu0 %v2964
        %v3067 = vpop.f32.mrf.mxu0
        %v3068 = vadd.f32 %v2037, %v3067
        %v3069 = vpop.f32.mrf.mxu0
        %3070 = vdwg.mxu0
        %v3071 = vmax.f32 %v2130, 0.0
        %v3072 = vmax.f32 %v2135, 0.0
        %v3073 = vmax.f32 %v2140, 0.0
        %v3074 = vmax.f32 %v2145, 0.0
        %v3075 = vmax.f32 %v2150, 0.0
        %v3076 = vmax.f32 %v2155, 0.0
        %v3077 = vmax.f32 %v2160, 0.0
        %v3078 = vmax.f32 %v2165, 0.0
        %v3079 = vmax.f32 %v2259, 0.0
        %v3080 = vmax.f32 %v2264, 0.0
        %v3081 = vmax.f32 %v2269, 0.0
        %v3082 = vmax.f32 %v2274, 0.0
        %v3083 = vmax.f32 %v2279, 0.0
        %v3084 = vmax.f32 %v2284, 0.0
        %v3085 = vmax.f32 %v2289, 0.0
        %v3086 = vmax.f32 %v2294, 0.0
        %v3087 = vmax.f32 %v2388, 0.0
        %v3088 = vmax.f32 %v2393, 0.0
        %v3089 = vmax.f32 %v2398, 0.0
        %v3090 = vmax.f32 %v2403, 0.0
        %v3091 = vmax.f32 %v2408, 0.0
        %v3092 = vmax.f32 %v2413, 0.0
        %v3093 = vmax.f32 %v2418, 0.0
        %v3094 = vmax.f32 %v2423, 0.0
        %v3095 = vmax.f32 %v2517, 0.0
        %v3096 = vmax.f32 %v2522, 0.0
        %v3097 = vmax.f32 %v2527, 0.0
        %v3098 = vmax.f32 %v2532, 0.0
        %v3099 = vmax.f32 %v2537, 0.0
        %v3100 = vmax.f32 %v2542, 0.0
        %v3101 = vmax.f32 %v2547, 0.0
        %v3102 = vmax.f32 %v2552, 0.0
        %v3103 = vmax.f32 %v2646, 0.0
        %v3104 = vmax.f32 %v2651, 0.0
        %v3105 = vmax.f32 %v2656, 0.0
        %v3106 = vmax.f32 %v2661, 0.0
        %v3107 = vmax.f32 %v2666, 0.0
        %v3108 = vmax.f32 %v2671, 0.0
        %v3109 = vmax.f32 %v2676, 0.0
        %v3110 = vmax.f32 %v2681, 0.0
        %v3111 = vmax.f32 %v2775, 0.0
        %v3112 = vmax.f32 %v2780, 0.0
        %v3113 = vmax.f32 %v2785, 0.0
        %v3114 = vmax.f32 %v2790, 0.0
        %v3115 = vmax.f32 %v2795, 0.0
        %v3116 = vmax.f32 %v2800, 0.0
        %v3117 = vmax.f32 %v2805, 0.0
        %v3118 = vmax.f32 %v2810, 0.0
        %v3119 = vmax.f32 %v2904, 0.0
        %v3120 = vmax.f32 %v2909, 0.0
        %v3121 = vmax.f32 %v2914, 0.0
        %v3122 = vmax.f32 %v2919, 0.0
        %v3123 = vmax.f32 %v2924, 0.0
        %v3124 = vmax.f32 %v2929, 0.0
        %v3125 = vmax.f32 %v2934, 0.0
        %v3126 = vmax.f32 %v2939, 0.0
        %v3127 = vmax.f32 %v3033, 0.0
        %v3128 = vmax.f32 %v3038, 0.0
        %v3129 = vmax.f32 %v3043, 0.0
        %v3130 = vmax.f32 %v3048, 0.0
        %v3131 = vmax.f32 %v3053, 0.0
        %v3132 = vmax.f32 %v3058, 0.0
        %v3133 = vmax.f32 %v3063, 0.0
        %v3134 = vmax.f32 %v3068, 0.0
        %v3135 = vld [vmem:[%s7] sm:$0xff]
        %v3136 = vld [vmem:[%s7 + $0x8] sm:$0xff]
        %v3137 = vld [vmem:[%s7 + $0x10] sm:$0xff]
        %v3138 = vld [vmem:[%s7 + $0x18] sm:$0xff]
        %v3139 = vld [vmem:[%s7 + $0x20] sm:$0xff]
        %v3140 = vld [vmem:[%s7 + $0x28] sm:$0xff]
        %v3141 = vld [vmem:[%s7 + $0x30] sm:$0xff]
        %v3142 = vld [vmem:[%s7 + $0x38] sm:$0xff]
        %3144 = vset.pattern.permute.xlu0 0
        %3145 = vperm.xlu0 %3144, %v3135
        %v3146 = vpop.permute.xlu0 %3145
        %3149 = vset.pattern.permute.xlu0 0
        %3150 = vperm.xlu0 %3149, %v3136
        %v3151 = vpop.permute.xlu0 %3150
        %3154 = vset.pattern.permute.xlu0 0
        %3155 = vperm.xlu0 %3154, %v3137
        %v3156 = vpop.permute.xlu0 %3155
        %3159 = vset.pattern.permute.xlu0 0
        %3160 = vperm.xlu0 %3159, %v3138
        %v3161 = vpop.permute.xlu0 %3160
        %3164 = vset.pattern.permute.xlu0 0
        %3165 = vperm.xlu0 %3164, %v3139
        %v3166 = vpop.permute.xlu0 %3165
        %3169 = vset.pattern.permute.xlu0 0
        %3170 = vperm.xlu0 %3169, %v3140
        %v3171 = vpop.permute.xlu0 %3170
        %3174 = vset.pattern.permute.xlu0 0
        %3175 = vperm.xlu0 %3174, %v3141
        %v3176 = vpop.permute.xlu0 %3175
        %3179 = vset.pattern.permute.xlu0 0
        %3180 = vperm.xlu0 %3179, %v3142
        %v3181 = vpop.permute.xlu0 %3180
        %v3183 = vmul.f32 %v3071, %v3146
        %v3184 = vmul.f32 %v3072, %v3151
        %v3185 = vmul.f32 %v3073, %v3156
        %v3186 = vmul.f32 %v3074, %v3161
        %v3187 = vmul.f32 %v3075, %v3166
        %v3188 = vmul.f32 %v3076, %v3171
        %v3189 = vmul.f32 %v3077, %v3176
        %v3190 = vmul.f32 %v3078, %v3181
        %v3191 = vmul.f32 %v3079, %v3146
        %v3192 = vmul.f32 %v3080, %v3151
        %v3193 = vmul.f32 %v3081, %v3156
        %v3194 = vmul.f32 %v3082, %v3161
        %v3195 = vmul.f32 %v3083, %v3166
        %v3196 = vmul.f32 %v3084, %v3171
        %v3197 = vmul.f32 %v3085, %v3176
        %v3198 = vmul.f32 %v3086, %v3181
        %v3199 = vmul.f32 %v3087, %v3146
        %v3200 = vmul.f32 %v3088, %v3151
        %v3201 = vmul.f32 %v3089, %v3156
        %v3202 = vmul.f32 %v3090, %v3161
        %v3203 = vmul.f32 %v3091, %v3166
        %v3204 = vmul.f32 %v3092, %v3171
        %v3205 = vmul.f32 %v3093, %v3176
        %v3206 = vmul.f32 %v3094, %v3181
        %v3207 = vmul.f32 %v3095, %v3146
        %v3208 = vmul.f32 %v3096, %v3151
        %v3209 = vmul.f32 %v3097, %v3156
        %v3210 = vmul.f32 %v3098, %v3161
        %v3211 = vmul.f32 %v3099, %v3166
        %v3212 = vmul.f32 %v3100, %v3171
        %v3213 = vmul.f32 %v3101, %v3176
        %v3214 = vmul.f32 %v3102, %v3181
        %v3215 = vmul.f32 %v3103, %v3146
        %v3216 = vmul.f32 %v3104, %v3151
        %v3217 = vmul.f32 %v3105, %v3156
        %v3218 = vmul.f32 %v3106, %v3161
        %v3219 = vmul.f32 %v3107, %v3166
        %v3220 = vmul.f32 %v3108, %v3171
        %v3221 = vmul.f32 %v3109, %v3176
        %v3222 = vmul.f32 %v3110, %v3181
        %v3223 = vmul.f32 %v3111, %v3146
        %v3224 = vmul.f32 %v3112, %v3151
        %v3225 = vmul.f32 %v3113, %v3156
        %v3226 = vmul.f32 %v3114, %v3161
        %v3227 = vmul.f32 %v3115, %v3166
        %v3228 = vmul.f32 %v3116, %v3171
        %v3229 = vmul.f32 %v3117, %v3176
        %v3230 = vmul.f32 %v3118, %v3181
        %v3231 = vmul.f32 %v3119, %v3146
        %v3232 = vmul.f32 %v3120, %v3151
        %v3233 = vmul.f32 %v3121, %v3156
        %v3234 = vmul.f32 %v3122, %v3161
        %v3235 = vmul.f32 %v3123, %v3166
        %v3236 = vmul.f32 %v3124, %v3171
        %v3237 = vmul.f32 %v3125, %v3176
        %v3238 = vmul.f32 %v3126, %v3181
        %v3239 = vmul.f32 %v3127, %v3146
        %v3240 = vmul.f32 %v3128, %v3151
        %v3241 = vmul.f32 %v3129, %v3156
        %v3242 = vmul.f32 %v3130, %v3161
        %v3243 = vmul.f32 %v3131, %v3166
        %v3244 = vmul.f32 %v3132, %v3171
        %v3245 = vmul.f32 %v3133, %v3176
        %v3246 = vmul.f32 %v3134, %v3181
        %v3247 = vadd.f32 %v3183, %v3184
        %v3248 = vadd.f32 %v3247, %v3185
        %v3249 = vadd.f32 %v3248, %v3186
        %v3250 = vadd.f32 %v3249, %v3187
        %v3251 = vadd.f32 %v3250, %v3188
        %v3252 = vadd.f32 %v3251, %v3189
        %v3253 = vadd.f32 %v3252, %v3190
        %v3254 = vrot.slane %v3253, 4
        %v3255 = vadd.f32 %v3253, %v3254
        %v3256 = vrot.slane %v3255, 2
        %v3257 = vadd.f32 %v3255, %v3256
        %v3258 = vrot.slane %v3257, 1
        %v3259 = vadd.f32 %v3257, %v3258
        %v3260 = vadd.f32 %v3191, %v3192
        %v3261 = vadd.f32 %v3260, %v3193
        %v3262 = vadd.f32 %v3261, %v3194
        %v3263 = vadd.f32 %v3262, %v3195
        %v3264 = vadd.f32 %v3263, %v3196
        %v3265 = vadd.f32 %v3264, %v3197
        %v3266 = vadd.f32 %v3265, %v3198
        %v3267 = vrot.slane %v3266, 4
        %v3268 = vadd.f32 %v3266, %v3267
        %v3269 = vrot.slane %v3268, 2
        %v3270 = vadd.f32 %v3268, %v3269
        %v3271 = vrot.slane %v3270, 1
        %v3272 = vadd.f32 %v3270, %v3271
        %v3273 = vadd.f32 %v3199, %v3200
        %v3274 = vadd.f32 %v3273, %v3201
        %v3275 = vadd.f32 %v3274, %v3202
        %v3276 = vadd.f32 %v3275, %v3203
        %v3277 = vadd.f32 %v3276, %v3204
        %v3278 = vadd.f32 %v3277, %v3205
        %v3279 = vadd.f32 %v3278, %v3206
        %v3280 = vrot.slane %v3279, 4
        %v3281 = vadd.f32 %v3279, %v3280
        %v3282 = vrot.slane %v3281, 2
        %v3283 = vadd.f32 %v3281, %v3282
        %v3284 = vrot.slane %v3283, 1
        %v3285 = vadd.f32 %v3283, %v3284
        %v3286 = vadd.f32 %v3207, %v3208
        %v3287 = vadd.f32 %v3286, %v3209
        %v3288 = vadd.f32 %v3287, %v3210
        %v3289 = vadd.f32 %v3288, %v3211
        %v3290 = vadd.f32 %v3289, %v3212
        %v3291 = vadd.f32 %v3290, %v3213
        %v3292 = vadd.f32 %v3291, %v3214
        %v3293 = vrot.slane %v3292, 4
        %v3294 = vadd.f32 %v3292, %v3293
        %v3295 = vrot.slane %v3294, 2
        %v3296 = vadd.f32 %v3294, %v3295
        %v3297 = vrot.slane %v3296, 1
        %v3298 = vadd.f32 %v3296, %v3297
        %v3299 = vadd.f32 %v3215, %v3216
        %v3300 = vadd.f32 %v3299, %v3217
        %v3301 = vadd.f32 %v3300, %v3218
        %v3302 = vadd.f32 %v3301, %v3219
        %v3303 = vadd.f32 %v3302, %v3220
        %v3304 = vadd.f32 %v3303, %v3221
        %v3305 = vadd.f32 %v3304, %v3222
        %v3306 = vrot.slane %v3305, 4
        %v3307 = vadd.f32 %v3305, %v3306
        %v3308 = vrot.slane %v3307, 2
        %v3309 = vadd.f32 %v3307, %v3308
        %v3310 = vrot.slane %v3309, 1
        %v3311 = vadd.f32 %v3309, %v3310
        %v3312 = vadd.f32 %v3223, %v3224
        %v3313 = vadd.f32 %v3312, %v3225
        %v3314 = vadd.f32 %v3313, %v3226
        %v3315 = vadd.f32 %v3314, %v3227
        %v3316 = vadd.f32 %v3315, %v3228
        %v3317 = vadd.f32 %v3316, %v3229
        %v3318 = vadd.f32 %v3317, %v3230
        %v3319 = vrot.slane %v3318, 4
        %v3320 = vadd.f32 %v3318, %v3319
        %v3321 = vrot.slane %v3320, 2
        %v3322 = vadd.f32 %v3320, %v3321
        %v3323 = vrot.slane %v3322, 1
        %v3324 = vadd.f32 %v3322, %v3323
        %v3325 = vadd.f32 %v3231, %v3232
        %v3326 = vadd.f32 %v3325, %v3233
        %v3327 = vadd.f32 %v3326, %v3234
        %v3328 = vadd.f32 %v3327, %v3235
        %v3329 = vadd.f32 %v3328, %v3236
        %v3330 = vadd.f32 %v3329, %v3237
        %v3331 = vadd.f32 %v3330, %v3238
        %v3332 = vrot.slane %v3331, 4
        %v3333 = vadd.f32 %v3331, %v3332
        %v3334 = vrot.slane %v3333, 2
        %v3335 = vadd.f32 %v3333, %v3334
        %v3336 = vrot.slane %v3335, 1
        %v3337 = vadd.f32 %v3335, %v3336
        %v3338 = vadd.f32 %v3239, %v3240
        %v3339 = vadd.f32 %v3338, %v3241
        %v3340 = vadd.f32 %v3339, %v3242
        %v3341 = vadd.f32 %v3340, %v3243
        %v3342 = vadd.f32 %v3341, %v3244
        %v3343 = vadd.f32 %v3342, %v3245
        %v3344 = vadd.f32 %v3343, %v3246
        %v3345 = vrot.slane %v3344, 4
        %v3346 = vadd.f32 %v3344, %v3345
        %v3347 = vrot.slane %v3346, 2
        %v3348 = vadd.f32 %v3346, %v3347
        %v3349 = vrot.slane %v3348, 1
        %v3350 = vadd.f32 %v3348, %v3349
        %v3351 = vld [vmem:[#allocation2] sm:$0x1]
        %v3353 = vlaneseq
        %v3354 = vshrl.u32 %v3353, 7
        %v3355 = vsub.s32 0, %v3354
        %v3356 = vrot.slane %v3351, %v3355
        %3357 = vset.pattern.permute.xlu0 0
        %3358 = vperm.xlu0 %3357, %v3356
        %v3359 = vpop.permute.xlu0 %3358
        %v3361 = vadd.f32 %v3259, %v3359
        %v3362 = vadd.f32 %v3272, %v3359
        %v3363 = vadd.f32 %v3285, %v3359
        %v3364 = vadd.f32 %v3298, %v3359
        %v3365 = vadd.f32 %v3311, %v3359
        %v3366 = vadd.f32 %v3324, %v3359
        %v3367 = vadd.f32 %v3337, %v3359
        %v3368 = vadd.f32 %v3350, %v3359
        %vm3377 = vcmask 1041409
        %v3378 = vsel %vm3377, %v3362, %v3361
        %vm3379 = vcmask 1042434
        %v3380 = vsel %vm3379, %v3363, %v3378
        %vm3381 = vcmask 1043459
        %v3382 = vsel %vm3381, %v3364, %v3380
        %vm3383 = vcmask 1044484
        %v3384 = vsel %vm3383, %v3365, %v3382
        %vm3385 = vcmask 1045509
        %v3386 = vsel %vm3385, %v3366, %v3384
        %vm3387 = vcmask 1046534
        %v3388 = vsel %vm3387, %v3367, %v3386
        %vm3389 = vcmask 1047559
        %v3390 = vsel %vm3389, %v3368, %v3388
        %3392 = vst [vmem:[%s343] sm:$0xff] %v3390
        %s3393 = sand.u32 %s232, 1
        %s3394 = scalar_lea.sflag [#allocation4], %s3393
        %s3395 = sand.u32 %s232, 1
        %s3396 = smul.addr %s3395, 8
        %s3397 = scalar_lea.vmem [#allocation3], %s3396
        // Predicated region
        $region57: #{tpu_custom_call.1} parent=55 // pred_check
          %p3398 = pneg %p242
        $region58: #{tpu_custom_call.1} parent=55 // pred_check_branch
          %3400 = sbr.rel (%p3398) target = $region60
        $region59: #{tpu_custom_call.1} parent=55 // pred_region
          %s3402 = ssub.s32 128, 128
          %3403 = vsyncadd %s3394, %s3402
          %s3404 = smul.addr %s25, 128
          %s3405 = scalar_lea.hbm %s9, %s3404
          %s3407 = sshll.u32 %s3397, 4
          %s3408 = int_to_ptr.vmem [resolvable:$true] %s3407
          %3410 = dma.vmem_to_hbm [thread:$0]  %s3408, 128, %s3405, %s3394
        $region60: #{tpu_custom_call.1} parent=55 // pred_fallthru
          _
      $region56: #{tpu_custom_call.1} parent=5 // pred_fallthru
        _
      %p3411 = scmp.le.s32.totalorder 2, %s20
      // Predicated region
      $region61: #{tpu_custom_call.1} parent=5 // pred_check
        %p3412 = pneg %p3411
      $region62: #{tpu_custom_call.1} parent=5 // pred_check_branch
        %3414 = sbr.rel (%p3412) target = $region64
      $region63: #{tpu_custom_call.1} parent=5 // pred_region
        %s3415 = ssub.s32 %s20, 2
        // Predicated region
        $region65: #{tpu_custom_call.1} parent=63 // pred_check
          %p3416 = pneg %p248
        $region66: #{tpu_custom_call.1} parent=63 // pred_check_branch
          %3418 = sbr.rel (%p3416) target = $region68
        $region67: #{tpu_custom_call.1} parent=63 // pred_region
          %s3419 = sand.u32 %s233, 1
          %s3420 = scalar_lea.sflag [#allocation4], %s3419
          %s3421 = sand.u32 %s233, 1
          %s3422 = smul.addr %s3421, 8
          %s3423 = scalar_lea.vmem [#allocation3], %s3422
          %3424 = dma.done %s3420, 128
        $region68: #{tpu_custom_call.1} parent=63 // pred_fallthru
          _
      $region64: #{tpu_custom_call.1} parent=5 // pred_fallthru
        _
    $region6: #{tpu_custom_call.1} parent=1 // loop_footer
      %s24 = sadd.s32 1, %s20
    $region7: #{tpu_custom_call.1} parent=1 // loop_footer_branch
      %19 = sbr.rel target = $region3
    $region8: #{tpu_custom_call.1} parent=1 // loop_exit
      _
    %3425 = vsyncpa [#allocation4], 1
    %s3426 = scalar_lea.sflag [#allocation4], 1
    %3427 = vsyncpa %s3426, 1

</llo_original>
